<compile_context>
chip_gen: v5e
topology: v5e:2x2
jax: 0.10.0
libtpu: 0.0.40
codegen_flags: <defaults>
</compile_context>

<pallas_src>
import functools

import jax
import jax.numpy as jnp
from jax.experimental import pallas as pl
from jax.experimental.pallas import tpu as pltpu

EPS = 1e-5  # PyTorch nn.LayerNorm default eps


# ----------------------------- shared math helpers -----------------------------

def _layernorm(v, g, b):
    # g, b broadcast over the leading dims; biased variance, like torch.
    mu = jnp.mean(v, axis=-1, keepdims=True)
    var = jnp.mean(jnp.square(v - mu), axis=-1, keepdims=True)
    return (v - mu) * jax.lax.rsqrt(var + EPS) * g + b


def _erf_approx(x, *, approx_recip=False):
    # Abramowitz & Stegun 7.1.26, |err| < 1.5e-7; avoids relying on erf lowering in Mosaic.
    a1, a2, a3, a4, a5 = 0.254829592, -0.284496736, 1.421413741, -1.453152027, 1.061405429
    p = 0.3275911
    s = jnp.where(x >= 0.0, 1.0, -1.0)
    ax = jnp.abs(x)
    den = 1.0 + p * ax
    t = pl.reciprocal(den, approx=True) if approx_recip else 1.0 / den
    poly = ((((a5 * t + a4) * t + a3) * t + a2) * t + a1) * t
    return s * (1.0 - poly * jnp.exp(-ax * ax))


def _gelu_erf(x, *, approx_recip=False):
    # PyTorch nn.GELU() default (erf form).
    return 0.5 * x * (1.0 + _erf_approx(x * 0.7071067811865476, approx_recip=approx_recip))


# ----------------------------- the fused Pallas kernel -----------------------------

def _resampler_kernel(x_ref, pos_ref, lat0_ref,
                      nm_g_ref, nm_b_ref, nl_g_ref, nl_b_ref,
                      wq_ref, wkv_ref, wo_ref,
                      ff_g_ref, ff_b_ref, w1_ref, w2_ref,
                      fin_g_ref, fin_b_ref,
                      out_ref, acc_ref, xp_ref, oheads_ref,
                      *, heads, dim_head, approx_math):
    """Grid = (bm_tiles, depth).  acc_ref holds the latents resident across depth."""
    layer = pl.program_id(1)
    n_layers = pl.num_programs(1)
    tb, n, d = x_ref.shape
    nl = lat0_ref.shape[0]
    dh = dim_head
    inner = heads * dh
    cd = wq_ref.dtype  # MXU compute dtype (bf16 default, f32 debug); accumulation is f32

    # First layer of each (b,m)-tile: init resident latents and the x + time_pos_emb sum
    # (reused unchanged across all depth steps of this tile).
    @pl.when(layer == 0)
    def _():
        lat0 = lat0_ref[...]                                         # (nl, d)
        acc_ref[...] = jnp.broadcast_to(lat0[None], (tb, nl, d)).reshape(tb * nl, d)
        xp_ref[...] = (x_ref[...] + pos_ref[...]).reshape(tb * n, d)

    lat = acc_ref[...]                                               # (tb*nl, d) f32
    x2 = xp_ref[...]                                                 # (tb*n, d)  f32

    # ---------------- PerceiverAttention ----------------
    xn = _layernorm(x2, nm_g_ref[0], nm_b_ref[0])
    latn = _layernorm(lat, nl_g_ref[0], nl_b_ref[0])

    wq, wkv, wo = wq_ref[0], wkv_ref[0], wo_ref[0]
    # dim_head**-0.5 is folded into wq in the wrapper.
    q = jnp.dot(latn.astype(cd), wq, preferred_element_type=jnp.float32)       # (tb*nl, inner)
    # kv of media and latents computed separately: no (n+nl) row-concat copy per step,
    # softmax is joined analytically below (identical to softmax over the concatenation).
    kv_x = jnp.dot(xn.astype(cd), wkv, preferred_element_type=jnp.float32)     # (tb*n, 2*inner)
    kv_l = jnp.dot(latn.astype(cd), wkv, preferred_element_type=jnp.float32)   # (tb*nl, 2*inner)

    q3 = q.reshape(tb, nl, inner)
    kvx3 = kv_x.reshape(tb, n, 2 * inner)
    kvl3 = kv_l.reshape(tb, nl, 2 * inner)

    # Per-head attention, TB-batched 3-D einsums (single leading batch dim — the
    # known-good Mosaic dot_general form).  Each head's output is staged into the
    # (tb*nl, inner) VMEM scratch so to_out is a single full-K matmul afterwards.
    for h in range(heads):
        ks = slice(h * dh, (h + 1) * dh)
        vs = slice(inner + h * dh, inner + (h + 1) * dh)
        qh = q3[:, :, ks]                                            # (tb, nl, dh)
        kxh, vxh = kvx3[:, :, ks], kvx3[:, :, vs]                    # (tb, n, dh)
        klh, vlh = kvl3[:, :, ks], kvl3[:, :, vs]                    # (tb, nl, dh)

        sim_x = jnp.einsum("bid,bjd->bij", qh.astype(cd), kxh.astype(cd),
                           preferred_element_type=jnp.float32)       # (tb, nl, n)
        sim_l = jnp.einsum("bid,bjd->bij", qh.astype(cd), klh.astype(cd),
                           preferred_element_type=jnp.float32)       # (tb, nl, nl)

        m_h = jnp.maximum(jnp.max(sim_x, axis=-1, keepdims=True),
                          jnp.max(sim_l, axis=-1, keepdims=True))
        p_x = jnp.exp(sim_x - m_h)
        p_l = jnp.exp(sim_l - m_h)
        den = (jnp.sum(p_x, axis=-1, keepdims=True) +
               jnp.sum(p_l, axis=-1, keepdims=True))
        inv_den = pl.reciprocal(den, approx=True) if approx_math else 1.0 / den

        o_h = (jnp.einsum("bij,bjd->bid", p_x.astype(cd), vxh.astype(cd),
                          preferred_element_type=jnp.float32) +
               jnp.einsum("bij,bjd->bid", p_l.astype(cd), vlh.astype(cd),
                          preferred_element_type=jnp.float32)) * inv_den   # (tb, nl, dh)

        oheads_ref[:, h * dh:(h + 1) * dh] = o_h.reshape(tb * nl, dh)

    # Single to_out matmul with full K=inner contraction depth (one accumulator write).
    attn_out = jnp.dot(oheads_ref[...].astype(cd), wo,
                       preferred_element_type=jnp.float32)           # (tb*nl, d)

    lat1 = attn_out + lat                                            # residual (f32)

    # ---------------- FeedForward ----------------
    hh = _layernorm(lat1, ff_g_ref[0], ff_b_ref[0])
    hh = jnp.dot(hh.astype(cd), w1_ref[0], preferred_element_type=jnp.float32)
    hh = _gelu_erf(hh, approx_recip=approx_math)
    hh = jnp.dot(hh.astype(cd), w2_ref[0], preferred_element_type=jnp.float32)
    lat_new = hh + lat1                                              # residual (f32)

    acc_ref[...] = lat_new

    # Only the last layer writes HBM, already final-LayerNorm'ed.  (Relies on the output
    # block staying resident across the depth axis — keep depth as the innermost axis.)
    @pl.when(layer == n_layers - 1)
    def _():
        out_ref[...] = _layernorm(lat_new, fin_g_ref[...], fin_b_ref[...]).reshape(tb, nl, d)


# ----------------------------- chip-aware sizing -----------------------------

@functools.lru_cache(maxsize=1)
def _chip_vmem_budget_bytes():
    """~80% of the per-core VMEM capacity, clamped to a sane range."""
    try:
        cap = int(pltpu.get_tpu_info().vmem_capacity_bytes)
    except Exception:
        cap = 64 * 1024 * 1024  # conservative fallback
    return int(min(112 * 1024 * 1024, max(48 * 1024 * 1024, 0.8 * cap)))


@functools.lru_cache(maxsize=1)
def _num_tensorcores():
    try:
        info = pltpu.get_tpu_info()
        for name in ("num_cores", "core_count", "num_tensorcores"):
            v = getattr(info, name, None)
            if v:
                return int(v)
    except Exception:
        pass
    return 1


def _estimate_vmem_bytes(tb, *, n, d, nl, inner, ff_inner, wbytes):
    f4 = 4
    layer_w = (d * inner + d * 2 * inner + inner * d
               + d * ff_inner + ff_inner * d) * wbytes
    layer_ln = 6 * d * f4
    blocks = (tb * n * d * f4 + tb * d * f4 + tb * nl * d * f4 + layer_w + layer_ln)
    consts = (nl * d + 2 * d) * f4
    scratch = (tb * nl * d + tb * n * d + tb * nl * inner) * f4
    # rough allowance for live activations (q, kv, softmax probs, ffn hidden)
    acts = (tb * n * 2 * inner + tb * nl * (4 * inner + ff_inner)
            + tb * nl * (n + nl)) * f4
    return 2 * blocks + consts + scratch + acts + (2 << 20)


def _pick_block_bm(bm, *, n, d, nl, inner, ff_inner, wbytes, budget, min_tiles):
    """Largest (b*m)-tile dividing bm that fits the VMEM budget; keep >= min_tiles grid
    tiles so the 'parallel' axis can shard across TensorCores on 2-TC parts."""
    min_tiles = max(1, min(min_tiles, bm))
    best = 1
    for tb in range(1, bm + 1):
        if bm % tb or bm // tb < min_tiles:
            continue
        if _estimate_vmem_bytes(tb, n=n, d=d, nl=nl, inner=inner,
                                ff_inner=ff_inner, wbytes=wbytes) <= budget:
            best = tb
    return best


# ----------------------------- wrapper -----------------------------

@functools.partial(jax.jit, static_argnames=("heads", "dim_head", "compute_dtype",
                                             "block_bm", "approx_math"))
def perceiver_resampler(x, params, *, heads, dim_head,
                        compute_dtype=jnp.bfloat16, block_bm=None, approx_math=True):
    if x.ndim == 3:
        x = x[:, None]                                    # 'b n d -> b 1 n d'
    b, m, n, d = x.shape
    nl = params["latents"].shape[0]
    depth = params["wq"].shape[0]
    inner = heads * dim_head
    ff_inner = params["w1"].shape[-1]
    bm = b * m

    f32 = jnp.float32
    cd = jnp.dtype(compute_dtype)
    scale = dim_head ** (-0.5)

    budget = _chip_vmem_budget_bytes()
    min_tiles = 2 if _num_tensorcores() >= 2 else 1
    if block_bm is None:
        tb = _pick_block_bm(bm, n=n, d=d, nl=nl, inner=inner, ff_inner=ff_inner,
                            wbytes=cd.itemsize, budget=budget, min_tiles=min_tiles)
    else:
        tb = block_bm
    assert bm % tb == 0, (bm, tb)

    # Activations / LayerNorm params stay f32; matmul weights shipped in the MXU dtype.
    xf = x.reshape(bm, n, d).astype(f32)
    pos = jnp.broadcast_to(params["time_pos_emb"][:m][None],
                           (b, m, 1, d)).reshape(bm, 1, d).astype(f32)
    lat0 = params["latents"].astype(f32)
    nm_g, nm_b = params["nm_g"].astype(f32), params["nm_b"].astype(f32)
    nl_g, nl_b = params["nl_g"].astype(f32), params["nl_b"].astype(f32)
    ff_g, ff_b = params["ff_g"].astype(f32), params["ff_b"].astype(f32)
    wq = (params["wq"] * scale).astype(cd)      # fold dim_head**-0.5 into to_q
    wkv, wo = params["wkv"].astype(cd), params["wo"].astype(cd)
    w1, w2 = params["w1"].astype(cd), params["w2"].astype(cd)
    fin_g, fin_b = params["norm_g"].astype(f32), params["norm_b"].astype(f32)

    def bm_spec(shape):            # blocks that follow the (b*m)-tile axis
        return pl.BlockSpec((tb,) + shape, lambda i, l: (i, 0, 0))

    def layer_spec(shape):         # per-layer stacked weights, indexed by the depth axis
        zeros = (0,) * len(shape)
        return pl.BlockSpec((1,) + shape, lambda i, l, _z=zeros: (l,) + _z)

    def const_spec(shape):         # grid-constant parameters
        zeros = (0,) * len(shape)
        return pl.BlockSpec(shape, lambda i, l, _z=zeros: _z)

    in_specs = [
        bm_spec((n, d)),                               # x
        bm_spec((1, d)),                               # time_pos_emb (broadcast over b)
        const_spec((nl, d)),                           # latent parameter
        layer_spec((1, d)), layer_spec((1, d)),        # norm_media g, b
        layer_spec((1, d)), layer_spec((1, d)),        # norm_latents g, b
        layer_spec((d, inner)),                        # to_q (scale folded in)
        layer_spec((d, 2 * inner)),                    # to_kv
        layer_spec((inner, d)),                        # to_out
        layer_spec((1, d)), layer_spec((1, d)),        # ff LayerNorm g, b
        layer_spec((d, ff_inner)),                     # ff w1
        layer_spec((ff_inner, d)),                     # ff w2
        const_spec((1, d)), const_spec((1, d)),        # final LayerNorm g, b
    ]
    out_spec = pl.BlockSpec((tb, nl, d), lambda i, l: (i, 0, 0))

    kernel = functools.partial(_resampler_kernel, heads=heads, dim_head=dim_head,
                               approx_math=approx_math)
    out = pl.pallas_call(
        kernel,
        out_shape=jax.ShapeDtypeStruct((bm, nl, d), f32),
        grid=(bm // tb, depth),
        in_specs=in_specs,
        out_specs=out_spec,
        scratch_shapes=[pltpu.VMEM((tb * nl, d), jnp.float32),       # resident latents
                        pltpu.VMEM((tb * n, d), jnp.float32),        # x + time_pos_emb
                        pltpu.VMEM((tb * nl, inner), jnp.float32)],  # per-head attn outputs
        compiler_params=pltpu.CompilerParams(
            dimension_semantics=("parallel", "arbitrary"),
            vmem_limit_bytes=budget),
    )(xf, pos, lat0, nm_g, nm_b, nl_g, nl_b, wq, wkv, wo, ff_g, ff_b, w1, w2, fin_g, fin_b)

    return out.reshape(b, m, nl, d)


# ----------------------------- pure-JAX reference -----------------------------

def perceiver_resampler_ref(x, params, *, heads, dim_head):
    if x.ndim == 3:
        x = x[:, None]
    b, m, n, d = x.shape
    x = x + params["time_pos_emb"][:m][None]
    nl = params["latents"].shape[0]
    lat = jnp.broadcast_to(params["latents"][None, None], (b, m, nl, d))
    inner = heads * dim_head
    scale = dim_head ** (-0.5)
    depth = params["wq"].shape[0]

    for li in range(depth):
        xn = _layernorm(x, params["nm_g"][li], params["nm_b"][li])
        latn = _layernorm(lat, params["nl_g"][li], params["nl_b"][li])
        q = (latn @ params["wq"][li]) * scale
        kv_in = jnp.concatenate([xn, latn], axis=2)
        kv = kv_in @ params["wkv"][li]
        k, v = kv[..., :inner], kv[..., inner:]
        qh = q.reshape(b, m, nl, heads, dim_head)
        kh = k.reshape(b, m, n + nl, heads, dim_head)
        vh = v.reshape(b, m, n + nl, heads, dim_head)
        sim = jnp.einsum("bmihd,bmjhd->bmhij", qh, kh)
        sim = sim - sim.max(axis=-1, keepdims=True)
        attn = jax.nn.softmax(sim, axis=-1)
        o = jnp.einsum("bmhij,bmjhd->bmihd", attn, vh).reshape(b, m, nl, inner)
        lat = o @ params["wo"][li] + lat
        hh = _layernorm(lat, params["ff_g"][li], params["ff_b"][li]) @ params["w1"][li]
        hh = _gelu_erf(hh)
        lat = hh @ params["w2"][li] + lat
    return _layernorm(lat, params["norm_g"], params["norm_b"])


# ----------------------------- parameter init -----------------------------

def init_params(key, *, dim, depth, dim_head, heads, num_latents, num_aug_sources, ff_mult):
    inner = dim_head * heads
    ff_inner = int(dim * ff_mult)
    ks = jax.random.split(key, 15)

    def nrm(k, shape, scale=0.05):
        return (scale * jax.random.normal(k, shape)).astype(jnp.float32)

    return {
        "latents": jax.random.normal(ks[0], (num_latents, dim), jnp.float32),
        "time_pos_emb": jax.random.normal(ks[1], (num_aug_sources, 1, dim), jnp.float32),
        "norm_g": 1.0 + nrm(ks[2], (1, dim), 0.1), "norm_b": nrm(ks[3], (1, dim), 0.1),
        # per-layer params stacked along a leading depth axis
        "nm_g": 1.0 + nrm(ks[4], (depth, 1, dim), 0.1), "nm_b": nrm(ks[5], (depth, 1, dim), 0.1),
        "nl_g": 1.0 + nrm(ks[6], (depth, 1, dim), 0.1), "nl_b": nrm(ks[7], (depth, 1, dim), 0.1),
        "ff_g": 1.0 + nrm(ks[8], (depth, 1, dim), 0.1), "ff_b": nrm(ks[9], (depth, 1, dim), 0.1),
        "wq": nrm(ks[10], (depth, dim, inner)),            # nn.Linear(dim, inner, bias=False).weight.T
        "wkv": nrm(ks[11], (depth, dim, 2 * inner)),
        "wo": nrm(ks[12], (depth, inner, dim)),
        "w1": nrm(ks[13], (depth, dim, ff_inner)),
        "w2": nrm(ks[14], (depth, ff_inner, dim)),
    }


# ----------------------------- main -----------------------------

if __name__ == "__main__":
    dim, depth, dim_head, heads = 32, 2, 8, 4
    num_latents, num_aug_sources, ff_mult = 8, 4, 4
    batch, times, seq = 2, 2, 8

    key = jax.random.PRNGKey(0)
    pkey, xkey = jax.random.split(key)
    params = init_params(pkey, dim=dim, depth=depth, dim_head=dim_head, heads=heads,
                         num_latents=num_latents, num_aug_sources=num_aug_sources,
                         ff_mult=ff_mult)
    x = jax.random.normal(xkey, (batch, times, seq, dim), jnp.float32)

    ref = jax.block_until_ready(perceiver_resampler_ref(x, params, heads=heads, dim_head=dim_head))

    # f32 MXU + exact divides: bit-tight check of the kernel math against the reference.
    out_f32 = jax.block_until_ready(
        perceiver_resampler(x, params, heads=heads, dim_head=dim_head,
                            compute_dtype=jnp.float32, approx_math=False))
    assert out_f32.shape == (batch, times, num_latents, dim), out_f32.shape
    err = float(jnp.max(jnp.abs(out_f32 - ref)))
    assert err < 1e-4, f"f32 max abs err {err}"

    # Default fast path: bf16 MXU weights + approx EUP reciprocals, f32 accumulation /
    # LayerNorm / softmax / GELU.  Loose tolerance.
    # TODO(synk): re-validate this bound at production dims (d>=1024, ff_mult=4).
    out_fast = jax.block_until_ready(
        perceiver_resampler(x, params, heads=heads, dim_head=dim_head))
    assert out_fast.shape == (batch, times, num_latents, dim), out_fast.shape
    err_fast = float(jnp.max(jnp.abs(out_fast - ref)))
    assert err_fast < 1.5e-1, f"bf16 max abs err {err_fast}"

    print("KERNEL_OK")
</pallas_src>

<mosaic_0001>
module attributes {stable_mosaic.version = 11 : i64} {
  func.func @_resampler_kernel(%arg0: i32, %arg1: i32, %arg2: memref<4x8x32xf32, #tpu.memory_space<vmem>>, %arg3: memref<4x1x32xf32, #tpu.memory_space<vmem>>, %arg4: memref<8x32xf32, #tpu.memory_space<vmem>>, %arg5: memref<1x1x32xf32, #tpu.memory_space<vmem>>, %arg6: memref<1x1x32xf32, #tpu.memory_space<vmem>>, %arg7: memref<1x1x32xf32, #tpu.memory_space<vmem>>, %arg8: memref<1x1x32xf32, #tpu.memory_space<vmem>>, %arg9: memref<1x32x32xf32, #tpu.memory_space<vmem>>, %arg10: memref<1x32x64xf32, #tpu.memory_space<vmem>>, %arg11: memref<1x32x32xf32, #tpu.memory_space<vmem>>, %arg12: memref<1x1x32xf32, #tpu.memory_space<vmem>>, %arg13: memref<1x1x32xf32, #tpu.memory_space<vmem>>, %arg14: memref<1x32x128xf32, #tpu.memory_space<vmem>>, %arg15: memref<1x128x32xf32, #tpu.memory_space<vmem>>, %arg16: memref<1x32xf32, #tpu.memory_space<vmem>>, %arg17: memref<1x32xf32, #tpu.memory_space<vmem>>, %arg18: memref<4x8x32xf32, #tpu.memory_space<vmem>>, %arg19: memref<32x32xf32, #tpu.memory_space<vmem>>, %arg20: memref<32x32xf32, #tpu.memory_space<vmem>>, %arg21: memref<32x32xf32, #tpu.memory_space<vmem>>) attributes {dimension_semantics = [#tpu.dimension_semantics<parallel>, #tpu.dimension_semantics<arbitrary>], iteration_bounds = array<i64: 1, 2>, scalar_prefetch = 0 : i64, scratch_operands = 3 : i64, tpu.core_type = #tpu.core_type<tc>, window_params = [{transform_indices = @transform_0, window_bounds = array<i64: 4, 8, 32>}, {transform_indices = @transform_1, window_bounds = array<i64: 4, 1, 32>}, {pipeline_mode = #tpu.pipeline_mode<synchronous>, transform_indices = @transform_2, window_bounds = array<i64: 8, 32>}, {transform_indices = @transform_3, window_bounds = array<i64: 1, 1, 32>}, {transform_indices = @transform_4, window_bounds = array<i64: 1, 1, 32>}, {transform_indices = @transform_5, window_bounds = array<i64: 1, 1, 32>}, {transform_indices = @transform_6, window_bounds = array<i64: 1, 1, 32>}, {transform_indices = @transform_7, window_bounds = array<i64: 1, 32, 32>}, {transform_indices = @transform_8, window_bounds = array<i64: 1, 32, 64>}, {transform_indices = @transform_9, window_bounds = array<i64: 1, 32, 32>}, {transform_indices = @transform_10, window_bounds = array<i64: 1, 1, 32>}, {transform_indices = @transform_11, window_bounds = array<i64: 1, 1, 32>}, {transform_indices = @transform_12, window_bounds = array<i64: 1, 32, 128>}, {transform_indices = @transform_13, window_bounds = array<i64: 1, 128, 32>}, {pipeline_mode = #tpu.pipeline_mode<synchronous>, transform_indices = @transform_14, window_bounds = array<i64: 1, 32>}, {pipeline_mode = #tpu.pipeline_mode<synchronous>, transform_indices = @transform_15, window_bounds = array<i64: 1, 32>}, {transform_indices = @transform_16, window_bounds = array<i64: 4, 8, 32>}]} {
    %c0_i32 = arith.constant 0 : i32
    %0 = arith.cmpi eq, %arg1, %c0_i32 : i32
    %1 = arith.extui %0 : i1 to i32
    %c0_i32_0 = arith.constant 0 : i32
    %2 = arith.cmpi ne, %1, %c0_i32_0 : i32
    scf.if %2 {
      %c0_119 = arith.constant 0 : index
      %c0_120 = arith.constant 0 : index
      %278 = vector.load %arg4[%c0_119, %c0_120] : memref<8x32xf32, #tpu.memory_space<vmem>>, vector<8x32xf32>
      %279 = vector.shape_cast %278 : vector<8x32xf32> to vector<1x8x32xf32>
      %280 = vector.shape_cast %279 : vector<1x8x32xf32> to vector<1x8x32xf32>
      %281 = vector.broadcast %280 : vector<1x8x32xf32> to vector<4x8x32xf32>
      %282 = vector.shape_cast %281 : vector<4x8x32xf32> to vector<32x32xf32>
      %c0_121 = arith.constant 0 : index
      %c0_122 = arith.constant 0 : index
      %283 = vector.load %arg19[%c0_121, %c0_122] : memref<32x32xf32, #tpu.memory_space<vmem>>, vector<32x32xf32>
      tpu.vector_store %arg19[%c0_121, %c0_122], %282 {strides = array<i32>} : memref<32x32xf32, #tpu.memory_space<vmem>>, vector<32x32xf32>,
      %c0_123 = arith.constant 0 : index
      %c0_124 = arith.constant 0 : index
      %c0_125 = arith.constant 0 : index
      %284 = vector.load %arg2[%c0_123, %c0_124, %c0_125] : memref<4x8x32xf32, #tpu.memory_space<vmem>>, vector<4x8x32xf32>
      %c0_126 = arith.constant 0 : index
      %c0_127 = arith.constant 0 : index
      %c0_128 = arith.constant 0 : index
      %285 = vector.load %arg3[%c0_126, %c0_127, %c0_128] : memref<4x1x32xf32, #tpu.memory_space<vmem>>, vector<4x1x32xf32>
      %286 = vector.broadcast %285 : vector<4x1x32xf32> to vector<4x8x32xf32>
      %287 = arith.addf %284, %286 : vector<4x8x32xf32>
      %288 = vector.shape_cast %287 : vector<4x8x32xf32> to vector<32x32xf32>
      %c0_129 = arith.constant 0 : index
      %c0_130 = arith.constant 0 : index
      %289 = vector.load %arg20[%c0_129, %c0_130] : memref<32x32xf32, #tpu.memory_space<vmem>>, vector<32x32xf32>
      tpu.vector_store %arg20[%c0_129, %c0_130], %288 {strides = array<i32>} : memref<32x32xf32, #tpu.memory_space<vmem>>, vector<32x32xf32>,
    } else {
    }
    %c0 = arith.constant 0 : index
    %c0_1 = arith.constant 0 : index
    %3 = vector.load %arg19[%c0, %c0_1] : memref<32x32xf32, #tpu.memory_space<vmem>>, vector<32x32xf32>
    %c0_2 = arith.constant 0 : index
    %c0_3 = arith.constant 0 : index
    %4 = vector.load %arg20[%c0_2, %c0_3] : memref<32x32xf32, #tpu.memory_space<vmem>>, vector<32x32xf32>
    %c0_4 = arith.constant 0 : index
    %c0_5 = arith.constant 0 : index
    %c0_6 = arith.constant 0 : index
    %5 = vector.load %arg5[%c0_4, %c0_5, %c0_6] : memref<1x1x32xf32, #tpu.memory_space<vmem>>, vector<1x1x32xf32>
    %6 = vector.shape_cast %5 : vector<1x1x32xf32> to vector<1x32xf32>
    %c0_7 = arith.constant 0 : index
    %c0_8 = arith.constant 0 : index
    %c0_9 = arith.constant 0 : index
    %7 = vector.load %arg6[%c0_7, %c0_8, %c0_9] : memref<1x1x32xf32, #tpu.memory_space<vmem>>, vector<1x1x32xf32>
    %8 = vector.shape_cast %7 : vector<1x1x32xf32> to vector<1x32xf32>
    %cst = arith.constant dense<0.000000e+00> : vector<32xf32>
    %9 = vector.multi_reduction <add>, %4, %cst [1] : vector<32x32xf32> to vector<32xf32>
    %10 = vector.shape_cast %9 : vector<32xf32> to vector<32x1xf32>
    %cst_10 = arith.constant 3.200000e+01 : f32
    %11 = vector.broadcast %cst_10 : f32 to vector<32x1xf32>
    %12 = arith.divf %10, %11 : vector<32x1xf32>
    %13 = vector.broadcast %12 : vector<32x1xf32> to vector<32x32xf32>
    %14 = arith.subf %4, %13 : vector<32x32xf32>
    %15 = arith.mulf %14, %14 : vector<32x32xf32>
    %cst_11 = arith.constant dense<0.000000e+00> : vector<32xf32>
    %16 = vector.multi_reduction <add>, %15, %cst_11 [1] : vector<32x32xf32> to vector<32xf32>
    %17 = vector.shape_cast %16 : vector<32xf32> to vector<32x1xf32>
    %cst_12 = arith.constant 3.200000e+01 : f32
    %18 = vector.broadcast %cst_12 : f32 to vector<32x1xf32>
    %19 = arith.divf %17, %18 : vector<32x1xf32>
    %20 = vector.broadcast %12 : vector<32x1xf32> to vector<32x32xf32>
    %21 = arith.subf %4, %20 : vector<32x32xf32>
    %cst_13 = arith.constant 9.99999974E-6 : f32
    %22 = vector.broadcast %cst_13 : f32 to vector<32x1xf32>
    %23 = arith.addf %19, %22 : vector<32x1xf32>
    %24 = math.rsqrt %23 : vector<32x1xf32>
    %25 = vector.broadcast %24 : vector<32x1xf32> to vector<32x32xf32>
    %26 = arith.mulf %21, %25 : vector<32x32xf32>
    %27 = vector.broadcast %6 : vector<1x32xf32> to vector<32x32xf32>
    %28 = arith.mulf %26, %27 : vector<32x32xf32>
    %29 = vector.broadcast %8 : vector<1x32xf32> to vector<32x32xf32>
    %30 = arith.addf %28, %29 : vector<32x32xf32>
    %c0_14 = arith.constant 0 : index
    %c0_15 = arith.constant 0 : index
    %c0_16 = arith.constant 0 : index
    %31 = vector.load %arg7[%c0_14, %c0_15, %c0_16] : memref<1x1x32xf32, #tpu.memory_space<vmem>>, vector<1x1x32xf32>
    %32 = vector.shape_cast %31 : vector<1x1x32xf32> to vector<1x32xf32>
    %c0_17 = arith.constant 0 : index
    %c0_18 = arith.constant 0 : index
    %c0_19 = arith.constant 0 : index
    %33 = vector.load %arg8[%c0_17, %c0_18, %c0_19] : memref<1x1x32xf32, #tpu.memory_space<vmem>>, vector<1x1x32xf32>
    %34 = vector.shape_cast %33 : vector<1x1x32xf32> to vector<1x32xf32>
    %cst_20 = arith.constant dense<0.000000e+00> : vector<32xf32>
    %35 = vector.multi_reduction <add>, %3, %cst_20 [1] : vector<32x32xf32> to vector<32xf32>
    %36 = vector.shape_cast %35 : vector<32xf32> to vector<32x1xf32>
    %cst_21 = arith.constant 3.200000e+01 : f32
    %37 = vector.broadcast %cst_21 : f32 to vector<32x1xf32>
    %38 = arith.divf %36, %37 : vector<32x1xf32>
    %39 = vector.broadcast %38 : vector<32x1xf32> to vector<32x32xf32>
    %40 = arith.subf %3, %39 : vector<32x32xf32>
    %41 = arith.mulf %40, %40 : vector<32x32xf32>
    %cst_22 = arith.constant dense<0.000000e+00> : vector<32xf32>
    %42 = vector.multi_reduction <add>, %41, %cst_22 [1] : vector<32x32xf32> to vector<32xf32>
    %43 = vector.shape_cast %42 : vector<32xf32> to vector<32x1xf32>
    %cst_23 = arith.constant 3.200000e+01 : f32
    %44 = vector.broadcast %cst_23 : f32 to vector<32x1xf32>
    %45 = arith.divf %43, %44 : vector<32x1xf32>
    %46 = vector.broadcast %38 : vector<32x1xf32> to vector<32x32xf32>
    %47 = arith.subf %3, %46 : vector<32x32xf32>
    %cst_24 = arith.constant 9.99999974E-6 : f32
    %48 = vector.broadcast %cst_24 : f32 to vector<32x1xf32>
    %49 = arith.addf %45, %48 : vector<32x1xf32>
    %50 = math.rsqrt %49 : vector<32x1xf32>
    %51 = vector.broadcast %50 : vector<32x1xf32> to vector<32x32xf32>
    %52 = arith.mulf %47, %51 : vector<32x32xf32>
    %53 = vector.broadcast %32 : vector<1x32xf32> to vector<32x32xf32>
    %54 = arith.mulf %52, %53 : vector<32x32xf32>
    %55 = vector.broadcast %34 : vector<1x32xf32> to vector<32x32xf32>
    %56 = arith.addf %54, %55 : vector<32x32xf32>
    %c0_25 = arith.constant 0 : index
    %c0_26 = arith.constant 0 : index
    %c0_27 = arith.constant 0 : index
    %57 = vector.load %arg9[%c0_25, %c0_26, %c0_27] : memref<1x32x32xf32, #tpu.memory_space<vmem>>, vector<1x32x32xf32>
    %58 = vector.shape_cast %57 : vector<1x32x32xf32> to vector<32x32xf32>
    %c0_28 = arith.constant 0 : index
    %c0_29 = arith.constant 0 : index
    %c0_30 = arith.constant 0 : index
    %59 = vector.load %arg10[%c0_28, %c0_29, %c0_30] : memref<1x32x64xf32, #tpu.memory_space<vmem>>, vector<1x32x64xf32>
    %60 = vector.shape_cast %59 : vector<1x32x64xf32> to vector<32x64xf32>
    %c0_31 = arith.constant 0 : index
    %c0_32 = arith.constant 0 : index
    %c0_33 = arith.constant 0 : index
    %61 = vector.load %arg11[%c0_31, %c0_32, %c0_33] : memref<1x32x32xf32, #tpu.memory_space<vmem>>, vector<1x32x32xf32>
    %62 = vector.shape_cast %61 : vector<1x32x32xf32> to vector<32x32xf32>
    %cst_34 = arith.constant dense<0.000000e+00> : vector<32x32xf32>
    %63 = tpu.matmul %56, %58, %cst_34 {dimension_numbers = #tpu.dot_dimension_numbers<[1], [0], [0], [1], [0, 0, 1, 1], [], []>} : vector<32x32xf32>, vector<32x32xf32>, vector<32x32xf32> -> vector<32x32xf32>
    %cst_35 = arith.constant dense<0.000000e+00> : vector<32x64xf32>
    %64 = tpu.matmul %30, %60, %cst_35 {dimension_numbers = #tpu.dot_dimension_numbers<[1], [0], [0], [1], [0, 0, 1, 1], [], []>} : vector<32x32xf32>, vector<32x64xf32>, vector<32x64xf32> -> vector<32x64xf32>
    %cst_36 = arith.constant dense<0.000000e+00> : vector<32x64xf32>
    %65 = tpu.matmul %56, %60, %cst_36 {dimension_numbers = #tpu.dot_dimension_numbers<[1], [0], [0], [1], [0, 0, 1, 1], [], []>} : vector<32x32xf32>, vector<32x64xf32>, vector<32x64xf32> -> vector<32x64xf32>
    %66 = vector.shape_cast %63 : vector<32x32xf32> to vector<4x8x32xf32>
    %67 = vector.shape_cast %64 : vector<32x64xf32> to vector<4x8x64xf32>
    %68 = vector.shape_cast %65 : vector<32x64xf32> to vector<4x8x64xf32>
    %69 = vector.extract_strided_slice %66 {offsets = [0, 0, 0], sizes = [4, 8, 8], strides = [1, 1, 1]} : vector<4x8x32xf32> to vector<4x8x8xf32>
    %70 = vector.extract_strided_slice %67 {offsets = [0, 0, 0], sizes = [4, 8, 8], strides = [1, 1, 1]} : vector<4x8x64xf32> to vector<4x8x8xf32>
    %71 = vector.extract_strided_slice %67 {offsets = [0, 0, 32], sizes = [4, 8, 8], strides = [1, 1, 1]} : vector<4x8x64xf32> to vector<4x8x8xf32>
    %72 = vector.extract_strided_slice %68 {offsets = [0, 0, 0], sizes = [4, 8, 8], strides = [1, 1, 1]} : vector<4x8x64xf32> to vector<4x8x8xf32>
    %73 = vector.extract_strided_slice %68 {offsets = [0, 0, 32], sizes = [4, 8, 8], strides = [1, 1, 1]} : vector<4x8x64xf32> to vector<4x8x8xf32>
    "tpu.trace_start"() <{level = 10 : i32, message = "bid,bjd->bij"}> : () -> ()
    %cst_37 = arith.constant dense<0.000000e+00> : vector<4x8x8xf32>
    %74 = tpu.matmul %69, %70, %cst_37 {dimension_numbers = #tpu.dot_dimension_numbers<[2], [2], [1], [1], [0, 0, 0, 1, 1, 1], [0], [0]>} : vector<4x8x8xf32>, vector<4x8x8xf32>, vector<4x8x8xf32> -> vector<4x8x8xf32>
    %cst_38 = arith.constant dense<0.000000e+00> : vector<4x8x8xf32>
    %75 = tpu.matmul %69, %72, %cst_38 {dimension_numbers = #tpu.dot_dimension_numbers<[2], [2], [1], [1], [0, 0, 0, 1, 1, 1], [0], [0]>} : vector<4x8x8xf32>, vector<4x8x8xf32>, vector<4x8x8xf32> -> vector<4x8x8xf32>
    "tpu.trace_stop"() : () -> ()
    %cst_39 = arith.constant dense<0xFF800000> : vector<4x8xf32>
    %76 = vector.multi_reduction <maximumf>, %74, %cst_39 [2] : vector<4x8x8xf32> to vector<4x8xf32>
    %77 = vector.shape_cast %76 : vector<4x8xf32> to vector<4x8x1xf32>
    %cst_40 = arith.constant dense<0xFF800000> : vector<4x8xf32>
    %78 = vector.multi_reduction <maximumf>, %75, %cst_40 [2] : vector<4x8x8xf32> to vector<4x8xf32>
    %79 = vector.shape_cast %78 : vector<4x8xf32> to vector<4x8x1xf32>
    %80 = arith.maximumf %77, %79 : vector<4x8x1xf32>
    %81 = vector.broadcast %80 : vector<4x8x1xf32> to vector<4x8x8xf32>
    %82 = arith.subf %74, %81 : vector<4x8x8xf32>
    %83 = math.exp %82 : vector<4x8x8xf32>
    %84 = vector.broadcast %80 : vector<4x8x1xf32> to vector<4x8x8xf32>
    %85 = arith.subf %75, %84 : vector<4x8x8xf32>
    %86 = math.exp %85 : vector<4x8x8xf32>
    %cst_41 = arith.constant dense<0.000000e+00> : vector<4x8xf32>
    %87 = vector.multi_reduction <add>, %83, %cst_41 [2] : vector<4x8x8xf32> to vector<4x8xf32>
    %88 = vector.shape_cast %87 : vector<4x8xf32> to vector<4x8x1xf32>
    %cst_42 = arith.constant dense<0.000000e+00> : vector<4x8xf32>
    %89 = vector.multi_reduction <add>, %86, %cst_42 [2] : vector<4x8x8xf32> to vector<4x8xf32>
    %90 = vector.shape_cast %89 : vector<4x8xf32> to vector<4x8x1xf32>
    %91 = arith.addf %88, %90 : vector<4x8x1xf32>
    %cst_43 = arith.constant 1.000000e+00 : f32
    %92 = vector.broadcast %cst_43 : f32 to vector<4x8x1xf32>
    %93 = arith.divf %92, %91 : vector<4x8x1xf32>
    "tpu.trace_start"() <{level = 10 : i32, message = "bij,bjd->bid"}> : () -> ()
    %cst_44 = arith.constant dense<0.000000e+00> : vector<4x8x8xf32>
    %94 = tpu.matmul %83, %71, %cst_44 {dimension_numbers = #tpu.dot_dimension_numbers<[2], [1], [1], [2], [0, 0, 0, 1, 1, 2], [0], [0]>} : vector<4x8x8xf32>, vector<4x8x8xf32>, vector<4x8x8xf32> -> vector<4x8x8xf32>
    %cst_45 = arith.constant dense<0.000000e+00> : vector<4x8x8xf32>
    %95 = tpu.matmul %86, %73, %cst_45 {dimension_numbers = #tpu.dot_dimension_numbers<[2], [1], [1], [2], [0, 0, 0, 1, 1, 2], [0], [0]>} : vector<4x8x8xf32>, vector<4x8x8xf32>, vector<4x8x8xf32> -> vector<4x8x8xf32>
    "tpu.trace_stop"() : () -> ()
    %96 = arith.addf %94, %95 : vector<4x8x8xf32>
    %97 = vector.broadcast %93 : vector<4x8x1xf32> to vector<4x8x8xf32>
    %98 = arith.mulf %96, %97 : vector<4x8x8xf32>
    %99 = vector.shape_cast %98 : vector<4x8x8xf32> to vector<32x8xf32>
    %c0_46 = arith.constant 0 : index
    %c0_47 = arith.constant 0 : index
    %100 = vector.load %arg21[%c0_46, %c0_47] : memref<32x32xf32, #tpu.memory_space<vmem>>, vector<32x8xf32>
    tpu.vector_store %arg21[%c0_46, %c0_47], %99 {strides = array<i32>} : memref<32x32xf32, #tpu.memory_space<vmem>>, vector<32x8xf32>,
    %101 = vector.extract_strided_slice %66 {offsets = [0, 0, 8], sizes = [4, 8, 8], strides = [1, 1, 1]} : vector<4x8x32xf32> to vector<4x8x8xf32>
    %102 = vector.extract_strided_slice %67 {offsets = [0, 0, 8], sizes = [4, 8, 8], strides = [1, 1, 1]} : vector<4x8x64xf32> to vector<4x8x8xf32>
    %103 = vector.extract_strided_slice %67 {offsets = [0, 0, 40], sizes = [4, 8, 8], strides = [1, 1, 1]} : vector<4x8x64xf32> to vector<4x8x8xf32>
    %104 = vector.extract_strided_slice %68 {offsets = [0, 0, 8], sizes = [4, 8, 8], strides = [1, 1, 1]} : vector<4x8x64xf32> to vector<4x8x8xf32>
    %105 = vector.extract_strided_slice %68 {offsets = [0, 0, 40], sizes = [4, 8, 8], strides = [1, 1, 1]} : vector<4x8x64xf32> to vector<4x8x8xf32>
    "tpu.trace_start"() <{level = 10 : i32, message = "bid,bjd->bij"}> : () -> ()
    %cst_48 = arith.constant dense<0.000000e+00> : vector<4x8x8xf32>
    %106 = tpu.matmul %101, %102, %cst_48 {dimension_numbers = #tpu.dot_dimension_numbers<[2], [2], [1], [1], [0, 0, 0, 1, 1, 1], [0], [0]>} : vector<4x8x8xf32>, vector<4x8x8xf32>, vector<4x8x8xf32> -> vector<4x8x8xf32>
    %cst_49 = arith.constant dense<0.000000e+00> : vector<4x8x8xf32>
    %107 = tpu.matmul %101, %104, %cst_49 {dimension_numbers = #tpu.dot_dimension_numbers<[2], [2], [1], [1], [0, 0, 0, 1, 1, 1], [0], [0]>} : vector<4x8x8xf32>, vector<4x8x8xf32>, vector<4x8x8xf32> -> vector<4x8x8xf32>
    "tpu.trace_stop"() : () -> ()
    %cst_50 = arith.constant dense<0xFF800000> : vector<4x8xf32>
    %108 = vector.multi_reduction <maximumf>, %106, %cst_50 [2] : vector<4x8x8xf32> to vector<4x8xf32>
    %109 = vector.shape_cast %108 : vector<4x8xf32> to vector<4x8x1xf32>
    %cst_51 = arith.constant dense<0xFF800000> : vector<4x8xf32>
    %110 = vector.multi_reduction <maximumf>, %107, %cst_51 [2] : vector<4x8x8xf32> to vector<4x8xf32>
    %111 = vector.shape_cast %110 : vector<4x8xf32> to vector<4x8x1xf32>
    %112 = arith.maximumf %109, %111 : vector<4x8x1xf32>
    %113 = vector.broadcast %112 : vector<4x8x1xf32> to vector<4x8x8xf32>
    %114 = arith.subf %106, %113 : vector<4x8x8xf32>
    %115 = math.exp %114 : vector<4x8x8xf32>
    %116 = vector.broadcast %112 : vector<4x8x1xf32> to vector<4x8x8xf32>
    %117 = arith.subf %107, %116 : vector<4x8x8xf32>
    %118 = math.exp %117 : vector<4x8x8xf32>
    %cst_52 = arith.constant dense<0.000000e+00> : vector<4x8xf32>
    %119 = vector.multi_reduction <add>, %115, %cst_52 [2] : vector<4x8x8xf32> to vector<4x8xf32>
    %120 = vector.shape_cast %119 : vector<4x8xf32> to vector<4x8x1xf32>
    %cst_53 = arith.constant dense<0.000000e+00> : vector<4x8xf32>
    %121 = vector.multi_reduction <add>, %118, %cst_53 [2] : vector<4x8x8xf32> to vector<4x8xf32>
    %122 = vector.shape_cast %121 : vector<4x8xf32> to vector<4x8x1xf32>
    %123 = arith.addf %120, %122 : vector<4x8x1xf32>
    %cst_54 = arith.constant 1.000000e+00 : f32
    %124 = vector.broadcast %cst_54 : f32 to vector<4x8x1xf32>
    %125 = arith.divf %124, %123 : vector<4x8x1xf32>
    "tpu.trace_start"() <{level = 10 : i32, message = "bij,bjd->bid"}> : () -> ()
    %cst_55 = arith.constant dense<0.000000e+00> : vector<4x8x8xf32>
    %126 = tpu.matmul %115, %103, %cst_55 {dimension_numbers = #tpu.dot_dimension_numbers<[2], [1], [1], [2], [0, 0, 0, 1, 1, 2], [0], [0]>} : vector<4x8x8xf32>, vector<4x8x8xf32>, vector<4x8x8xf32> -> vector<4x8x8xf32>
    %cst_56 = arith.constant dense<0.000000e+00> : vector<4x8x8xf32>
    %127 = tpu.matmul %118, %105, %cst_56 {dimension_numbers = #tpu.dot_dimension_numbers<[2], [1], [1], [2], [0, 0, 0, 1, 1, 2], [0], [0]>} : vector<4x8x8xf32>, vector<4x8x8xf32>, vector<4x8x8xf32> -> vector<4x8x8xf32>
    "tpu.trace_stop"() : () -> ()
    %128 = arith.addf %126, %127 : vector<4x8x8xf32>
    %129 = vector.broadcast %125 : vector<4x8x1xf32> to vector<4x8x8xf32>
    %130 = arith.mulf %128, %129 : vector<4x8x8xf32>
    %131 = vector.shape_cast %130 : vector<4x8x8xf32> to vector<32x8xf32>
    %c0_57 = arith.constant 0 : index
    %c8 = arith.constant 8 : index
    %132 = vector.load %arg21[%c0_57, %c8] : memref<32x32xf32, #tpu.memory_space<vmem>>, vector<32x8xf32>
    tpu.vector_store %arg21[%c0_57, %c8], %131 {strides = array<i32>} : memref<32x32xf32, #tpu.memory_space<vmem>>, vector<32x8xf32>,
    %133 = vector.extract_strided_slice %66 {offsets = [0, 0, 16], sizes = [4, 8, 8], strides = [1, 1, 1]} : vector<4x8x32xf32> to vector<4x8x8xf32>
    %134 = vector.extract_strided_slice %67 {offsets = [0, 0, 16], sizes = [4, 8, 8], strides = [1, 1, 1]} : vector<4x8x64xf32> to vector<4x8x8xf32>
    %135 = vector.extract_strided_slice %67 {offsets = [0, 0, 48], sizes = [4, 8, 8], strides = [1, 1, 1]} : vector<4x8x64xf32> to vector<4x8x8xf32>
    %136 = vector.extract_strided_slice %68 {offsets = [0, 0, 16], sizes = [4, 8, 8], strides = [1, 1, 1]} : vector<4x8x64xf32> to vector<4x8x8xf32>
    %137 = vector.extract_strided_slice %68 {offsets = [0, 0, 48], sizes = [4, 8, 8], strides = [1, 1, 1]} : vector<4x8x64xf32> to vector<4x8x8xf32>
    "tpu.trace_start"() <{level = 10 : i32, message = "bid,bjd->bij"}> : () -> ()
    %cst_58 = arith.constant dense<0.000000e+00> : vector<4x8x8xf32>
    %138 = tpu.matmul %133, %134, %cst_58 {dimension_numbers = #tpu.dot_dimension_numbers<[2], [2], [1], [1], [0, 0, 0, 1, 1, 1], [0], [0]>} : vector<4x8x8xf32>, vector<4x8x8xf32>, vector<4x8x8xf32> -> vector<4x8x8xf32>
    %cst_59 = arith.constant dense<0.000000e+00> : vector<4x8x8xf32>
    %139 = tpu.matmul %133, %136, %cst_59 {dimension_numbers = #tpu.dot_dimension_numbers<[2], [2], [1], [1], [0, 0, 0, 1, 1, 1], [0], [0]>} : vector<4x8x8xf32>, vector<4x8x8xf32>, vector<4x8x8xf32> -> vector<4x8x8xf32>
    "tpu.trace_stop"() : () -> ()
    %cst_60 = arith.constant dense<0xFF800000> : vector<4x8xf32>
    %140 = vector.multi_reduction <maximumf>, %138, %cst_60 [2] : vector<4x8x8xf32> to vector<4x8xf32>
    %141 = vector.shape_cast %140 : vector<4x8xf32> to vector<4x8x1xf32>
    %cst_61 = arith.constant dense<0xFF800000> : vector<4x8xf32>
    %142 = vector.multi_reduction <maximumf>, %139, %cst_61 [2] : vector<4x8x8xf32> to vector<4x8xf32>
    %143 = vector.shape_cast %142 : vector<4x8xf32> to vector<4x8x1xf32>
    %144 = arith.maximumf %141, %143 : vector<4x8x1xf32>
    %145 = vector.broadcast %144 : vector<4x8x1xf32> to vector<4x8x8xf32>
    %146 = arith.subf %138, %145 : vector<4x8x8xf32>
    %147 = math.exp %146 : vector<4x8x8xf32>
    %148 = vector.broadcast %144 : vector<4x8x1xf32> to vector<4x8x8xf32>
    %149 = arith.subf %139, %148 : vector<4x8x8xf32>
    %150 = math.exp %149 : vector<4x8x8xf32>
    %cst_62 = arith.constant dense<0.000000e+00> : vector<4x8xf32>
    %151 = vector.multi_reduction <add>, %147, %cst_62 [2] : vector<4x8x8xf32> to vector<4x8xf32>
    %152 = vector.shape_cast %151 : vector<4x8xf32> to vector<4x8x1xf32>
    %cst_63 = arith.constant dense<0.000000e+00> : vector<4x8xf32>
    %153 = vector.multi_reduction <add>, %150, %cst_63 [2] : vector<4x8x8xf32> to vector<4x8xf32>
    %154 = vector.shape_cast %153 : vector<4x8xf32> to vector<4x8x1xf32>
    %155 = arith.addf %152, %154 : vector<4x8x1xf32>
    %cst_64 = arith.constant 1.000000e+00 : f32
    %156 = vector.broadcast %cst_64 : f32 to vector<4x8x1xf32>
    %157 = arith.divf %156, %155 : vector<4x8x1xf32>
    "tpu.trace_start"() <{level = 10 : i32, message = "bij,bjd->bid"}> : () -> ()
    %cst_65 = arith.constant dense<0.000000e+00> : vector<4x8x8xf32>
    %158 = tpu.matmul %147, %135, %cst_65 {dimension_numbers = #tpu.dot_dimension_numbers<[2], [1], [1], [2], [0, 0, 0, 1, 1, 2], [0], [0]>} : vector<4x8x8xf32>, vector<4x8x8xf32>, vector<4x8x8xf32> -> vector<4x8x8xf32>
    %cst_66 = arith.constant dense<0.000000e+00> : vector<4x8x8xf32>
    %159 = tpu.matmul %150, %137, %cst_66 {dimension_numbers = #tpu.dot_dimension_numbers<[2], [1], [1], [2], [0, 0, 0, 1, 1, 2], [0], [0]>} : vector<4x8x8xf32>, vector<4x8x8xf32>, vector<4x8x8xf32> -> vector<4x8x8xf32>
    "tpu.trace_stop"() : () -> ()
    %160 = arith.addf %158, %159 : vector<4x8x8xf32>
    %161 = vector.broadcast %157 : vector<4x8x1xf32> to vector<4x8x8xf32>
    %162 = arith.mulf %160, %161 : vector<4x8x8xf32>
    %163 = vector.shape_cast %162 : vector<4x8x8xf32> to vector<32x8xf32>
    %c0_67 = arith.constant 0 : index
    %c16 = arith.constant 16 : index
    %164 = vector.load %arg21[%c0_67, %c16] : memref<32x32xf32, #tpu.memory_space<vmem>>, vector<32x8xf32>
    tpu.vector_store %arg21[%c0_67, %c16], %163 {strides = array<i32>} : memref<32x32xf32, #tpu.memory_space<vmem>>, vector<32x8xf32>,
    %165 = vector.extract_strided_slice %66 {offsets = [0, 0, 24], sizes = [4, 8, 8], strides = [1, 1, 1]} : vector<4x8x32xf32> to vector<4x8x8xf32>
    %166 = vector.extract_strided_slice %67 {offsets = [0, 0, 24], sizes = [4, 8, 8], strides = [1, 1, 1]} : vector<4x8x64xf32> to vector<4x8x8xf32>
    %167 = vector.extract_strided_slice %67 {offsets = [0, 0, 56], sizes = [4, 8, 8], strides = [1, 1, 1]} : vector<4x8x64xf32> to vector<4x8x8xf32>
    %168 = vector.extract_strided_slice %68 {offsets = [0, 0, 24], sizes = [4, 8, 8], strides = [1, 1, 1]} : vector<4x8x64xf32> to vector<4x8x8xf32>
    %169 = vector.extract_strided_slice %68 {offsets = [0, 0, 56], sizes = [4, 8, 8], strides = [1, 1, 1]} : vector<4x8x64xf32> to vector<4x8x8xf32>
    "tpu.trace_start"() <{level = 10 : i32, message = "bid,bjd->bij"}> : () -> ()
    %cst_68 = arith.constant dense<0.000000e+00> : vector<4x8x8xf32>
    %170 = tpu.matmul %165, %166, %cst_68 {dimension_numbers = #tpu.dot_dimension_numbers<[2], [2], [1], [1], [0, 0, 0, 1, 1, 1], [0], [0]>} : vector<4x8x8xf32>, vector<4x8x8xf32>, vector<4x8x8xf32> -> vector<4x8x8xf32>
    %cst_69 = arith.constant dense<0.000000e+00> : vector<4x8x8xf32>
    %171 = tpu.matmul %165, %168, %cst_69 {dimension_numbers = #tpu.dot_dimension_numbers<[2], [2], [1], [1], [0, 0, 0, 1, 1, 1], [0], [0]>} : vector<4x8x8xf32>, vector<4x8x8xf32>, vector<4x8x8xf32> -> vector<4x8x8xf32>
    "tpu.trace_stop"() : () -> ()
    %cst_70 = arith.constant dense<0xFF800000> : vector<4x8xf32>
    %172 = vector.multi_reduction <maximumf>, %170, %cst_70 [2] : vector<4x8x8xf32> to vector<4x8xf32>
    %173 = vector.shape_cast %172 : vector<4x8xf32> to vector<4x8x1xf32>
    %cst_71 = arith.constant dense<0xFF800000> : vector<4x8xf32>
    %174 = vector.multi_reduction <maximumf>, %171, %cst_71 [2] : vector<4x8x8xf32> to vector<4x8xf32>
    %175 = vector.shape_cast %174 : vector<4x8xf32> to vector<4x8x1xf32>
    %176 = arith.maximumf %173, %175 : vector<4x8x1xf32>
    %177 = vector.broadcast %176 : vector<4x8x1xf32> to vector<4x8x8xf32>
    %178 = arith.subf %170, %177 : vector<4x8x8xf32>
    %179 = math.exp %178 : vector<4x8x8xf32>
    %180 = vector.broadcast %176 : vector<4x8x1xf32> to vector<4x8x8xf32>
    %181 = arith.subf %171, %180 : vector<4x8x8xf32>
    %182 = math.exp %181 : vector<4x8x8xf32>
    %cst_72 = arith.constant dense<0.000000e+00> : vector<4x8xf32>
    %183 = vector.multi_reduction <add>, %179, %cst_72 [2] : vector<4x8x8xf32> to vector<4x8xf32>
    %184 = vector.shape_cast %183 : vector<4x8xf32> to vector<4x8x1xf32>
    %cst_73 = arith.constant dense<0.000000e+00> : vector<4x8xf32>
    %185 = vector.multi_reduction <add>, %182, %cst_73 [2] : vector<4x8x8xf32> to vector<4x8xf32>
    %186 = vector.shape_cast %185 : vector<4x8xf32> to vector<4x8x1xf32>
    %187 = arith.addf %184, %186 : vector<4x8x1xf32>
    %cst_74 = arith.constant 1.000000e+00 : f32
    %188 = vector.broadcast %cst_74 : f32 to vector<4x8x1xf32>
    %189 = arith.divf %188, %187 : vector<4x8x1xf32>
    "tpu.trace_start"() <{level = 10 : i32, message = "bij,bjd->bid"}> : () -> ()
    %cst_75 = arith.constant dense<0.000000e+00> : vector<4x8x8xf32>
    %190 = tpu.matmul %179, %167, %cst_75 {dimension_numbers = #tpu.dot_dimension_numbers<[2], [1], [1], [2], [0, 0, 0, 1, 1, 2], [0], [0]>} : vector<4x8x8xf32>, vector<4x8x8xf32>, vector<4x8x8xf32> -> vector<4x8x8xf32>
    %cst_76 = arith.constant dense<0.000000e+00> : vector<4x8x8xf32>
    %191 = tpu.matmul %182, %169, %cst_76 {dimension_numbers = #tpu.dot_dimension_numbers<[2], [1], [1], [2], [0, 0, 0, 1, 1, 2], [0], [0]>} : vector<4x8x8xf32>, vector<4x8x8xf32>, vector<4x8x8xf32> -> vector<4x8x8xf32>
    "tpu.trace_stop"() : () -> ()
    %192 = arith.addf %190, %191 : vector<4x8x8xf32>
    %193 = vector.broadcast %189 : vector<4x8x1xf32> to vector<4x8x8xf32>
    %194 = arith.mulf %192, %193 : vector<4x8x8xf32>
    %195 = vector.shape_cast %194 : vector<4x8x8xf32> to vector<32x8xf32>
    %c0_77 = arith.constant 0 : index
    %c24 = arith.constant 24 : index
    %196 = vector.load %arg21[%c0_77, %c24] : memref<32x32xf32, #tpu.memory_space<vmem>>, vector<32x8xf32>
    tpu.vector_store %arg21[%c0_77, %c24], %195 {strides = array<i32>} : memref<32x32xf32, #tpu.memory_space<vmem>>, vector<32x8xf32>,
    %c0_78 = arith.constant 0 : index
    %c0_79 = arith.constant 0 : index
    %197 = vector.load %arg21[%c0_78, %c0_79] : memref<32x32xf32, #tpu.memory_space<vmem>>, vector<32x32xf32>
    %cst_80 = arith.constant dense<0.000000e+00> : vector<32x32xf32>
    %198 = tpu.matmul %197, %62, %cst_80 {dimension_numbers = #tpu.dot_dimension_numbers<[1], [0], [0], [1], [0, 0, 1, 1], [], []>} : vector<32x32xf32>, vector<32x32xf32>, vector<32x32xf32> -> vector<32x32xf32>
    %199 = arith.addf %198, %3 : vector<32x32xf32>
    %c0_81 = arith.constant 0 : index
    %c0_82 = arith.constant 0 : index
    %c0_83 = arith.constant 0 : index
    %200 = vector.load %arg12[%c0_81, %c0_82, %c0_83] : memref<1x1x32xf32, #tpu.memory_space<vmem>>, vector<1x1x32xf32>
    %201 = vector.shape_cast %200 : vector<1x1x32xf32> to vector<1x32xf32>
    %c0_84 = arith.constant 0 : index
    %c0_85 = arith.constant 0 : index
    %c0_86 = arith.constant 0 : index
    %202 = vector.load %arg13[%c0_84, %c0_85, %c0_86] : memref<1x1x32xf32, #tpu.memory_space<vmem>>, vector<1x1x32xf32>
    %203 = vector.shape_cast %202 : vector<1x1x32xf32> to vector<1x32xf32>
    %cst_87 = arith.constant dense<0.000000e+00> : vector<32xf32>
    %204 = vector.multi_reduction <add>, %199, %cst_87 [1] : vector<32x32xf32> to vector<32xf32>
    %205 = vector.shape_cast %204 : vector<32xf32> to vector<32x1xf32>
    %cst_88 = arith.constant 3.200000e+01 : f32
    %206 = vector.broadcast %cst_88 : f32 to vector<32x1xf32>
    %207 = arith.divf %205, %206 : vector<32x1xf32>
    %208 = vector.broadcast %207 : vector<32x1xf32> to vector<32x32xf32>
    %209 = arith.subf %199, %208 : vector<32x32xf32>
    %210 = arith.mulf %209, %209 : vector<32x32xf32>
    %cst_89 = arith.constant dense<0.000000e+00> : vector<32xf32>
    %211 = vector.multi_reduction <add>, %210, %cst_89 [1] : vector<32x32xf32> to vector<32xf32>
    %212 = vector.shape_cast %211 : vector<32xf32> to vector<32x1xf32>
    %cst_90 = arith.constant 3.200000e+01 : f32
    %213 = vector.broadcast %cst_90 : f32 to vector<32x1xf32>
    %214 = arith.divf %212, %213 : vector<32x1xf32>
    %215 = vector.broadcast %207 : vector<32x1xf32> to vector<32x32xf32>
    %216 = arith.subf %199, %215 : vector<32x32xf32>
    %cst_91 = arith.constant 9.99999974E-6 : f32
    %217 = vector.broadcast %cst_91 : f32 to vector<32x1xf32>
    %218 = arith.addf %214, %217 : vector<32x1xf32>
    %219 = math.rsqrt %218 : vector<32x1xf32>
    %220 = vector.broadcast %219 : vector<32x1xf32> to vector<32x32xf32>
    %221 = arith.mulf %216, %220 : vector<32x32xf32>
    %222 = vector.broadcast %201 : vector<1x32xf32> to vector<32x32xf32>
    %223 = arith.mulf %221, %222 : vector<32x32xf32>
    %224 = vector.broadcast %203 : vector<1x32xf32> to vector<32x32xf32>
    %225 = arith.addf %223, %224 : vector<32x32xf32>
    %c0_92 = arith.constant 0 : index
    %c0_93 = arith.constant 0 : index
    %c0_94 = arith.constant 0 : index
    %226 = vector.load %arg14[%c0_92, %c0_93, %c0_94] : memref<1x32x128xf32, #tpu.memory_space<vmem>>, vector<1x32x128xf32>
    %227 = vector.shape_cast %226 : vector<1x32x128xf32> to vector<32x128xf32>
    %cst_95 = arith.constant dense<0.000000e+00> : vector<32x128xf32>
    %228 = tpu.matmul %225, %227, %cst_95 {dimension_numbers = #tpu.dot_dimension_numbers<[1], [0], [0], [1], [0, 0, 1, 1], [], []>} : vector<32x32xf32>, vector<32x128xf32>, vector<32x128xf32> -> vector<32x128xf32>
    %cst_96 = arith.constant 5.000000e-01 : f32
    %229 = vector.broadcast %cst_96 : f32 to vector<32x128xf32>
    %230 = arith.mulf %229, %228 : vector<32x128xf32>
    %cst_97 = arith.constant 0.707106769 : f32
    %231 = vector.broadcast %cst_97 : f32 to vector<32x128xf32>
    %232 = arith.mulf %228, %231 : vector<32x128xf32>
    %cst_98 = arith.constant 0.000000e+00 : f32
    %233 = vector.broadcast %cst_98 : f32 to vector<32x128xf32>
    %234 = arith.cmpf oge, %232, %233 : vector<32x128xf32>
    %cst_99 = arith.constant 1.000000e+00 : f32
    %cst_100 = arith.constant -1.000000e+00 : f32
    %235 = vector.broadcast %cst_99 : f32 to vector<32x128xf32>
    %236 = vector.broadcast %cst_100 : f32 to vector<32x128xf32>
    %237 = arith.select %234, %235, %236 : vector<32x128xi1>, vector<32x128xf32>
    %238 = math.absf %232 : vector<32x128xf32>
    %cst_101 = arith.constant 0.327591091 : f32
    %239 = vector.broadcast %cst_101 : f32 to vector<32x128xf32>
    %240 = arith.mulf %239, %238 : vector<32x128xf32>
    %cst_102 = arith.constant 1.000000e+00 : f32
    %241 = vector.broadcast %cst_102 : f32 to vector<32x128xf32>
    %242 = arith.addf %241, %240 : vector<32x128xf32>
    %cst_103 = arith.constant 1.000000e+00 : f32
    %243 = vector.broadcast %cst_103 : f32 to vector<32x128xf32>
    %244 = arith.divf %243, %242 : vector<32x128xf32>
    %cst_104 = arith.constant 1.06140542 : f32
    %245 = vector.broadcast %cst_104 : f32 to vector<32x128xf32>
    %246 = arith.mulf %245, %244 : vector<32x128xf32>
    %cst_105 = arith.constant -1.45315206 : f32
    %247 = vector.broadcast %cst_105 : f32 to vector<32x128xf32>
    %248 = arith.addf %246, %247 : vector<32x128xf32>
    %249 = arith.mulf %248, %244 : vector<32x128xf32>
    %cst_106 = arith.constant 1.42141378 : f32
    %250 = vector.broadcast %cst_106 : f32 to vector<32x128xf32>
    %251 = arith.addf %249, %250 : vector<32x128xf32>
    %252 = arith.mulf %251, %244 : vector<32x128xf32>
    %cst_107 = arith.constant -0.284496725 : f32
    %253 = vector.broadcast %cst_107 : f32 to vector<32x128xf32>
    %254 = arith.addf %252, %253 : vector<32x128xf32>
    %255 = arith.mulf %254, %244 : vector<32x128xf32>
    %cst_108 = arith.constant 0.254829586 : f32
    %256 = vector.broadcast %cst_108 : f32 to vector<32x128xf32>
    %257 = arith.addf %255, %256 : vector<32x128xf32>
    %258 = arith.mulf %257, %244 : vector<32x128xf32>
    %cst_109 = arith.constant 0.000000e+00 : f32
    %259 = vector.broadcast %cst_109 : f32 to vector<32x128xf32>
    %260 = arith.subf %259, %238 : vector<32x128xf32>
    %261 = arith.mulf %260, %238 : vector<32x128xf32>
    %262 = math.exp %261 : vector<32x128xf32>
    %263 = arith.mulf %258, %262 : vector<32x128xf32>
    %cst_110 = arith.constant 1.000000e+00 : f32
    %264 = vector.broadcast %cst_110 : f32 to vector<32x128xf32>
    %265 = arith.subf %264, %263 : vector<32x128xf32>
    %266 = arith.mulf %237, %265 : vector<32x128xf32>
    %cst_111 = arith.constant 1.000000e+00 : f32
    %267 = vector.broadcast %cst_111 : f32 to vector<32x128xf32>
    %268 = arith.addf %267, %266 : vector<32x128xf32>
    %269 = arith.mulf %230, %268 : vector<32x128xf32>
    %c0_112 = arith.constant 0 : index
    %c0_113 = arith.constant 0 : index
    %c0_114 = arith.constant 0 : index
    %270 = vector.load %arg15[%c0_112, %c0_113, %c0_114] : memref<1x128x32xf32, #tpu.memory_space<vmem>>, vector<1x128x32xf32>
    %271 = vector.shape_cast %270 : vector<1x128x32xf32> to vector<128x32xf32>
    %cst_115 = arith.constant dense<0.000000e+00> : vector<32x32xf32>
    %272 = tpu.matmul %269, %271, %cst_115 {dimension_numbers = #tpu.dot_dimension_numbers<[1], [0], [0], [1], [0, 0, 1, 1], [], []>} : vector<32x128xf32>, vector<128x32xf32>, vector<32x32xf32> -> vector<32x32xf32>
    %273 = arith.addf %272, %199 : vector<32x32xf32>
    %c0_116 = arith.constant 0 : index
    %c0_117 = arith.constant 0 : index
    %274 = vector.load %arg19[%c0_116, %c0_117] : memref<32x32xf32, #tpu.memory_space<vmem>>, vector<32x32xf32>
    tpu.vector_store %arg19[%c0_116, %c0_117], %273 {strides = array<i32>} : memref<32x32xf32, #tpu.memory_space<vmem>>, vector<32x32xf32>,
    %c1_i32 = arith.constant 1 : i32
    %275 = arith.cmpi eq, %arg1, %c1_i32 : i32
    %276 = arith.extui %275 : i1 to i32
    %c0_i32_118 = arith.constant 0 : i32
    %277 = arith.cmpi ne, %276, %c0_i32_118 : i32
    scf.if %277 {
      %c0_119 = arith.constant 0 : index
      %c0_120 = arith.constant 0 : index
      %278 = vector.load %arg16[%c0_119, %c0_120] : memref<1x32xf32, #tpu.memory_space<vmem>>, vector<1x32xf32>
      %c0_121 = arith.constant 0 : index
      %c0_122 = arith.constant 0 : index
      %279 = vector.load %arg17[%c0_121, %c0_122] : memref<1x32xf32, #tpu.memory_space<vmem>>, vector<1x32xf32>
      %cst_123 = arith.constant dense<0.000000e+00> : vector<32xf32>
      %280 = vector.multi_reduction <add>, %273, %cst_123 [1] : vector<32x32xf32> to vector<32xf32>
      %281 = vector.shape_cast %280 : vector<32xf32> to vector<32x1xf32>
      %cst_124 = arith.constant 3.200000e+01 : f32
      %282 = vector.broadcast %cst_124 : f32 to vector<32x1xf32>
      %283 = arith.divf %281, %282 : vector<32x1xf32>
      %284 = vector.broadcast %283 : vector<32x1xf32> to vector<32x32xf32>
      %285 = arith.subf %273, %284 : vector<32x32xf32>
      %286 = arith.mulf %285, %285 : vector<32x32xf32>
      %cst_125 = arith.constant dense<0.000000e+00> : vector<32xf32>
      %287 = vector.multi_reduction <add>, %286, %cst_125 [1] : vector<32x32xf32> to vector<32xf32>
      %288 = vector.shape_cast %287 : vector<32xf32> to vector<32x1xf32>
      %cst_126 = arith.constant 3.200000e+01 : f32
      %289 = vector.broadcast %cst_126 : f32 to vector<32x1xf32>
      %290 = arith.divf %288, %289 : vector<32x1xf32>
      %291 = vector.broadcast %283 : vector<32x1xf32> to vector<32x32xf32>
      %292 = arith.subf %273, %291 : vector<32x32xf32>
      %cst_127 = arith.constant 9.99999974E-6 : f32
      %293 = vector.broadcast %cst_127 : f32 to vector<32x1xf32>
      %294 = arith.addf %290, %293 : vector<32x1xf32>
      %295 = math.rsqrt %294 : vector<32x1xf32>
      %296 = vector.broadcast %295 : vector<32x1xf32> to vector<32x32xf32>
      %297 = arith.mulf %292, %296 : vector<32x32xf32>
      %298 = vector.broadcast %278 : vector<1x32xf32> to vector<32x32xf32>
      %299 = arith.mulf %297, %298 : vector<32x32xf32>
      %300 = vector.broadcast %279 : vector<1x32xf32> to vector<32x32xf32>
      %301 = arith.addf %299, %300 : vector<32x32xf32>
      %302 = vector.shape_cast %301 : vector<32x32xf32> to vector<4x8x32xf32>
      %c0_128 = arith.constant 0 : index
      %c0_129 = arith.constant 0 : index
      %c0_130 = arith.constant 0 : index
      %303 = vector.load %arg18[%c0_128, %c0_129, %c0_130] : memref<4x8x32xf32, #tpu.memory_space<vmem>>, vector<4x8x32xf32>
      tpu.vector_store %arg18[%c0_128, %c0_129, %c0_130], %302 {strides = array<i32>} : memref<4x8x32xf32, #tpu.memory_space<vmem>>, vector<4x8x32xf32>,
    } else {
    }
    return
  }
  func.func @transform_0(%arg0: i32, %arg1: i32) -> (i32, i32, i32) {
    %c0_i32 = arith.constant 0 : i32
    %c0_i32_0 = arith.constant 0 : i32
    %c0_i32_1 = arith.constant 0 : i32
    return %arg0, %c0_i32, %c0_i32_0 : i32, i32, i32
  }
  func.func @transform_1(%arg0: i32, %arg1: i32) -> (i32, i32, i32) {
    %c0_i32 = arith.constant 0 : i32
    %c0_i32_0 = arith.constant 0 : i32
    %c0_i32_1 = arith.constant 0 : i32
    return %arg0, %c0_i32, %c0_i32_0 : i32, i32, i32
  }
  func.func @transform_2(%arg0: i32, %arg1: i32) -> (i32, i32) {
    %c0_i32 = arith.constant 0 : i32
    %c0_i32_0 = arith.constant 0 : i32
    %c0_i32_1 = arith.constant 0 : i32
    return %c0_i32, %c0_i32_0 : i32, i32
  }
  func.func @transform_3(%arg0: i32, %arg1: i32) -> (i32, i32, i32) {
    %c0_i32 = arith.constant 0 : i32
    %c0_i32_0 = arith.constant 0 : i32
    %c0_i32_1 = arith.constant 0 : i32
    return %arg1, %c0_i32, %c0_i32_0 : i32, i32, i32
  }
  func.func @transform_4(%arg0: i32, %arg1: i32) -> (i32, i32, i32) {
    %c0_i32 = arith.constant 0 : i32
    %c0_i32_0 = arith.constant 0 : i32
    %c0_i32_1 = arith.constant 0 : i32
    return %arg1, %c0_i32, %c0_i32_0 : i32, i32, i32
  }
  func.func @transform_5(%arg0: i32, %arg1: i32) -> (i32, i32, i32) {
    %c0_i32 = arith.constant 0 : i32
    %c0_i32_0 = arith.constant 0 : i32
    %c0_i32_1 = arith.constant 0 : i32
    return %arg1, %c0_i32, %c0_i32_0 : i32, i32, i32
  }
  func.func @transform_6(%arg0: i32, %arg1: i32) -> (i32, i32, i32) {
    %c0_i32 = arith.constant 0 : i32
    %c0_i32_0 = arith.constant 0 : i32
    %c0_i32_1 = arith.constant 0 : i32
    return %arg1, %c0_i32, %c0_i32_0 : i32, i32, i32
  }
  func.func @transform_7(%arg0: i32, %arg1: i32) -> (i32, i32, i32) {
    %c0_i32 = arith.constant 0 : i32
    %c0_i32_0 = arith.constant 0 : i32
    %c0_i32_1 = arith.constant 0 : i32
    return %arg1, %c0_i32, %c0_i32_0 : i32, i32, i32
  }
  func.func @transform_8(%arg0: i32, %arg1: i32) -> (i32, i32, i32) {
    %c0_i32 = arith.constant 0 : i32
    %c0_i32_0 = arith.constant 0 : i32
    %c0_i32_1 = arith.constant 0 : i32
    return %arg1, %c0_i32, %c0_i32_0 : i32, i32, i32
  }
  func.func @transform_9(%arg0: i32, %arg1: i32) -> (i32, i32, i32) {
    %c0_i32 = arith.constant 0 : i32
    %c0_i32_0 = arith.constant 0 : i32
    %c0_i32_1 = arith.constant 0 : i32
    return %arg1, %c0_i32, %c0_i32_0 : i32, i32, i32
  }
  func.func @transform_10(%arg0: i32, %arg1: i32) -> (i32, i32, i32) {
    %c0_i32 = arith.constant 0 : i32
    %c0_i32_0 = arith.constant 0 : i32
    %c0_i32_1 = arith.constant 0 : i32
    return %arg1, %c0_i32, %c0_i32_0 : i32, i32, i32
  }
  func.func @transform_11(%arg0: i32, %arg1: i32) -> (i32, i32, i32) {
    %c0_i32 = arith.constant 0 : i32
    %c0_i32_0 = arith.constant 0 : i32
    %c0_i32_1 = arith.constant 0 : i32
    return %arg1, %c0_i32, %c0_i32_0 : i32, i32, i32
  }
  func.func @transform_12(%arg0: i32, %arg1: i32) -> (i32, i32, i32) {
    %c0_i32 = arith.constant 0 : i32
    %c0_i32_0 = arith.constant 0 : i32
    %c0_i32_1 = arith.constant 0 : i32
    return %arg1, %c0_i32, %c0_i32_0 : i32, i32, i32
  }
  func.func @transform_13(%arg0: i32, %arg1: i32) -> (i32, i32, i32) {
    %c0_i32 = arith.constant 0 : i32
    %c0_i32_0 = arith.constant 0 : i32
    %c0_i32_1 = arith.constant 0 : i32
    return %arg1, %c0_i32, %c0_i32_0 : i32, i32, i32
  }
  func.func @transform_14(%arg0: i32, %arg1: i32) -> (i32, i32) {
    %c0_i32 = arith.constant 0 : i32
    %c0_i32_0 = arith.constant 0 : i32
    %c0_i32_1 = arith.constant 0 : i32
    return %c0_i32, %c0_i32_0 : i32, i32
  }
  func.func @transform_15(%arg0: i32, %arg1: i32) -> (i32, i32) {
    %c0_i32 = arith.constant 0 : i32
    %c0_i32_0 = arith.constant 0 : i32
    %c0_i32_1 = arith.constant 0 : i32
    return %c0_i32, %c0_i32_0 : i32, i32
  }
  func.func @transform_16(%arg0: i32, %arg1: i32) -> (i32, i32, i32) {
    %c0_i32 = arith.constant 0 : i32
    %c0_i32_0 = arith.constant 0 : i32
    %c0_i32_1 = arith.constant 0 : i32
    return %arg0, %c0_i32, %c0_i32_0 : i32, i32, i32
  }
}

</mosaic_0001>

<llo_original>
// kernel: perceiver_resampler.1
$region0: #{perceiver_resampler.1}
  #allocation0 [shape = 'u32[]', space=smem, size = 0x4, offset = 0x4, fixed_abs, tag = 'smem constant byte address 0x4 - core index']
  #allocation1 [shape = 'u32[72,128]{1,0:T(1,128)}', space=vmem, size = 0x9000, scoped, tag = 'internal scratch']
  #allocation2 [shape = 'f32[32,32]{1,0:T(8,128)}', space=vmem, size = 0x4000, scoped, tag = 'scratch operand']
  #allocation3 [shape = 'f32[32,32]{1,0:T(8,128)}', space=vmem, size = 0x4000, scoped, tag = 'scratch operand']
  #allocation4 [shape = 'f32[32,32]{1,0:T(8,128)}', space=vmem, size = 0x4000, scoped, tag = 'scratch operand']
  %s0 = inlined_call_operand.vmem [shape: f32[4,8,32], index: 0, kind: input, shape index: {}]
  %s1 = inlined_call_operand.vmem [shape: f32[4,1,32], index: 1, kind: input, shape index: {}]
  %s2 = inlined_call_operand.vmem [shape: f32[8,32], index: 2, kind: input, shape index: {}]
  %s3 = inlined_call_operand.vmem [shape: f32[2,1,32], index: 3, kind: input, shape index: {}]
  %s4 = inlined_call_operand.vmem [shape: f32[2,1,32], index: 4, kind: input, shape index: {}]
  %s5 = inlined_call_operand.vmem [shape: f32[2,1,32], index: 5, kind: input, shape index: {}]
  %s6 = inlined_call_operand.vmem [shape: f32[2,1,32], index: 6, kind: input, shape index: {}]
  %s7 = inlined_call_operand.vmem [shape: f32[2,32,32], index: 7, kind: input, shape index: {}]
  %s8 = inlined_call_operand.vmem [shape: f32[2,32,64], index: 8, kind: input, shape index: {}]
  %s9 = inlined_call_operand.vmem [shape: f32[2,32,32], index: 9, kind: input, shape index: {}]
  %s10 = inlined_call_operand.vmem [shape: f32[2,1,32], index: 10, kind: input, shape index: {}]
  %s11 = inlined_call_operand.vmem [shape: f32[2,1,32], index: 11, kind: input, shape index: {}]
  %s12 = inlined_call_operand.vmem [shape: f32[2,32,128], index: 12, kind: input, shape index: {}]
  %s13 = inlined_call_operand.vmem [shape: f32[2,128,32], index: 13, kind: input, shape index: {}]
  %s14 = inlined_call_operand.vmem [shape: f32[1,32], index: 14, kind: input, shape index: {}]
  %s15 = inlined_call_operand.vmem [shape: f32[1,32], index: 15, kind: input, shape index: {}]
  %s16 = inlined_call_operand.hbm [shape: f32[4,8,32], index: 16, kind: output, shape index: {}]
  %s17 = sld [smem:[#allocation0]]
  $region105: #{perceiver_resampler.1} parent=0
    _
  %s19 = ssub.s32 1, %s17
  %s20 = scalar_select 0, %s19, %s17
  $region1: #{perceiver_resampler.1} parent=0
    #allocation5 [shape = 'u8[16384]{0}', space=vmem, size = 0x4000, scoped, tag = 'output window, operand 0, single buffered']
    #allocation6 [shape = 's32[2]{0}', space=sflag, size = 0x8, scoped, tag = 'scoped memory for perceiver_resampler.1']
    %21 = vsyncpa [#allocation6], 0
    loop: start=0, step=1, limit=4
    $region2: #{perceiver_resampler.1} parent=1 // loop_pre_header
      _
    $region3: #{perceiver_resampler.1} parent=1 // loop_header
      %s23 = sphi 0, %s27
      %p24 = scmp.ge.s32.totalorder %s23, 4
      %s30 = sphi 0, %s42
      %s31 = sphi 0, %s38
      %s32 = sphi 0, %s30
      %s33 = sphi 0, %s31
      %s34 = sphi 0, %s32
      %s35 = sphi 0, %s33
      %s45 = sphi 0, %s47
      %s48 = sphi 0, %s45
      %s49 = sphi 0, %s48
      %s65 = sphi 0, %s49
      %s71 = sphi 0, %s73
      %s74 = sphi 0, %s71
      %s75 = sphi 0, %s74
      %s91 = sphi 0, %s75
      %s95 = sphi 0, %s95
      %s97 = sphi 0, %s95
      %s98 = sphi 0, %s97
      %s112 = sphi 0, %s98
      %s118 = sphi 0, %s120
      %s121 = sphi 0, %s118
      %s122 = sphi 0, %s121
      %s138 = sphi 0, %s122
      %s144 = sphi 0, %s146
      %s147 = sphi 0, %s144
      %s148 = sphi 0, %s147
      %s164 = sphi 0, %s148
      %s170 = sphi 0, %s172
      %s173 = sphi 0, %s170
      %s174 = sphi 0, %s173
      %s190 = sphi 0, %s174
      %s196 = sphi 0, %s198
      %s199 = sphi 0, %s196
      %s200 = sphi 0, %s199
      %s216 = sphi 0, %s200
      %s222 = sphi 0, %s224
      %s225 = sphi 0, %s222
      %s226 = sphi 0, %s225
      %s242 = sphi 0, %s226
      %s248 = sphi 0, %s250
      %s251 = sphi 0, %s248
      %s252 = sphi 0, %s251
      %s268 = sphi 0, %s252
      %s274 = sphi 0, %s276
      %s277 = sphi 0, %s274
      %s278 = sphi 0, %s277
      %s294 = sphi 0, %s278
      %s300 = sphi 0, %s302
      %s303 = sphi 0, %s300
      %s304 = sphi 0, %s303
      %s320 = sphi 0, %s304
      %s326 = sphi 0, %s328
      %s329 = sphi 0, %s326
      %s330 = sphi 0, %s329
      %s346 = sphi 0, %s330
      %s352 = sphi 0, %s354
      %s355 = sphi 0, %s352
      %s356 = sphi 0, %s355
      %s372 = sphi 0, %s356
      %s378 = sphi 0, %s380
      %s381 = sphi 0, %s378
      %s382 = sphi 0, %s381
      %s398 = sphi 0, %s382
      %s402 = sphi 0, %s402
      %s404 = sphi 0, %s402
      %s405 = sphi 0, %s404
      %s419 = sphi 0, %s405
      %s423 = sphi 0, %s423
      %s425 = sphi 0, %s423
      %s426 = sphi 0, %s425
      %s440 = sphi 0, %s426
      %s446 = sphi 0, %s448
      %s449 = sphi 0, %s446
      %s450 = sphi 0, %s449
      %s466 = sphi 0, %s450
    $region4: #{perceiver_resampler.1} parent=1 // loop_header_branch
      %26 = sbr.rel (%p24) target = $region8
    $region5: #{perceiver_resampler.1} parent=1 // loop_body
      %s28 = ssub.s32 %s23, 1
      %s29 = ssub.s32 %s23, 2
      %s36 = sadd.s32 1, %s31
      %p37 = scmp.ge.s32.totalorder %s36, 2
      %s38 = scalar_select %p37, 0, %s36
      %s39 = sadd.s32 1, %s30
      %s40 = scalar_select %p37, %s39, %s30
      %p41 = scmp.ge.s32.totalorder %s40, 1
      %s42 = scalar_select %p41, 0, %s40
      %s43 = ssub.s32 %s30, %s42
      %p44 = scmp.eq.s32.totalorder %s43, 0
      %s46 = sadd.s32 %s45, 1
      %s47 = scalar_select %p44, %s45, %s46
      %p50 = pneg %p44
      %p51 = scmp.eq.s32.totalorder %s23, 1
      %p52 = por %p50, %p51
      %p53 = scmp.ne.s32.totalorder %s45, %s48
      %p54 = scmp.eq.s32.totalorder %s23, 0
      %p55 = por %p53, %p54
      %p56 = scmp.ne.s32.totalorder %s45, %s48
      %p57 = scmp.eq.s32.totalorder %s28, 1
      %p58 = por %p56, %p57
      %p59 = scmp.ne.s32.totalorder %s48, %s49
      %p60 = scmp.eq.s32.totalorder %s28, 0
      %p61 = por %p59, %p60
      %p62 = scmp.ne.s32.totalorder %s48, %s49
      %p63 = scmp.eq.s32.totalorder %s29, 1
      %p64 = por %p62, %p63
      %p66 = scmp.ne.s32.totalorder %s49, %s65
      %p67 = scmp.eq.s32.totalorder %s29, 0
      %p68 = por %p66, %p67
      %s69 = ssub.s32 %s30, %s42
      %p70 = scmp.eq.s32.totalorder %s69, 0
      %s72 = sadd.s32 %s71, 1
      %s73 = scalar_select %p70, %s71, %s72
      %p76 = pneg %p70
      %p77 = scmp.eq.s32.totalorder %s23, 1
      %p78 = por %p76, %p77
      %p79 = scmp.ne.s32.totalorder %s71, %s74
      %p80 = scmp.eq.s32.totalorder %s23, 0
      %p81 = por %p79, %p80
      %p82 = scmp.ne.s32.totalorder %s71, %s74
      %p83 = scmp.eq.s32.totalorder %s28, 1
      %p84 = por %p82, %p83
      %p85 = scmp.ne.s32.totalorder %s74, %s75
      %p86 = scmp.eq.s32.totalorder %s28, 0
      %p87 = por %p85, %p86
      %p88 = scmp.ne.s32.totalorder %s74, %s75
      %p89 = scmp.eq.s32.totalorder %s29, 1
      %p90 = por %p88, %p89
      %p92 = scmp.ne.s32.totalorder %s75, %s91
      %p93 = scmp.eq.s32.totalorder %s29, 0
      %p94 = por %p92, %p93
      %s96 = sadd.s32 %s95, 1
      %p99 = scmp.eq.s32.totalorder %s23, 1
      %p100 = scmp.ne.s32.totalorder %s95, %s97
      %p101 = scmp.eq.s32.totalorder %s23, 0
      %p102 = por %p100, %p101
      %p103 = scmp.ne.s32.totalorder %s95, %s97
      %p104 = scmp.eq.s32.totalorder %s28, 1
      %p105 = por %p103, %p104
      %p106 = scmp.ne.s32.totalorder %s97, %s98
      %p107 = scmp.eq.s32.totalorder %s28, 0
      %p108 = por %p106, %p107
      %p109 = scmp.ne.s32.totalorder %s97, %s98
      %p110 = scmp.eq.s32.totalorder %s29, 1
      %p111 = por %p109, %p110
      %p113 = scmp.ne.s32.totalorder %s98, %s112
      %p114 = scmp.eq.s32.totalorder %s29, 0
      %p115 = por %p113, %p114
      %s116 = ssub.s32 %s31, %s38
      %p117 = scmp.eq.s32.totalorder %s116, 0
      %s119 = sadd.s32 %s118, 1
      %s120 = scalar_select %p117, %s118, %s119
      %p123 = pneg %p117
      %p124 = scmp.eq.s32.totalorder %s23, 1
      %p125 = por %p123, %p124
      %p126 = scmp.ne.s32.totalorder %s118, %s121
      %p127 = scmp.eq.s32.totalorder %s23, 0
      %p128 = por %p126, %p127
      %p129 = scmp.ne.s32.totalorder %s118, %s121
      %p130 = scmp.eq.s32.totalorder %s28, 1
      %p131 = por %p129, %p130
      %p132 = scmp.ne.s32.totalorder %s121, %s122
      %p133 = scmp.eq.s32.totalorder %s28, 0
      %p134 = por %p132, %p133
      %p135 = scmp.ne.s32.totalorder %s121, %s122
      %p136 = scmp.eq.s32.totalorder %s29, 1
      %p137 = por %p135, %p136
      %p139 = scmp.ne.s32.totalorder %s122, %s138
      %p140 = scmp.eq.s32.totalorder %s29, 0
      %p141 = por %p139, %p140
      %s142 = ssub.s32 %s31, %s38
      %p143 = scmp.eq.s32.totalorder %s142, 0
      %s145 = sadd.s32 %s144, 1
      %s146 = scalar_select %p143, %s144, %s145
      %p149 = pneg %p143
      %p150 = scmp.eq.s32.totalorder %s23, 1
      %p151 = por %p149, %p150
      %p152 = scmp.ne.s32.totalorder %s144, %s147
      %p153 = scmp.eq.s32.totalorder %s23, 0
      %p154 = por %p152, %p153
      %p155 = scmp.ne.s32.totalorder %s144, %s147
      %p156 = scmp.eq.s32.totalorder %s28, 1
      %p157 = por %p155, %p156
      %p158 = scmp.ne.s32.totalorder %s147, %s148
      %p159 = scmp.eq.s32.totalorder %s28, 0
      %p160 = por %p158, %p159
      %p161 = scmp.ne.s32.totalorder %s147, %s148
      %p162 = scmp.eq.s32.totalorder %s29, 1
      %p163 = por %p161, %p162
      %p165 = scmp.ne.s32.totalorder %s148, %s164
      %p166 = scmp.eq.s32.totalorder %s29, 0
      %p167 = por %p165, %p166
      %s168 = ssub.s32 %s31, %s38
      %p169 = scmp.eq.s32.totalorder %s168, 0
      %s171 = sadd.s32 %s170, 1
      %s172 = scalar_select %p169, %s170, %s171
      %p175 = pneg %p169
      %p176 = scmp.eq.s32.totalorder %s23, 1
      %p177 = por %p175, %p176
      %p178 = scmp.ne.s32.totalorder %s170, %s173
      %p179 = scmp.eq.s32.totalorder %s23, 0
      %p180 = por %p178, %p179
      %p181 = scmp.ne.s32.totalorder %s170, %s173
      %p182 = scmp.eq.s32.totalorder %s28, 1
      %p183 = por %p181, %p182
      %p184 = scmp.ne.s32.totalorder %s173, %s174
      %p185 = scmp.eq.s32.totalorder %s28, 0
      %p186 = por %p184, %p185
      %p187 = scmp.ne.s32.totalorder %s173, %s174
      %p188 = scmp.eq.s32.totalorder %s29, 1
      %p189 = por %p187, %p188
      %p191 = scmp.ne.s32.totalorder %s174, %s190
      %p192 = scmp.eq.s32.totalorder %s29, 0
      %p193 = por %p191, %p192
      %s194 = ssub.s32 %s31, %s38
      %p195 = scmp.eq.s32.totalorder %s194, 0
      %s197 = sadd.s32 %s196, 1
      %s198 = scalar_select %p195, %s196, %s197
      %p201 = pneg %p195
      %p202 = scmp.eq.s32.totalorder %s23, 1
      %p203 = por %p201, %p202
      %p204 = scmp.ne.s32.totalorder %s196, %s199
      %p205 = scmp.eq.s32.totalorder %s23, 0
      %p206 = por %p204, %p205
      %p207 = scmp.ne.s32.totalorder %s196, %s199
      %p208 = scmp.eq.s32.totalorder %s28, 1
      %p209 = por %p207, %p208
      %p210 = scmp.ne.s32.totalorder %s199, %s200
      %p211 = scmp.eq.s32.totalorder %s28, 0
      %p212 = por %p210, %p211
      %p213 = scmp.ne.s32.totalorder %s199, %s200
      %p214 = scmp.eq.s32.totalorder %s29, 1
      %p215 = por %p213, %p214
      %p217 = scmp.ne.s32.totalorder %s200, %s216
      %p218 = scmp.eq.s32.totalorder %s29, 0
      %p219 = por %p217, %p218
      %s220 = ssub.s32 %s31, %s38
      %p221 = scmp.eq.s32.totalorder %s220, 0
      %s223 = sadd.s32 %s222, 1
      %s224 = scalar_select %p221, %s222, %s223
      %p227 = pneg %p221
      %p228 = scmp.eq.s32.totalorder %s23, 1
      %p229 = por %p227, %p228
      %p230 = scmp.ne.s32.totalorder %s222, %s225
      %p231 = scmp.eq.s32.totalorder %s23, 0
      %p232 = por %p230, %p231
      %p233 = scmp.ne.s32.totalorder %s222, %s225
      %p234 = scmp.eq.s32.totalorder %s28, 1
      %p235 = por %p233, %p234
      %p236 = scmp.ne.s32.totalorder %s225, %s226
      %p237 = scmp.eq.s32.totalorder %s28, 0
      %p238 = por %p236, %p237
      %p239 = scmp.ne.s32.totalorder %s225, %s226
      %p240 = scmp.eq.s32.totalorder %s29, 1
      %p241 = por %p239, %p240
      %p243 = scmp.ne.s32.totalorder %s226, %s242
      %p244 = scmp.eq.s32.totalorder %s29, 0
      %p245 = por %p243, %p244
      %s246 = ssub.s32 %s31, %s38
      %p247 = scmp.eq.s32.totalorder %s246, 0
      %s249 = sadd.s32 %s248, 1
      %s250 = scalar_select %p247, %s248, %s249
      %p253 = pneg %p247
      %p254 = scmp.eq.s32.totalorder %s23, 1
      %p255 = por %p253, %p254
      %p256 = scmp.ne.s32.totalorder %s248, %s251
      %p257 = scmp.eq.s32.totalorder %s23, 0
      %p258 = por %p256, %p257
      %p259 = scmp.ne.s32.totalorder %s248, %s251
      %p260 = scmp.eq.s32.totalorder %s28, 1
      %p261 = por %p259, %p260
      %p262 = scmp.ne.s32.totalorder %s251, %s252
      %p263 = scmp.eq.s32.totalorder %s28, 0
      %p264 = por %p262, %p263
      %p265 = scmp.ne.s32.totalorder %s251, %s252
      %p266 = scmp.eq.s32.totalorder %s29, 1
      %p267 = por %p265, %p266
      %p269 = scmp.ne.s32.totalorder %s252, %s268
      %p270 = scmp.eq.s32.totalorder %s29, 0
      %p271 = por %p269, %p270
      %s272 = ssub.s32 %s31, %s38
      %p273 = scmp.eq.s32.totalorder %s272, 0
      %s275 = sadd.s32 %s274, 1
      %s276 = scalar_select %p273, %s274, %s275
      %p279 = pneg %p273
      %p280 = scmp.eq.s32.totalorder %s23, 1
      %p281 = por %p279, %p280
      %p282 = scmp.ne.s32.totalorder %s274, %s277
      %p283 = scmp.eq.s32.totalorder %s23, 0
      %p284 = por %p282, %p283
      %p285 = scmp.ne.s32.totalorder %s274, %s277
      %p286 = scmp.eq.s32.totalorder %s28, 1
      %p287 = por %p285, %p286
      %p288 = scmp.ne.s32.totalorder %s277, %s278
      %p289 = scmp.eq.s32.totalorder %s28, 0
      %p290 = por %p288, %p289
      %p291 = scmp.ne.s32.totalorder %s277, %s278
      %p292 = scmp.eq.s32.totalorder %s29, 1
      %p293 = por %p291, %p292
      %p295 = scmp.ne.s32.totalorder %s278, %s294
      %p296 = scmp.eq.s32.totalorder %s29, 0
      %p297 = por %p295, %p296
      %s298 = ssub.s32 %s31, %s38
      %p299 = scmp.eq.s32.totalorder %s298, 0
      %s301 = sadd.s32 %s300, 1
      %s302 = scalar_select %p299, %s300, %s301
      %p305 = pneg %p299
      %p306 = scmp.eq.s32.totalorder %s23, 1
      %p307 = por %p305, %p306
      %p308 = scmp.ne.s32.totalorder %s300, %s303
      %p309 = scmp.eq.s32.totalorder %s23, 0
      %p310 = por %p308, %p309
      %p311 = scmp.ne.s32.totalorder %s300, %s303
      %p312 = scmp.eq.s32.totalorder %s28, 1
      %p313 = por %p311, %p312
      %p314 = scmp.ne.s32.totalorder %s303, %s304
      %p315 = scmp.eq.s32.totalorder %s28, 0
      %p316 = por %p314, %p315
      %p317 = scmp.ne.s32.totalorder %s303, %s304
      %p318 = scmp.eq.s32.totalorder %s29, 1
      %p319 = por %p317, %p318
      %p321 = scmp.ne.s32.totalorder %s304, %s320
      %p322 = scmp.eq.s32.totalorder %s29, 0
      %p323 = por %p321, %p322
      %s324 = ssub.s32 %s31, %s38
      %p325 = scmp.eq.s32.totalorder %s324, 0
      %s327 = sadd.s32 %s326, 1
      %s328 = scalar_select %p325, %s326, %s327
      %p331 = pneg %p325
      %p332 = scmp.eq.s32.totalorder %s23, 1
      %p333 = por %p331, %p332
      %p334 = scmp.ne.s32.totalorder %s326, %s329
      %p335 = scmp.eq.s32.totalorder %s23, 0
      %p336 = por %p334, %p335
      %p337 = scmp.ne.s32.totalorder %s326, %s329
      %p338 = scmp.eq.s32.totalorder %s28, 1
      %p339 = por %p337, %p338
      %p340 = scmp.ne.s32.totalorder %s329, %s330
      %p341 = scmp.eq.s32.totalorder %s28, 0
      %p342 = por %p340, %p341
      %p343 = scmp.ne.s32.totalorder %s329, %s330
      %p344 = scmp.eq.s32.totalorder %s29, 1
      %p345 = por %p343, %p344
      %p347 = scmp.ne.s32.totalorder %s330, %s346
      %p348 = scmp.eq.s32.totalorder %s29, 0
      %p349 = por %p347, %p348
      %s350 = ssub.s32 %s31, %s38
      %p351 = scmp.eq.s32.totalorder %s350, 0
      %s353 = sadd.s32 %s352, 1
      %s354 = scalar_select %p351, %s352, %s353
      %p357 = pneg %p351
      %p358 = scmp.eq.s32.totalorder %s23, 1
      %p359 = por %p357, %p358
      %p360 = scmp.ne.s32.totalorder %s352, %s355
      %p361 = scmp.eq.s32.totalorder %s23, 0
      %p362 = por %p360, %p361
      %p363 = scmp.ne.s32.totalorder %s352, %s355
      %p364 = scmp.eq.s32.totalorder %s28, 1
      %p365 = por %p363, %p364
      %p366 = scmp.ne.s32.totalorder %s355, %s356
      %p367 = scmp.eq.s32.totalorder %s28, 0
      %p368 = por %p366, %p367
      %p369 = scmp.ne.s32.totalorder %s355, %s356
      %p370 = scmp.eq.s32.totalorder %s29, 1
      %p371 = por %p369, %p370
      %p373 = scmp.ne.s32.totalorder %s356, %s372
      %p374 = scmp.eq.s32.totalorder %s29, 0
      %p375 = por %p373, %p374
      %s376 = ssub.s32 %s31, %s38
      %p377 = scmp.eq.s32.totalorder %s376, 0
      %s379 = sadd.s32 %s378, 1
      %s380 = scalar_select %p377, %s378, %s379
      %p383 = pneg %p377
      %p384 = scmp.eq.s32.totalorder %s23, 1
      %p385 = por %p383, %p384
      %p386 = scmp.ne.s32.totalorder %s378, %s381
      %p387 = scmp.eq.s32.totalorder %s23, 0
      %p388 = por %p386, %p387
      %p389 = scmp.ne.s32.totalorder %s378, %s381
      %p390 = scmp.eq.s32.totalorder %s28, 1
      %p391 = por %p389, %p390
      %p392 = scmp.ne.s32.totalorder %s381, %s382
      %p393 = scmp.eq.s32.totalorder %s28, 0
      %p394 = por %p392, %p393
      %p395 = scmp.ne.s32.totalorder %s381, %s382
      %p396 = scmp.eq.s32.totalorder %s29, 1
      %p397 = por %p395, %p396
      %p399 = scmp.ne.s32.totalorder %s382, %s398
      %p400 = scmp.eq.s32.totalorder %s29, 0
      %p401 = por %p399, %p400
      %s403 = sadd.s32 %s402, 1
      %p406 = scmp.eq.s32.totalorder %s23, 1
      %p407 = scmp.ne.s32.totalorder %s402, %s404
      %p408 = scmp.eq.s32.totalorder %s23, 0
      %p409 = por %p407, %p408
      %p410 = scmp.ne.s32.totalorder %s402, %s404
      %p411 = scmp.eq.s32.totalorder %s28, 1
      %p412 = por %p410, %p411
      %p413 = scmp.ne.s32.totalorder %s404, %s405
      %p414 = scmp.eq.s32.totalorder %s28, 0
      %p415 = por %p413, %p414
      %p416 = scmp.ne.s32.totalorder %s404, %s405
      %p417 = scmp.eq.s32.totalorder %s29, 1
      %p418 = por %p416, %p417
      %p420 = scmp.ne.s32.totalorder %s405, %s419
      %p421 = scmp.eq.s32.totalorder %s29, 0
      %p422 = por %p420, %p421
      %s424 = sadd.s32 %s423, 1
      %p427 = scmp.eq.s32.totalorder %s23, 1
      %p428 = scmp.ne.s32.totalorder %s423, %s425
      %p429 = scmp.eq.s32.totalorder %s23, 0
      %p430 = por %p428, %p429
      %p431 = scmp.ne.s32.totalorder %s423, %s425
      %p432 = scmp.eq.s32.totalorder %s28, 1
      %p433 = por %p431, %p432
      %p434 = scmp.ne.s32.totalorder %s425, %s426
      %p435 = scmp.eq.s32.totalorder %s28, 0
      %p436 = por %p434, %p435
      %p437 = scmp.ne.s32.totalorder %s425, %s426
      %p438 = scmp.eq.s32.totalorder %s29, 1
      %p439 = por %p437, %p438
      %p441 = scmp.ne.s32.totalorder %s426, %s440
      %p442 = scmp.eq.s32.totalorder %s29, 0
      %p443 = por %p441, %p442
      %s444 = ssub.s32 %s30, %s42
      %p445 = scmp.eq.s32.totalorder %s444, 0
      %s447 = sadd.s32 %s446, 1
      %s448 = scalar_select %p445, %s446, %s447
      %p451 = pneg %p445
      %p452 = scmp.eq.s32.totalorder %s23, 1
      %p453 = por %p451, %p452
      %p454 = scmp.ne.s32.totalorder %s446, %s449
      %p455 = scmp.eq.s32.totalorder %s23, 0
      %p456 = por %p454, %p455
      %p457 = scmp.ne.s32.totalorder %s446, %s449
      %p458 = scmp.eq.s32.totalorder %s28, 1
      %p459 = por %p457, %p458
      %p460 = scmp.ne.s32.totalorder %s449, %s450
      %p461 = scmp.eq.s32.totalorder %s28, 0
      %p462 = por %p460, %p461
      %p463 = scmp.ne.s32.totalorder %s449, %s450
      %p464 = scmp.eq.s32.totalorder %s29, 1
      %p465 = por %p463, %p464
      %p467 = scmp.ne.s32.totalorder %s450, %s466
      %p468 = scmp.eq.s32.totalorder %s29, 0
      %p469 = por %p467, %p468
      %p470 = scmp.le.s32.totalorder 1, %s23
      %p471 = scmp.lt.s32.totalorder %s23, 3
      %p472 = pnand %p470, %p471
      %p473 = pneg %p472
      // Predicated region
      $region9: #{perceiver_resampler.1} parent=5 // pred_check
        _
      $region10: #{perceiver_resampler.1} parent=5 // pred_check_branch
        %475 = sbr.rel (%p472) target = $region12
      $region11: #{perceiver_resampler.1} parent=5 // pred_region
        %s476 = ssub.s32 %s23, 1
        // Predicated region
        $region13: #{perceiver_resampler.1} parent=11 // pred_check
          %p477 = pneg %p61
        $region14: #{perceiver_resampler.1} parent=11 // pred_check_branch
          %479 = sbr.rel (%p477) target = $region16
        $region15: #{perceiver_resampler.1} parent=11 // pred_region
          %s480 = smul.u32 4, %s32
          %p481 = scmp.lt.s32.totalorder %s480, 3
          %s482 = scalar_select %p481, %s480, 3
          %s483 = smul.addr %s482, 8
          %s484 = scalar_lea.vmem %s0, %s483
          %s485 = smul.u32 4, %s32
        $region16: #{perceiver_resampler.1} parent=11 // pred_fallthru
          _
        // Predicated region
        $region17: #{perceiver_resampler.1} parent=11 // pred_check
          %p486 = pneg %p87
        $region18: #{perceiver_resampler.1} parent=11 // pred_check_branch
          %488 = sbr.rel (%p486) target = $region20
        $region19: #{perceiver_resampler.1} parent=11 // pred_region
          %s489 = smul.u32 4, %s32
          %p490 = scmp.lt.s32.totalorder %s489, 3
          %s491 = scalar_select %p490, %s489, 3
          %s492 = scalar_lea.vmem %s1, %s491
          %s493 = smul.u32 4, %s32
        $region20: #{perceiver_resampler.1} parent=11 // pred_fallthru
          _
        // Predicated region
        $region21: #{perceiver_resampler.1} parent=11 // pred_check
          %p494 = pneg %p108
        $region22: #{perceiver_resampler.1} parent=11 // pred_check_branch
          %496 = sbr.rel (%p494) target = $region24
        $region23: #{perceiver_resampler.1} parent=11 // pred_region
          _
        $region24: #{perceiver_resampler.1} parent=11 // pred_fallthru
          _
        // Predicated region
        $region25: #{perceiver_resampler.1} parent=11 // pred_check
          %p497 = pneg %p415
        $region26: #{perceiver_resampler.1} parent=11 // pred_check_branch
          %499 = sbr.rel (%p497) target = $region28
        $region27: #{perceiver_resampler.1} parent=11 // pred_region
          _
        $region28: #{perceiver_resampler.1} parent=11 // pred_fallthru
          _
        // Predicated region
        $region29: #{perceiver_resampler.1} parent=11 // pred_check
          %p500 = pneg %p436
        $region30: #{perceiver_resampler.1} parent=11 // pred_check_branch
          %502 = sbr.rel (%p500) target = $region32
        $region31: #{perceiver_resampler.1} parent=11 // pred_region
          _
        $region32: #{perceiver_resampler.1} parent=11 // pred_fallthru
          _
      $region12: #{perceiver_resampler.1} parent=5 // pred_fallthru
        _
      %p503 = scmp.lt.s32.totalorder %s23, 2
      // Predicated region
      $region33: #{perceiver_resampler.1} parent=5 // pred_check
        %p504 = pneg %p503
      $region34: #{perceiver_resampler.1} parent=5 // pred_check_branch
        %506 = sbr.rel (%p504) target = $region36
      $region35: #{perceiver_resampler.1} parent=5 // pred_region
        // Predicated region
        $region37: #{perceiver_resampler.1} parent=35 // pred_check
          %p507 = pneg %p128
        $region38: #{perceiver_resampler.1} parent=35 // pred_check_branch
          %509 = sbr.rel (%p507) target = $region40
        $region39: #{perceiver_resampler.1} parent=35 // pred_region
          %p510 = scmp.lt.s32.totalorder %s31, 1
          %s511 = scalar_select %p510, %s31, 1
          %s512 = scalar_lea.vmem %s3, %s511
        $region40: #{perceiver_resampler.1} parent=35 // pred_fallthru
          _
        // Predicated region
        $region41: #{perceiver_resampler.1} parent=35 // pred_check
          %p513 = pneg %p154
        $region42: #{perceiver_resampler.1} parent=35 // pred_check_branch
          %515 = sbr.rel (%p513) target = $region44
        $region43: #{perceiver_resampler.1} parent=35 // pred_region
          %p516 = scmp.lt.s32.totalorder %s31, 1
          %s517 = scalar_select %p516, %s31, 1
          %s518 = scalar_lea.vmem %s4, %s517
        $region44: #{perceiver_resampler.1} parent=35 // pred_fallthru
          _
        // Predicated region
        $region45: #{perceiver_resampler.1} parent=35 // pred_check
          %p519 = pneg %p180
        $region46: #{perceiver_resampler.1} parent=35 // pred_check_branch
          %521 = sbr.rel (%p519) target = $region48
        $region47: #{perceiver_resampler.1} parent=35 // pred_region
          %p522 = scmp.lt.s32.totalorder %s31, 1
          %s523 = scalar_select %p522, %s31, 1
          %s524 = scalar_lea.vmem %s5, %s523
        $region48: #{perceiver_resampler.1} parent=35 // pred_fallthru
          _
        // Predicated region
        $region49: #{perceiver_resampler.1} parent=35 // pred_check
          %p525 = pneg %p206
        $region50: #{perceiver_resampler.1} parent=35 // pred_check_branch
          %527 = sbr.rel (%p525) target = $region52
        $region51: #{perceiver_resampler.1} parent=35 // pred_region
          %p528 = scmp.lt.s32.totalorder %s31, 1
          %s529 = scalar_select %p528, %s31, 1
          %s530 = scalar_lea.vmem %s6, %s529
        $region52: #{perceiver_resampler.1} parent=35 // pred_fallthru
          _
        // Predicated region
        $region53: #{perceiver_resampler.1} parent=35 // pred_check
          %p531 = pneg %p232
        $region54: #{perceiver_resampler.1} parent=35 // pred_check_branch
          %533 = sbr.rel (%p531) target = $region56
        $region55: #{perceiver_resampler.1} parent=35 // pred_region
          %p534 = scmp.lt.s32.totalorder %s31, 1
          %s535 = scalar_select %p534, %s31, 1
          %s536 = smul.addr %s535, 4
          %s537 = smul.addr %s536, 8
          %s538 = scalar_lea.vmem %s7, %s537
        $region56: #{perceiver_resampler.1} parent=35 // pred_fallthru
          _
        // Predicated region
        $region57: #{perceiver_resampler.1} parent=35 // pred_check
          %p539 = pneg %p258
        $region58: #{perceiver_resampler.1} parent=35 // pred_check_branch
          %541 = sbr.rel (%p539) target = $region60
        $region59: #{perceiver_resampler.1} parent=35 // pred_region
          %p542 = scmp.lt.s32.totalorder %s31, 1
          %s543 = scalar_select %p542, %s31, 1
          %s544 = smul.addr %s543, 4
          %s545 = smul.addr %s544, 8
          %s546 = scalar_lea.vmem %s8, %s545
        $region60: #{perceiver_resampler.1} parent=35 // pred_fallthru
          _
        // Predicated region
        $region61: #{perceiver_resampler.1} parent=35 // pred_check
          %p547 = pneg %p284
        $region62: #{perceiver_resampler.1} parent=35 // pred_check_branch
          %549 = sbr.rel (%p547) target = $region64
        $region63: #{perceiver_resampler.1} parent=35 // pred_region
          %p550 = scmp.lt.s32.totalorder %s31, 1
          %s551 = scalar_select %p550, %s31, 1
          %s552 = smul.addr %s551, 4
          %s553 = smul.addr %s552, 8
          %s554 = scalar_lea.vmem %s9, %s553
        $region64: #{perceiver_resampler.1} parent=35 // pred_fallthru
          _
        // Predicated region
        $region65: #{perceiver_resampler.1} parent=35 // pred_check
          %p555 = pneg %p310
        $region66: #{perceiver_resampler.1} parent=35 // pred_check_branch
          %557 = sbr.rel (%p555) target = $region68
        $region67: #{perceiver_resampler.1} parent=35 // pred_region
          %p558 = scmp.lt.s32.totalorder %s31, 1
          %s559 = scalar_select %p558, %s31, 1
          %s560 = scalar_lea.vmem %s10, %s559
        $region68: #{perceiver_resampler.1} parent=35 // pred_fallthru
          _
        // Predicated region
        $region69: #{perceiver_resampler.1} parent=35 // pred_check
          %p561 = pneg %p336
        $region70: #{perceiver_resampler.1} parent=35 // pred_check_branch
          %563 = sbr.rel (%p561) target = $region72
        $region71: #{perceiver_resampler.1} parent=35 // pred_region
          %p564 = scmp.lt.s32.totalorder %s31, 1
          %s565 = scalar_select %p564, %s31, 1
          %s566 = scalar_lea.vmem %s11, %s565
        $region72: #{perceiver_resampler.1} parent=35 // pred_fallthru
          _
        // Predicated region
        $region73: #{perceiver_resampler.1} parent=35 // pred_check
          %p567 = pneg %p362
        $region74: #{perceiver_resampler.1} parent=35 // pred_check_branch
          %569 = sbr.rel (%p567) target = $region76
        $region75: #{perceiver_resampler.1} parent=35 // pred_region
          %p570 = scmp.lt.s32.totalorder %s31, 1
          %s571 = scalar_select %p570, %s31, 1
          %s572 = smul.addr %s571, 4
          %s573 = smul.addr %s572, 8
          %s574 = scalar_lea.vmem %s12, %s573
        $region76: #{perceiver_resampler.1} parent=35 // pred_fallthru
          _
        // Predicated region
        $region77: #{perceiver_resampler.1} parent=35 // pred_check
          %p575 = pneg %p388
        $region78: #{perceiver_resampler.1} parent=35 // pred_check_branch
          %577 = sbr.rel (%p575) target = $region80
        $region79: #{perceiver_resampler.1} parent=35 // pred_region
          %p578 = scmp.lt.s32.totalorder %s31, 1
          %s579 = scalar_select %p578, %s31, 1
          %s580 = smul.addr %s579, 16
          %s581 = smul.addr %s580, 8
          %s582 = scalar_lea.vmem %s13, %s581
        $region80: #{perceiver_resampler.1} parent=35 // pred_fallthru
          _
      $region36: #{perceiver_resampler.1} parent=5 // pred_fallthru
        _
      %p583 = scmp.le.s32.totalorder 1, %s23
      %p584 = scmp.lt.s32.totalorder %s23, 3
      %p585 = pnand %p583, %p584
      %p586 = pneg %p585
      // Predicated region
      $region81: #{perceiver_resampler.1} parent=5 // pred_check
        _
      $region82: #{perceiver_resampler.1} parent=5 // pred_check_branch
        %588 = sbr.rel (%p585) target = $region84
      $region83: #{perceiver_resampler.1} parent=5 // pred_region
        %s589 = ssub.s32 %s23, 1
        %s590 = smul.u32 4, %s32
        %p591 = scmp.lt.s32.totalorder %s590, 3
        %s592 = scalar_select %p591, %s590, 3
        %s593 = smul.addr %s592, 8
        %s594 = scalar_lea.vmem %s0, %s593
        %p595 = pneg %p61
        %p596 = pneg %p58
        %s597 = smul.u32 4, %s32
        %p598 = scmp.lt.s32.totalorder %s597, 3
        %s599 = scalar_select %p598, %s597, 3
        %s600 = scalar_lea.vmem %s1, %s599
        %p601 = pneg %p87
        %p602 = pneg %p84
        %p603 = pneg %p108
        %p604 = pneg %p105
        %p605 = scmp.lt.s32.totalorder %s33, 1
        %s606 = scalar_select %p605, %s33, 1
        %s607 = scalar_lea.vmem %s3, %s606
        %p608 = pneg %p134
        %p609 = pneg %p131
        %p610 = scmp.lt.s32.totalorder %s33, 1
        %s611 = scalar_select %p610, %s33, 1
        %s612 = scalar_lea.vmem %s4, %s611
        %p613 = pneg %p160
        %p614 = pneg %p157
        %p615 = scmp.lt.s32.totalorder %s33, 1
        %s616 = scalar_select %p615, %s33, 1
        %s617 = scalar_lea.vmem %s5, %s616
        %p618 = pneg %p186
        %p619 = pneg %p183
        %p620 = scmp.lt.s32.totalorder %s33, 1
        %s621 = scalar_select %p620, %s33, 1
        %s622 = scalar_lea.vmem %s6, %s621
        %p623 = pneg %p212
        %p624 = pneg %p209
        %p625 = scmp.lt.s32.totalorder %s33, 1
        %s626 = scalar_select %p625, %s33, 1
        %s627 = smul.addr %s626, 4
        %s628 = smul.addr %s627, 8
        %s629 = scalar_lea.vmem %s7, %s628
        %p630 = pneg %p238
        %p631 = pneg %p235
        %p632 = scmp.lt.s32.totalorder %s33, 1
        %s633 = scalar_select %p632, %s33, 1
        %s634 = smul.addr %s633, 4
        %s635 = smul.addr %s634, 8
        %s636 = scalar_lea.vmem %s8, %s635
        %p637 = pneg %p264
        %p638 = pneg %p261
        %p639 = scmp.lt.s32.totalorder %s33, 1
        %s640 = scalar_select %p639, %s33, 1
        %s641 = smul.addr %s640, 4
        %s642 = smul.addr %s641, 8
        %s643 = scalar_lea.vmem %s9, %s642
        %p644 = pneg %p290
        %p645 = pneg %p287
        %p646 = scmp.lt.s32.totalorder %s33, 1
        %s647 = scalar_select %p646, %s33, 1
        %s648 = scalar_lea.vmem %s10, %s647
        %p649 = pneg %p316
        %p650 = pneg %p313
        %p651 = scmp.lt.s32.totalorder %s33, 1
        %s652 = scalar_select %p651, %s33, 1
        %s653 = scalar_lea.vmem %s11, %s652
        %p654 = pneg %p342
        %p655 = pneg %p339
        %p656 = scmp.lt.s32.totalorder %s33, 1
        %s657 = scalar_select %p656, %s33, 1
        %s658 = smul.addr %s657, 4
        %s659 = smul.addr %s658, 8
        %s660 = scalar_lea.vmem %s12, %s659
        %p661 = pneg %p368
        %p662 = pneg %p365
        %p663 = scmp.lt.s32.totalorder %s33, 1
        %s664 = scalar_select %p663, %s33, 1
        %s665 = smul.addr %s664, 16
        %s666 = smul.addr %s665, 8
        %s667 = scalar_lea.vmem %s13, %s666
        %p668 = pneg %p394
        %p669 = pneg %p391
        %p670 = pneg %p415
        %p671 = pneg %p412
        %p672 = pneg %p436
        %p673 = pneg %p433
        %p674 = pneg %p462
        %p675 = pneg %p459
        %s676 = smul.u32 4, %s32
        %p677 = scmp.lt.s32.totalorder %s676, 3
        %s678 = scalar_select %p677, %s676, 3
        %s679 = smul.addr %s678, 8
        %s680 = scalar_lea.vmem %s0, %s679
        %s681 = smul.u32 4, %s32
        %s682 = smul.u32 4, %s32
        %p683 = scmp.lt.s32.totalorder %s682, 3
        %s684 = scalar_select %p683, %s682, 3
        %s685 = scalar_lea.vmem %s1, %s684
        %s686 = smul.u32 4, %s32
        %p687 = scmp.lt.s32.totalorder %s33, 1
        %s688 = scalar_select %p687, %s33, 1
        %s689 = scalar_lea.vmem %s3, %s688
        %p690 = scmp.lt.s32.totalorder %s33, 1
        %s691 = scalar_select %p690, %s33, 1
        %s692 = scalar_lea.vmem %s4, %s691
        %p693 = scmp.lt.s32.totalorder %s33, 1
        %s694 = scalar_select %p693, %s33, 1
        %s695 = scalar_lea.vmem %s5, %s694
        %p696 = scmp.lt.s32.totalorder %s33, 1
        %s697 = scalar_select %p696, %s33, 1
        %s698 = scalar_lea.vmem %s6, %s697
        %p699 = scmp.lt.s32.totalorder %s33, 1
        %s700 = scalar_select %p699, %s33, 1
        %s701 = smul.addr %s700, 4
        %s702 = smul.addr %s701, 8
        %s703 = scalar_lea.vmem %s7, %s702
        %p704 = scmp.lt.s32.totalorder %s33, 1
        %s705 = scalar_select %p704, %s33, 1
        %s706 = smul.addr %s705, 4
        %s707 = smul.addr %s706, 8
        %s708 = scalar_lea.vmem %s8, %s707
        %p709 = scmp.lt.s32.totalorder %s33, 1
        %s710 = scalar_select %p709, %s33, 1
        %s711 = smul.addr %s710, 4
        %s712 = smul.addr %s711, 8
        %s713 = scalar_lea.vmem %s9, %s712
        %p714 = scmp.lt.s32.totalorder %s33, 1
        %s715 = scalar_select %p714, %s33, 1
        %s716 = scalar_lea.vmem %s10, %s715
        %p717 = scmp.lt.s32.totalorder %s33, 1
        %s718 = scalar_select %p717, %s33, 1
        %s719 = scalar_lea.vmem %s11, %s718
        %p720 = scmp.lt.s32.totalorder %s33, 1
        %s721 = scalar_select %p720, %s33, 1
        %s722 = smul.addr %s721, 4
        %s723 = smul.addr %s722, 8
        %s724 = scalar_lea.vmem %s12, %s723
        %p725 = scmp.lt.s32.totalorder %s33, 1
        %s726 = scalar_select %p725, %s33, 1
        %s727 = smul.addr %s726, 16
        %s728 = smul.addr %s727, 8
        %s729 = scalar_lea.vmem %s13, %s728
        %s730 = smul.u32 4, %s32
        %p731 = scmp.eq.s32.totalorder %s33, 0
        // Predicated region
        $region85: #{perceiver_resampler.1} parent=83 // pred_check
          %p732 = pneg %p731
        $region86: #{perceiver_resampler.1} parent=83 // pred_check_branch
          %734 = sbr.rel (%p732) target = $region88
        $region87: #{perceiver_resampler.1} parent=83 // pred_region
          %v735 = vld [vmem:[%s2] sm:$0xff]
          %vm736 = vcmask 261120
          %737 = vst.msk [vmem:[#allocation2] sm:$0xff] %vm736, %v735
          %738 = vst.msk [vmem:[#allocation2 + $0x8] sm:$0xff] %vm736, %v735
          %739 = vst.msk [vmem:[#allocation2 + $0x10] sm:$0xff] %vm736, %v735
          %740 = vst.msk [vmem:[#allocation2 + $0x18] sm:$0xff] %vm736, %v735
          %v741 = vld [vmem:[%s680] sm:$0xff]
          %v742 = vld [vmem:[%s680 + $0x8] sm:$0xff]
          %v743 = vld [vmem:[%s680 + $0x10] sm:$0xff]
          %v744 = vld [vmem:[%s680 + $0x18] sm:$0xff]
          %v745 = vld [vmem:[%s685] sm:$0x1]
          %v746 = vld [vmem:[%s685 + $0x1] sm:$0x1]
          %v747 = vld [vmem:[%s685 + $0x2] sm:$0x1]
          %v748 = vld [vmem:[%s685 + $0x3] sm:$0x1]
          %v753 = vperm.slane %v745, 0
          %v754 = vperm.slane %v746, 0
          %v755 = vperm.slane %v747, 0
          %v756 = vperm.slane %v748, 0
          %v761 = vadd.f32 %v741, %v753
          %v762 = vadd.f32 %v742, %v754
          %v763 = vadd.f32 %v743, %v755
          %v764 = vadd.f32 %v744, %v756
          %765 = vst.msk [vmem:[#allocation3] sm:$0xff] %vm736, %v761
          %766 = vst.msk [vmem:[#allocation3 + $0x8] sm:$0xff] %vm736, %v762
          %767 = vst.msk [vmem:[#allocation3 + $0x10] sm:$0xff] %vm736, %v763
          %768 = vst.msk [vmem:[#allocation3 + $0x18] sm:$0xff] %vm736, %v764
        $region88: #{perceiver_resampler.1} parent=83 // pred_fallthru
          _
        %v769 = vld [vmem:[#allocation2] sm:$0xff]
        %v770 = vld [vmem:[#allocation2 + $0x8] sm:$0xff]
        %v771 = vld [vmem:[#allocation2 + $0x10] sm:$0xff]
        %v772 = vld [vmem:[#allocation2 + $0x18] sm:$0xff]
        %v773 = vld [vmem:[#allocation3] sm:$0xff]
        %v774 = vld [vmem:[#allocation3 + $0x8] sm:$0xff]
        %v775 = vld [vmem:[#allocation3 + $0x10] sm:$0xff]
        %v776 = vld [vmem:[#allocation3 + $0x18] sm:$0xff]
        %v777 = vld [vmem:[%s689] sm:$0x1]
        %v778 = vld [vmem:[%s692] sm:$0x1]
        %vm779 = vcmask 261120
        %v780 = vsel %vm779, %v773, 0.0
        %781 = vadd.xlane.f32.xlu0 %v780
        %v782 = vpop.xlane.xlu0 %781
        %v783 = vsel %vm779, %v774, 0.0
        %784 = vadd.xlane.f32.xlu0 %v783
        %v785 = vpop.xlane.xlu0 %784
        %v786 = vsel %vm779, %v775, 0.0
        %787 = vadd.xlane.f32.xlu0 %v786
        %v788 = vpop.xlane.xlu0 %787
        %v789 = vsel %vm779, %v776, 0.0
        %790 = vadd.xlane.f32.xlu0 %v789
        %v791 = vpop.xlane.xlu0 %790
        %v792 = vrcp.pop 32.0
        %v793 = vmul.f32 32.0, %v792
        %v794 = vsub.f32 1.0, %v793
        %v795 = vmul.f32 %v792, %v794
        %v796 = vadd.f32 %v792, %v795
        %vm797 = vweird.f32 %v792
        %v798 = vsel %vm797, %v792, %v796
        %v799 = vmul.f32 %v782, %v798
        %v800 = vmul.f32 %v785, %v798
        %v801 = vmul.f32 %v788, %v798
        %v802 = vmul.f32 %v791, %v798
        %v803 = vsub.f32 %v773, %v799
        %v804 = vsub.f32 %v774, %v800
        %v805 = vsub.f32 %v775, %v801
        %v806 = vsub.f32 %v776, %v802
        %v807 = vmul.f32 %v803, %v803
        %v808 = vmul.f32 %v804, %v804
        %v809 = vmul.f32 %v805, %v805
        %v810 = vmul.f32 %v806, %v806
        %v811 = vsel %vm779, %v807, 0.0
        %812 = vadd.xlane.f32.xlu0 %v811
        %v813 = vpop.xlane.xlu0 %812
        %v814 = vsel %vm779, %v808, 0.0
        %815 = vadd.xlane.f32.xlu0 %v814
        %v816 = vpop.xlane.xlu0 %815
        %v817 = vsel %vm779, %v809, 0.0
        %818 = vadd.xlane.f32.xlu0 %v817
        %v819 = vpop.xlane.xlu0 %818
        %v820 = vsel %vm779, %v810, 0.0
        %821 = vadd.xlane.f32.xlu0 %v820
        %v822 = vpop.xlane.xlu0 %821
        %v823 = vmul.f32 %v813, %v798
        %v824 = vmul.f32 %v816, %v798
        %v825 = vmul.f32 %v819, %v798
        %v826 = vmul.f32 %v822, %v798
        %v827 = vadd.f32 %v823, 1e-05
        %v828 = vadd.f32 %v824, 1e-05
        %v829 = vadd.f32 %v825, 1e-05
        %v830 = vadd.f32 %v826, 1e-05
        %v831 = vrsqrt.pop %v827
        %v832 = vmul.f32 %v831, %v827
        %v833 = vmul.f32 %v832, %v831
        %v834 = vmul.f32 0.5, %v833
        %v835 = vsub.f32 1.5, %v834
        %v836 = vmul.f32 %v831, %v835
        %vm837 = vweird.f32 %v827
        %vm838 = vweird.f32 %v831
        %vm839 = vmor %vm837, %vm838
        %v840 = vsel %vm839, %v831, %v836
        %v841 = vrsqrt.pop %v828
        %v842 = vmul.f32 %v841, %v828
        %v843 = vmul.f32 %v842, %v841
        %v844 = vmul.f32 0.5, %v843
        %v845 = vsub.f32 1.5, %v844
        %v846 = vmul.f32 %v841, %v845
        %vm847 = vweird.f32 %v828
        %vm848 = vweird.f32 %v841
        %vm849 = vmor %vm847, %vm848
        %v850 = vsel %vm849, %v841, %v846
        %v851 = vrsqrt.pop %v829
        %v852 = vmul.f32 %v851, %v829
        %v853 = vmul.f32 %v852, %v851
        %v854 = vmul.f32 0.5, %v853
        %v855 = vsub.f32 1.5, %v854
        %v856 = vmul.f32 %v851, %v855
        %vm857 = vweird.f32 %v829
        %vm858 = vweird.f32 %v851
        %vm859 = vmor %vm857, %vm858
        %v860 = vsel %vm859, %v851, %v856
        %v861 = vrsqrt.pop %v830
        %v862 = vmul.f32 %v861, %v830
        %v863 = vmul.f32 %v862, %v861
        %v864 = vmul.f32 0.5, %v863
        %v865 = vsub.f32 1.5, %v864
        %v866 = vmul.f32 %v861, %v865
        %vm867 = vweird.f32 %v830
        %vm868 = vweird.f32 %v861
        %vm869 = vmor %vm867, %vm868
        %v870 = vsel %vm869, %v861, %v866
        %v871 = vmul.f32 %v803, %v840
        %v872 = vmul.f32 %v804, %v850
        %v873 = vmul.f32 %v805, %v860
        %v874 = vmul.f32 %v806, %v870
        %v876 = vperm.slane %v777, 0
        %v878 = vmul.f32 %v871, %v876
        %v879 = vmul.f32 %v872, %v876
        %v880 = vmul.f32 %v873, %v876
        %v881 = vmul.f32 %v874, %v876
        %v883 = vperm.slane %v778, 0
        %v885 = vadd.f32 %v878, %v883
        %v886 = vadd.f32 %v879, %v883
        %v887 = vadd.f32 %v880, %v883
        %v888 = vadd.f32 %v881, %v883
        %v889 = vld [vmem:[%s695] sm:$0x1]
        %v890 = vld [vmem:[%s698] sm:$0x1]
        %v891 = vsel %vm779, %v769, 0.0
        %892 = vadd.xlane.f32.xlu0 %v891
        %v893 = vpop.xlane.xlu0 %892
        %v894 = vsel %vm779, %v770, 0.0
        %895 = vadd.xlane.f32.xlu0 %v894
        %v896 = vpop.xlane.xlu0 %895
        %v897 = vsel %vm779, %v771, 0.0
        %898 = vadd.xlane.f32.xlu0 %v897
        %v899 = vpop.xlane.xlu0 %898
        %v900 = vsel %vm779, %v772, 0.0
        %901 = vadd.xlane.f32.xlu0 %v900
        %v902 = vpop.xlane.xlu0 %901
        %v903 = vmul.f32 %v893, %v798
        %v904 = vmul.f32 %v896, %v798
        %v905 = vmul.f32 %v899, %v798
        %v906 = vmul.f32 %v902, %v798
        %v907 = vsub.f32 %v769, %v903
        %v908 = vsub.f32 %v770, %v904
        %v909 = vsub.f32 %v771, %v905
        %v910 = vsub.f32 %v772, %v906
        %v911 = vmul.f32 %v907, %v907
        %v912 = vmul.f32 %v908, %v908
        %v913 = vmul.f32 %v909, %v909
        %v914 = vmul.f32 %v910, %v910
        %v915 = vsel %vm779, %v911, 0.0
        %916 = vadd.xlane.f32.xlu0 %v915
        %v917 = vpop.xlane.xlu0 %916
        %v918 = vsel %vm779, %v912, 0.0
        %919 = vadd.xlane.f32.xlu0 %v918
        %v920 = vpop.xlane.xlu0 %919
        %v921 = vsel %vm779, %v913, 0.0
        %922 = vadd.xlane.f32.xlu0 %v921
        %v923 = vpop.xlane.xlu0 %922
        %v924 = vsel %vm779, %v914, 0.0
        %925 = vadd.xlane.f32.xlu0 %v924
        %v926 = vpop.xlane.xlu0 %925
        %v927 = vmul.f32 %v917, %v798
        %v928 = vmul.f32 %v920, %v798
        %v929 = vmul.f32 %v923, %v798
        %v930 = vmul.f32 %v926, %v798
        %v931 = vadd.f32 %v927, 1e-05
        %v932 = vadd.f32 %v928, 1e-05
        %v933 = vadd.f32 %v929, 1e-05
        %v934 = vadd.f32 %v930, 1e-05
        %v935 = vrsqrt.pop %v931
        %v936 = vmul.f32 %v935, %v931
        %v937 = vmul.f32 %v936, %v935
        %v938 = vmul.f32 0.5, %v937
        %v939 = vsub.f32 1.5, %v938
        %v940 = vmul.f32 %v935, %v939
        %vm941 = vweird.f32 %v931
        %vm942 = vweird.f32 %v935
        %vm943 = vmor %vm941, %vm942
        %v944 = vsel %vm943, %v935, %v940
        %v945 = vrsqrt.pop %v932
        %v946 = vmul.f32 %v945, %v932
        %v947 = vmul.f32 %v946, %v945
        %v948 = vmul.f32 0.5, %v947
        %v949 = vsub.f32 1.5, %v948
        %v950 = vmul.f32 %v945, %v949
        %vm951 = vweird.f32 %v932
        %vm952 = vweird.f32 %v945
        %vm953 = vmor %vm951, %vm952
        %v954 = vsel %vm953, %v945, %v950
        %v955 = vrsqrt.pop %v933
        %v956 = vmul.f32 %v955, %v933
        %v957 = vmul.f32 %v956, %v955
        %v958 = vmul.f32 0.5, %v957
        %v959 = vsub.f32 1.5, %v958
        %v960 = vmul.f32 %v955, %v959
        %vm961 = vweird.f32 %v933
        %vm962 = vweird.f32 %v955
        %vm963 = vmor %vm961, %vm962
        %v964 = vsel %vm963, %v955, %v960
        %v965 = vrsqrt.pop %v934
        %v966 = vmul.f32 %v965, %v934
        %v967 = vmul.f32 %v966, %v965
        %v968 = vmul.f32 0.5, %v967
        %v969 = vsub.f32 1.5, %v968
        %v970 = vmul.f32 %v965, %v969
        %vm971 = vweird.f32 %v934
        %vm972 = vweird.f32 %v965
        %vm973 = vmor %vm971, %vm972
        %v974 = vsel %vm973, %v965, %v970
        %v975 = vmul.f32 %v907, %v944
        %v976 = vmul.f32 %v908, %v954
        %v977 = vmul.f32 %v909, %v964
        %v978 = vmul.f32 %v910, %v974
        %v980 = vperm.slane %v889, 0
        %v982 = vmul.f32 %v975, %v980
        %v983 = vmul.f32 %v976, %v980
        %v984 = vmul.f32 %v977, %v980
        %v985 = vmul.f32 %v978, %v980
        %v987 = vperm.slane %v890, 0
        %v989 = vadd.f32 %v982, %v987
        %v990 = vadd.f32 %v983, %v987
        %v991 = vadd.f32 %v984, %v987
        %v992 = vadd.f32 %v985, %v987
        %v993 = vld [vmem:[%s703] sm:$0xff]
        %v994 = vld [vmem:[%s703 + $0x8] sm:$0xff]
        %v995 = vld [vmem:[%s703 + $0x10] sm:$0xff]
        %v996 = vld [vmem:[%s703 + $0x18] sm:$0xff]
        %v997 = vld [vmem:[%s708] sm:$0xff]
        %v998 = vld [vmem:[%s708 + $0x8] sm:$0xff]
        %v999 = vld [vmem:[%s708 + $0x10] sm:$0xff]
        %v1000 = vld [vmem:[%s708 + $0x18] sm:$0xff]
        %v1001 = vld [vmem:[%s713] sm:$0xff]
        %v1002 = vld [vmem:[%s713 + $0x8] sm:$0xff]
        %v1003 = vld [vmem:[%s713 + $0x10] sm:$0xff]
        %v1004 = vld [vmem:[%s713 + $0x18] sm:$0xff]
        %v1006 = vsel %vm779, %v989, 0
        %v1009 = vsel %vm779, %v990, 0
        %v1012 = vsel %vm779, %v991, 0
        %v1015 = vsel %vm779, %v992, 0
        %1017 = vmatpush.msra.mxu0 0.0
        %1018 = vmatpush.msra.mxu0 0.0
        %1019 = vmatpush.msra.mxu0 0.0
        %1020 = vmatpush.msra.mxu0 0.0
        %1021 = vmatpush.msra.mxu0 0.0
        %1022 = vmatpush.msra.mxu0 0.0
        %1023 = vmatpush.msra.mxu0 0.0
        %1024 = vmatpush.msra.mxu0 0.0
        %1025 = vmatpush.msra.mxu0 0.0
        %1026 = vmatpush.msra.mxu0 0.0
        %1027 = vmatpush.msra.mxu0 0.0
        %1028 = vmatpush.msra.mxu0 0.0
        %1029 = vmatpush.msra.mxu0 %v996
        %1030 = vmatpush.msra.mxu0 %v995
        %1031 = vmatpush.msra.mxu0 %v994
        %1032 = vmatpush.msra.mxu0 %v993
        %1033 = vmatmul.f32.gmra.mxu0 %v1006
        %v1034 = vpop.f32.mrf.mxu0
        %v1035 = vadd.f32 0.0, %v1034
        %1036 = vmatmul.f32.gmra.mxu0 %v1009
        %v1037 = vpop.f32.mrf.mxu0
        %v1038 = vadd.f32 0.0, %v1037
        %1039 = vmatmul.f32.gmra.mxu0 %v1012
        %v1040 = vpop.f32.mrf.mxu0
        %v1041 = vadd.f32 0.0, %v1040
        %1042 = vmatmul.f32.gmra.mxu0 %v1015
        %v1043 = vpop.f32.mrf.mxu0
        %v1044 = vadd.f32 0.0, %v1043
        %1045 = vdwg.mxu0
        %v1047 = vsel %vm779, %v885, 0
        %v1050 = vsel %vm779, %v886, 0
        %v1053 = vsel %vm779, %v887, 0
        %v1056 = vsel %vm779, %v888, 0
        %1058 = vmatpush.msra.mxu0 0.0
        %1059 = vmatpush.msra.mxu0 0.0
        %1060 = vmatpush.msra.mxu0 0.0
        %1061 = vmatpush.msra.mxu0 0.0
        %1062 = vmatpush.msra.mxu0 0.0
        %1063 = vmatpush.msra.mxu0 0.0
        %1064 = vmatpush.msra.mxu0 0.0
        %1065 = vmatpush.msra.mxu0 0.0
        %1066 = vmatpush.msra.mxu0 0.0
        %1067 = vmatpush.msra.mxu0 0.0
        %1068 = vmatpush.msra.mxu0 0.0
        %1069 = vmatpush.msra.mxu0 0.0
        %1070 = vmatpush.msra.mxu0 %v1000
        %1071 = vmatpush.msra.mxu0 %v999
        %1072 = vmatpush.msra.mxu0 %v998
        %1073 = vmatpush.msra.mxu0 %v997
        %1074 = vmatmul.f32.gmra.mxu0 %v1047
        %v1075 = vpop.f32.mrf.mxu0
        %v1076 = vadd.f32 0.0, %v1075
        %1077 = vmatmul.f32.gmra.mxu0 %v1050
        %v1078 = vpop.f32.mrf.mxu0
        %v1079 = vadd.f32 0.0, %v1078
        %1080 = vmatmul.f32.gmra.mxu0 %v1053
        %v1081 = vpop.f32.mrf.mxu0
        %v1082 = vadd.f32 0.0, %v1081
        %1083 = vmatmul.f32.gmra.mxu0 %v1056
        %v1084 = vpop.f32.mrf.mxu0
        %v1085 = vadd.f32 0.0, %v1084
        %1086 = vdwg.mxu0
        %1087 = vmatpush.msra.mxu0 0.0
        %1088 = vmatpush.msra.mxu0 0.0
        %1089 = vmatpush.msra.mxu0 0.0
        %1090 = vmatpush.msra.mxu0 0.0
        %1091 = vmatpush.msra.mxu0 0.0
        %1092 = vmatpush.msra.mxu0 0.0
        %1093 = vmatpush.msra.mxu0 0.0
        %1094 = vmatpush.msra.mxu0 0.0
        %1095 = vmatpush.msra.mxu0 0.0
        %1096 = vmatpush.msra.mxu0 0.0
        %1097 = vmatpush.msra.mxu0 0.0
        %1098 = vmatpush.msra.mxu0 0.0
        %1099 = vmatpush.msra.mxu0 %v1000
        %1100 = vmatpush.msra.mxu0 %v999
        %1101 = vmatpush.msra.mxu0 %v998
        %1102 = vmatpush.msra.mxu0 %v997
        %1103 = vmatmul.f32.gmra.mxu0 %v1006
        %v1104 = vpop.f32.mrf.mxu0
        %v1105 = vadd.f32 0.0, %v1104
        %1106 = vmatmul.f32.gmra.mxu0 %v1009
        %v1107 = vpop.f32.mrf.mxu0
        %v1108 = vadd.f32 0.0, %v1107
        %1109 = vmatmul.f32.gmra.mxu0 %v1012
        %v1110 = vpop.f32.mrf.mxu0
        %v1111 = vadd.f32 0.0, %v1110
        %1112 = vmatmul.f32.gmra.mxu0 %v1015
        %v1113 = vpop.f32.mrf.mxu0
        %v1114 = vadd.f32 0.0, %v1113
        %1115 = vdwg.mxu0
        %vm1116 = vcmask 64512
        %v1118 = vsel %vm1116, %v1035, 0
        %v1121 = vsel %vm1116, %v1076, 0
        %1123 = vmatpush.xpose.msra.mxu0 0.0
        %1124 = vmatpush.xpose.msra.mxu0 0.0
        %1125 = vmatpush.xpose.msra.mxu0 0.0
        %1126 = vmatpush.xpose.msra.mxu0 0.0
        %1127 = vmatpush.xpose.msra.mxu0 0.0
        %1128 = vmatpush.xpose.msra.mxu0 0.0
        %1129 = vmatpush.xpose.msra.mxu0 0.0
        %1130 = vmatpush.xpose.msra.mxu0 0.0
        %1131 = vmatpush.xpose.msra.mxu0 0.0
        %1132 = vmatpush.xpose.msra.mxu0 0.0
        %1133 = vmatpush.xpose.msra.mxu0 0.0
        %1134 = vmatpush.xpose.msra.mxu0 0.0
        %1135 = vmatpush.xpose.msra.mxu0 0.0
        %1136 = vmatpush.xpose.msra.mxu0 0.0
        %1137 = vmatpush.xpose.msra.mxu0 0.0
        %1138 = vmatpush.xpose.msra.mxu0 %v1121
        %1139 = vmatmul.f32.gmra.mxu0 %v1118
        %v1140 = vpop.f32.mrf.mxu0
        %v1141 = vadd.f32 0.0, %v1140
        %1142 = vdwg.mxu0
        %v1144 = vsel %vm1116, %v1038, 0
        %v1147 = vsel %vm1116, %v1079, 0
        %1149 = vmatpush.xpose.msra.mxu0 0.0
        %1150 = vmatpush.xpose.msra.mxu0 0.0
        %1151 = vmatpush.xpose.msra.mxu0 0.0
        %1152 = vmatpush.xpose.msra.mxu0 0.0
        %1153 = vmatpush.xpose.msra.mxu0 0.0
        %1154 = vmatpush.xpose.msra.mxu0 0.0
        %1155 = vmatpush.xpose.msra.mxu0 0.0
        %1156 = vmatpush.xpose.msra.mxu0 0.0
        %1157 = vmatpush.xpose.msra.mxu0 0.0
        %1158 = vmatpush.xpose.msra.mxu0 0.0
        %1159 = vmatpush.xpose.msra.mxu0 0.0
        %1160 = vmatpush.xpose.msra.mxu0 0.0
        %1161 = vmatpush.xpose.msra.mxu0 0.0
        %1162 = vmatpush.xpose.msra.mxu0 0.0
        %1163 = vmatpush.xpose.msra.mxu0 0.0
        %1164 = vmatpush.xpose.msra.mxu0 %v1147
        %1165 = vmatmul.f32.gmra.mxu0 %v1144
        %v1166 = vpop.f32.mrf.mxu0
        %v1167 = vadd.f32 0.0, %v1166
        %1168 = vdwg.mxu0
        %v1170 = vsel %vm1116, %v1041, 0
        %v1173 = vsel %vm1116, %v1082, 0
        %1175 = vmatpush.xpose.msra.mxu0 0.0
        %1176 = vmatpush.xpose.msra.mxu0 0.0
        %1177 = vmatpush.xpose.msra.mxu0 0.0
        %1178 = vmatpush.xpose.msra.mxu0 0.0
        %1179 = vmatpush.xpose.msra.mxu0 0.0
        %1180 = vmatpush.xpose.msra.mxu0 0.0
        %1181 = vmatpush.xpose.msra.mxu0 0.0
        %1182 = vmatpush.xpose.msra.mxu0 0.0
        %1183 = vmatpush.xpose.msra.mxu0 0.0
        %1184 = vmatpush.xpose.msra.mxu0 0.0
        %1185 = vmatpush.xpose.msra.mxu0 0.0
        %1186 = vmatpush.xpose.msra.mxu0 0.0
        %1187 = vmatpush.xpose.msra.mxu0 0.0
        %1188 = vmatpush.xpose.msra.mxu0 0.0
        %1189 = vmatpush.xpose.msra.mxu0 0.0
        %1190 = vmatpush.xpose.msra.mxu0 %v1173
        %1191 = vmatmul.f32.gmra.mxu0 %v1170
        %v1192 = vpop.f32.mrf.mxu0
        %v1193 = vadd.f32 0.0, %v1192
        %1194 = vdwg.mxu0
        %v1196 = vsel %vm1116, %v1044, 0
        %v1199 = vsel %vm1116, %v1085, 0
        %1201 = vmatpush.xpose.msra.mxu0 0.0
        %1202 = vmatpush.xpose.msra.mxu0 0.0
        %1203 = vmatpush.xpose.msra.mxu0 0.0
        %1204 = vmatpush.xpose.msra.mxu0 0.0
        %1205 = vmatpush.xpose.msra.mxu0 0.0
        %1206 = vmatpush.xpose.msra.mxu0 0.0
        %1207 = vmatpush.xpose.msra.mxu0 0.0
        %1208 = vmatpush.xpose.msra.mxu0 0.0
        %1209 = vmatpush.xpose.msra.mxu0 0.0
        %1210 = vmatpush.xpose.msra.mxu0 0.0
        %1211 = vmatpush.xpose.msra.mxu0 0.0
        %1212 = vmatpush.xpose.msra.mxu0 0.0
        %1213 = vmatpush.xpose.msra.mxu0 0.0
        %1214 = vmatpush.xpose.msra.mxu0 0.0
        %1215 = vmatpush.xpose.msra.mxu0 0.0
        %1216 = vmatpush.xpose.msra.mxu0 %v1199
        %1217 = vmatmul.f32.gmra.mxu0 %v1196
        %v1218 = vpop.f32.mrf.mxu0
        %v1219 = vadd.f32 0.0, %v1218
        %1220 = vdwg.mxu0
        %v1222 = vsel %vm1116, %v1105, 0
        %1224 = vmatpush.xpose.msra.mxu0 0.0
        %1225 = vmatpush.xpose.msra.mxu0 0.0
        %1226 = vmatpush.xpose.msra.mxu0 0.0
        %1227 = vmatpush.xpose.msra.mxu0 0.0
        %1228 = vmatpush.xpose.msra.mxu0 0.0
        %1229 = vmatpush.xpose.msra.mxu0 0.0
        %1230 = vmatpush.xpose.msra.mxu0 0.0
        %1231 = vmatpush.xpose.msra.mxu0 0.0
        %1232 = vmatpush.xpose.msra.mxu0 0.0
        %1233 = vmatpush.xpose.msra.mxu0 0.0
        %1234 = vmatpush.xpose.msra.mxu0 0.0
        %1235 = vmatpush.xpose.msra.mxu0 0.0
        %1236 = vmatpush.xpose.msra.mxu0 0.0
        %1237 = vmatpush.xpose.msra.mxu0 0.0
        %1238 = vmatpush.xpose.msra.mxu0 0.0
        %1239 = vmatpush.xpose.msra.mxu0 %v1222
        %1240 = vmatmul.f32.gmra.mxu0 %v1118
        %v1241 = vpop.f32.mrf.mxu0
        %v1242 = vadd.f32 0.0, %v1241
        %1243 = vdwg.mxu0
        %v1245 = vsel %vm1116, %v1108, 0
        %1247 = vmatpush.xpose.msra.mxu0 0.0
        %1248 = vmatpush.xpose.msra.mxu0 0.0
        %1249 = vmatpush.xpose.msra.mxu0 0.0
        %1250 = vmatpush.xpose.msra.mxu0 0.0
        %1251 = vmatpush.xpose.msra.mxu0 0.0
        %1252 = vmatpush.xpose.msra.mxu0 0.0
        %1253 = vmatpush.xpose.msra.mxu0 0.0
        %1254 = vmatpush.xpose.msra.mxu0 0.0
        %1255 = vmatpush.xpose.msra.mxu0 0.0
        %1256 = vmatpush.xpose.msra.mxu0 0.0
        %1257 = vmatpush.xpose.msra.mxu0 0.0
        %1258 = vmatpush.xpose.msra.mxu0 0.0
        %1259 = vmatpush.xpose.msra.mxu0 0.0
        %1260 = vmatpush.xpose.msra.mxu0 0.0
        %1261 = vmatpush.xpose.msra.mxu0 0.0
        %1262 = vmatpush.xpose.msra.mxu0 %v1245
        %1263 = vmatmul.f32.gmra.mxu0 %v1144
        %v1264 = vpop.f32.mrf.mxu0
        %v1265 = vadd.f32 0.0, %v1264
        %1266 = vdwg.mxu0
        %v1268 = vsel %vm1116, %v1111, 0
        %1270 = vmatpush.xpose.msra.mxu0 0.0
        %1271 = vmatpush.xpose.msra.mxu0 0.0
        %1272 = vmatpush.xpose.msra.mxu0 0.0
        %1273 = vmatpush.xpose.msra.mxu0 0.0
        %1274 = vmatpush.xpose.msra.mxu0 0.0
        %1275 = vmatpush.xpose.msra.mxu0 0.0
        %1276 = vmatpush.xpose.msra.mxu0 0.0
        %1277 = vmatpush.xpose.msra.mxu0 0.0
        %1278 = vmatpush.xpose.msra.mxu0 0.0
        %1279 = vmatpush.xpose.msra.mxu0 0.0
        %1280 = vmatpush.xpose.msra.mxu0 0.0
        %1281 = vmatpush.xpose.msra.mxu0 0.0
        %1282 = vmatpush.xpose.msra.mxu0 0.0
        %1283 = vmatpush.xpose.msra.mxu0 0.0
        %1284 = vmatpush.xpose.msra.mxu0 0.0
        %1285 = vmatpush.xpose.msra.mxu0 %v1268
        %1286 = vmatmul.f32.gmra.mxu0 %v1170
        %v1287 = vpop.f32.mrf.mxu0
        %v1288 = vadd.f32 0.0, %v1287
        %1289 = vdwg.mxu0
        %v1291 = vsel %vm1116, %v1114, 0
        %1293 = vmatpush.xpose.msra.mxu0 0.0
        %1294 = vmatpush.xpose.msra.mxu0 0.0
        %1295 = vmatpush.xpose.msra.mxu0 0.0
        %1296 = vmatpush.xpose.msra.mxu0 0.0
        %1297 = vmatpush.xpose.msra.mxu0 0.0
        %1298 = vmatpush.xpose.msra.mxu0 0.0
        %1299 = vmatpush.xpose.msra.mxu0 0.0
        %1300 = vmatpush.xpose.msra.mxu0 0.0
        %1301 = vmatpush.xpose.msra.mxu0 0.0
        %1302 = vmatpush.xpose.msra.mxu0 0.0
        %1303 = vmatpush.xpose.msra.mxu0 0.0
        %1304 = vmatpush.xpose.msra.mxu0 0.0
        %1305 = vmatpush.xpose.msra.mxu0 0.0
        %1306 = vmatpush.xpose.msra.mxu0 0.0
        %1307 = vmatpush.xpose.msra.mxu0 0.0
        %1308 = vmatpush.xpose.msra.mxu0 %v1291
        %1309 = vmatmul.f32.gmra.mxu0 %v1196
        %v1310 = vpop.f32.mrf.mxu0
        %v1311 = vadd.f32 0.0, %v1310
        %1312 = vdwg.mxu0
        %v1313 = vsel %vm1116, %v1141, -inf
        %1314 = vmax.xlane.f32.xlu0 %v1313
        %v1315 = vpop.xlane.xlu0 %1314
        %v1316 = vsel %vm1116, %v1167, -inf
        %1317 = vmax.xlane.f32.xlu0 %v1316
        %v1318 = vpop.xlane.xlu0 %1317
        %v1319 = vsel %vm1116, %v1193, -inf
        %1320 = vmax.xlane.f32.xlu0 %v1319
        %v1321 = vpop.xlane.xlu0 %1320
        %v1322 = vsel %vm1116, %v1219, -inf
        %1323 = vmax.xlane.f32.xlu0 %v1322
        %v1324 = vpop.xlane.xlu0 %1323
        %v1325 = vsel %vm1116, %v1242, -inf
        %1326 = vmax.xlane.f32.xlu0 %v1325
        %v1327 = vpop.xlane.xlu0 %1326
        %v1328 = vsel %vm1116, %v1265, -inf
        %1329 = vmax.xlane.f32.xlu0 %v1328
        %v1330 = vpop.xlane.xlu0 %1329
        %v1331 = vsel %vm1116, %v1288, -inf
        %1332 = vmax.xlane.f32.xlu0 %v1331
        %v1333 = vpop.xlane.xlu0 %1332
        %v1334 = vsel %vm1116, %v1311, -inf
        %1335 = vmax.xlane.f32.xlu0 %v1334
        %v1336 = vpop.xlane.xlu0 %1335
        %v1337 = vmax.f32 %v1315, %v1327
        %v1338 = vmax.f32 %v1318, %v1330
        %v1339 = vmax.f32 %v1321, %v1333
        %v1340 = vmax.f32 %v1324, %v1336
        %v1341 = vsub.f32 %v1141, %v1337
        %v1342 = vsub.f32 %v1167, %v1338
        %v1343 = vsub.f32 %v1193, %v1339
        %v1344 = vsub.f32 %v1219, %v1340
        %v1345 = vmul.f32 %v1341, 1.442695
        %v1346 = vpow.pop %v1345
        %v1347 = vmul.f32 %v1342, 1.442695
        %v1348 = vpow.pop %v1347
        %v1349 = vmul.f32 %v1343, 1.442695
        %v1350 = vpow.pop %v1349
        %v1351 = vmul.f32 %v1344, 1.442695
        %v1352 = vpow.pop %v1351
        %v1353 = vsub.f32 %v1242, %v1337
        %v1354 = vsub.f32 %v1265, %v1338
        %v1355 = vsub.f32 %v1288, %v1339
        %v1356 = vsub.f32 %v1311, %v1340
        %v1357 = vmul.f32 %v1353, 1.442695
        %v1358 = vpow.pop %v1357
        %v1359 = vmul.f32 %v1354, 1.442695
        %v1360 = vpow.pop %v1359
        %v1361 = vmul.f32 %v1355, 1.442695
        %v1362 = vpow.pop %v1361
        %v1363 = vmul.f32 %v1356, 1.442695
        %v1364 = vpow.pop %v1363
        %v1365 = vsel %vm1116, %v1346, 0.0
        %1366 = vadd.xlane.f32.xlu0 %v1365
        %v1367 = vpop.xlane.xlu0 %1366
        %v1368 = vsel %vm1116, %v1348, 0.0
        %1369 = vadd.xlane.f32.xlu0 %v1368
        %v1370 = vpop.xlane.xlu0 %1369
        %v1371 = vsel %vm1116, %v1350, 0.0
        %1372 = vadd.xlane.f32.xlu0 %v1371
        %v1373 = vpop.xlane.xlu0 %1372
        %v1374 = vsel %vm1116, %v1352, 0.0
        %1375 = vadd.xlane.f32.xlu0 %v1374
        %v1376 = vpop.xlane.xlu0 %1375
        %v1377 = vsel %vm1116, %v1358, 0.0
        %1378 = vadd.xlane.f32.xlu0 %v1377
        %v1379 = vpop.xlane.xlu0 %1378
        %v1380 = vsel %vm1116, %v1360, 0.0
        %1381 = vadd.xlane.f32.xlu0 %v1380
        %v1382 = vpop.xlane.xlu0 %1381
        %v1383 = vsel %vm1116, %v1362, 0.0
        %1384 = vadd.xlane.f32.xlu0 %v1383
        %v1385 = vpop.xlane.xlu0 %1384
        %v1386 = vsel %vm1116, %v1364, 0.0
        %1387 = vadd.xlane.f32.xlu0 %v1386
        %v1388 = vpop.xlane.xlu0 %1387
        %v1389 = vadd.f32 %v1367, %v1379
        %v1390 = vadd.f32 %v1370, %v1382
        %v1391 = vadd.f32 %v1373, %v1385
        %v1392 = vadd.f32 %v1376, %v1388
        %v1393 = vrcp.pop %v1389
        %v1394 = vmul.f32 %v1389, %v1393
        %v1395 = vsub.f32 1.0, %v1394
        %v1396 = vmul.f32 %v1393, %v1395
        %v1397 = vadd.f32 %v1393, %v1396
        %vm1398 = vweird.f32 %v1389
        %vm1399 = vweird.f32 %v1393
        %vm1400 = vmor %vm1398, %vm1399
        %v1401 = vsel %vm1400, %v1393, %v1397
        %v1402 = vand.u32 2147483647, %v1389
        %vm1403 = vcmp.eq.f32.partialorder %v1402, 8.507059e+37
        %v1404 = vand.u32 %v1389, 2147483648
        %v1405 = vor.u32 1.1754944e-38, %v1404
        %v1406 = vsel %vm1403, %v1405, %v1401
        %v1407 = vmul.f32 1.0, %v1406
        %v1408 = vrcp.pop %v1390
        %v1409 = vmul.f32 %v1390, %v1408
        %v1410 = vsub.f32 1.0, %v1409
        %v1411 = vmul.f32 %v1408, %v1410
        %v1412 = vadd.f32 %v1408, %v1411
        %vm1413 = vweird.f32 %v1390
        %vm1414 = vweird.f32 %v1408
        %vm1415 = vmor %vm1413, %vm1414
        %v1416 = vsel %vm1415, %v1408, %v1412
        %v1417 = vand.u32 2147483647, %v1390
        %vm1418 = vcmp.eq.f32.partialorder %v1417, 8.507059e+37
        %v1419 = vand.u32 %v1390, 2147483648
        %v1420 = vor.u32 1.1754944e-38, %v1419
        %v1421 = vsel %vm1418, %v1420, %v1416
        %v1422 = vmul.f32 1.0, %v1421
        %v1423 = vrcp.pop %v1391
        %v1424 = vmul.f32 %v1391, %v1423
        %v1425 = vsub.f32 1.0, %v1424
        %v1426 = vmul.f32 %v1423, %v1425
        %v1427 = vadd.f32 %v1423, %v1426
        %vm1428 = vweird.f32 %v1391
        %vm1429 = vweird.f32 %v1423
        %vm1430 = vmor %vm1428, %vm1429
        %v1431 = vsel %vm1430, %v1423, %v1427
        %v1432 = vand.u32 2147483647, %v1391
        %vm1433 = vcmp.eq.f32.partialorder %v1432, 8.507059e+37
        %v1434 = vand.u32 %v1391, 2147483648
        %v1435 = vor.u32 1.1754944e-38, %v1434
        %v1436 = vsel %vm1433, %v1435, %v1431
        %v1437 = vmul.f32 1.0, %v1436
        %v1438 = vrcp.pop %v1392
        %v1439 = vmul.f32 %v1392, %v1438
        %v1440 = vsub.f32 1.0, %v1439
        %v1441 = vmul.f32 %v1438, %v1440
        %v1442 = vadd.f32 %v1438, %v1441
        %vm1443 = vweird.f32 %v1392
        %vm1444 = vweird.f32 %v1438
        %vm1445 = vmor %vm1443, %vm1444
        %v1446 = vsel %vm1445, %v1438, %v1442
        %v1447 = vand.u32 2147483647, %v1392
        %vm1448 = vcmp.eq.f32.partialorder %v1447, 8.507059e+37
        %v1449 = vand.u32 %v1392, 2147483648
        %v1450 = vor.u32 1.1754944e-38, %v1449
        %v1451 = vsel %vm1448, %v1450, %v1446
        %v1452 = vmul.f32 1.0, %v1451
        %1453 = vrot.lane.b32.xlu0 %v1105, 96
        %v1454 = vpop.permute.xlu0 %1453
        %v1457 = vsel %vm1116, %v1358, 0
        %1459 = vmatpush.msra.mxu0 0.0
        %1460 = vmatpush.msra.mxu0 0.0
        %1461 = vmatpush.msra.mxu0 0.0
        %1462 = vmatpush.msra.mxu0 0.0
        %1463 = vmatpush.msra.mxu0 0.0
        %1464 = vmatpush.msra.mxu0 0.0
        %1465 = vmatpush.msra.mxu0 0.0
        %1466 = vmatpush.msra.mxu0 0.0
        %1467 = vmatpush.msra.mxu0 0.0
        %1468 = vmatpush.msra.mxu0 0.0
        %1469 = vmatpush.msra.mxu0 0.0
        %1470 = vmatpush.msra.mxu0 0.0
        %1471 = vmatpush.msra.mxu0 0.0
        %1472 = vmatpush.msra.mxu0 0.0
        %1473 = vmatpush.msra.mxu0 0.0
        %1474 = vmatpush.msra.mxu0 %v1454
        %1475 = vmatmul.f32.gmra.mxu0 %v1457
        %v1476 = vpop.f32.mrf.mxu0
        %v1477 = vadd.f32 0.0, %v1476
        %1478 = vdwg.mxu0
        %1479 = vrot.lane.b32.xlu0 %v1108, 96
        %v1480 = vpop.permute.xlu0 %1479
        %v1483 = vsel %vm1116, %v1360, 0
        %1485 = vmatpush.msra.mxu0 0.0
        %1486 = vmatpush.msra.mxu0 0.0
        %1487 = vmatpush.msra.mxu0 0.0
        %1488 = vmatpush.msra.mxu0 0.0
        %1489 = vmatpush.msra.mxu0 0.0
        %1490 = vmatpush.msra.mxu0 0.0
        %1491 = vmatpush.msra.mxu0 0.0
        %1492 = vmatpush.msra.mxu0 0.0
        %1493 = vmatpush.msra.mxu0 0.0
        %1494 = vmatpush.msra.mxu0 0.0
        %1495 = vmatpush.msra.mxu0 0.0
        %1496 = vmatpush.msra.mxu0 0.0
        %1497 = vmatpush.msra.mxu0 0.0
        %1498 = vmatpush.msra.mxu0 0.0
        %1499 = vmatpush.msra.mxu0 0.0
        %1500 = vmatpush.msra.mxu0 %v1480
        %1501 = vmatmul.f32.gmra.mxu0 %v1483
        %v1502 = vpop.f32.mrf.mxu0
        %v1503 = vadd.f32 0.0, %v1502
        %1504 = vdwg.mxu0
        %1505 = vrot.lane.b32.xlu0 %v1111, 96
        %v1506 = vpop.permute.xlu0 %1505
        %v1509 = vsel %vm1116, %v1362, 0
        %1511 = vmatpush.msra.mxu0 0.0
        %1512 = vmatpush.msra.mxu0 0.0
        %1513 = vmatpush.msra.mxu0 0.0
        %1514 = vmatpush.msra.mxu0 0.0
        %1515 = vmatpush.msra.mxu0 0.0
        %1516 = vmatpush.msra.mxu0 0.0
        %1517 = vmatpush.msra.mxu0 0.0
        %1518 = vmatpush.msra.mxu0 0.0
        %1519 = vmatpush.msra.mxu0 0.0
        %1520 = vmatpush.msra.mxu0 0.0
        %1521 = vmatpush.msra.mxu0 0.0
        %1522 = vmatpush.msra.mxu0 0.0
        %1523 = vmatpush.msra.mxu0 0.0
        %1524 = vmatpush.msra.mxu0 0.0
        %1525 = vmatpush.msra.mxu0 0.0
        %1526 = vmatpush.msra.mxu0 %v1506
        %1527 = vmatmul.f32.gmra.mxu0 %v1509
        %v1528 = vpop.f32.mrf.mxu0
        %v1529 = vadd.f32 0.0, %v1528
        %1530 = vdwg.mxu0
        %1531 = vrot.lane.b32.xlu0 %v1114, 96
        %v1532 = vpop.permute.xlu0 %1531
        %v1535 = vsel %vm1116, %v1364, 0
        %1537 = vmatpush.msra.mxu0 0.0
        %1538 = vmatpush.msra.mxu0 0.0
        %1539 = vmatpush.msra.mxu0 0.0
        %1540 = vmatpush.msra.mxu0 0.0
        %1541 = vmatpush.msra.mxu0 0.0
        %1542 = vmatpush.msra.mxu0 0.0
        %1543 = vmatpush.msra.mxu0 0.0
        %1544 = vmatpush.msra.mxu0 0.0
        %1545 = vmatpush.msra.mxu0 0.0
        %1546 = vmatpush.msra.mxu0 0.0
        %1547 = vmatpush.msra.mxu0 0.0
        %1548 = vmatpush.msra.mxu0 0.0
        %1549 = vmatpush.msra.mxu0 0.0
        %1550 = vmatpush.msra.mxu0 0.0
        %1551 = vmatpush.msra.mxu0 0.0
        %1552 = vmatpush.msra.mxu0 %v1532
        %1553 = vmatmul.f32.gmra.mxu0 %v1535
        %v1554 = vpop.f32.mrf.mxu0
        %v1555 = vadd.f32 0.0, %v1554
        %1556 = vdwg.mxu0
        %1557 = vrot.lane.b32.xlu0 %v1076, 96
        %v1558 = vpop.permute.xlu0 %1557
        %v1561 = vsel %vm1116, %v1346, 0
        %1563 = vmatpush.msra.mxu0 0.0
        %1564 = vmatpush.msra.mxu0 0.0
        %1565 = vmatpush.msra.mxu0 0.0
        %1566 = vmatpush.msra.mxu0 0.0
        %1567 = vmatpush.msra.mxu0 0.0
        %1568 = vmatpush.msra.mxu0 0.0
        %1569 = vmatpush.msra.mxu0 0.0
        %1570 = vmatpush.msra.mxu0 0.0
        %1571 = vmatpush.msra.mxu0 0.0
        %1572 = vmatpush.msra.mxu0 0.0
        %1573 = vmatpush.msra.mxu0 0.0
        %1574 = vmatpush.msra.mxu0 0.0
        %1575 = vmatpush.msra.mxu0 0.0
        %1576 = vmatpush.msra.mxu0 0.0
        %1577 = vmatpush.msra.mxu0 0.0
        %1578 = vmatpush.msra.mxu0 %v1558
        %1579 = vmatmul.f32.gmra.mxu0 %v1561
        %v1580 = vpop.f32.mrf.mxu0
        %v1581 = vadd.f32 %v1477, %v1580
        %1582 = vdwg.mxu0
        %1583 = vrot.lane.b32.xlu0 %v1079, 96
        %v1584 = vpop.permute.xlu0 %1583
        %v1587 = vsel %vm1116, %v1348, 0
        %1589 = vmatpush.msra.mxu0 0.0
        %1590 = vmatpush.msra.mxu0 0.0
        %1591 = vmatpush.msra.mxu0 0.0
        %1592 = vmatpush.msra.mxu0 0.0
        %1593 = vmatpush.msra.mxu0 0.0
        %1594 = vmatpush.msra.mxu0 0.0
        %1595 = vmatpush.msra.mxu0 0.0
        %1596 = vmatpush.msra.mxu0 0.0
        %1597 = vmatpush.msra.mxu0 0.0
        %1598 = vmatpush.msra.mxu0 0.0
        %1599 = vmatpush.msra.mxu0 0.0
        %1600 = vmatpush.msra.mxu0 0.0
        %1601 = vmatpush.msra.mxu0 0.0
        %1602 = vmatpush.msra.mxu0 0.0
        %1603 = vmatpush.msra.mxu0 0.0
        %1604 = vmatpush.msra.mxu0 %v1584
        %1605 = vmatmul.f32.gmra.mxu0 %v1587
        %v1606 = vpop.f32.mrf.mxu0
        %v1607 = vadd.f32 %v1503, %v1606
        %1608 = vdwg.mxu0
        %1609 = vrot.lane.b32.xlu0 %v1082, 96
        %v1610 = vpop.permute.xlu0 %1609
        %v1613 = vsel %vm1116, %v1350, 0
        %1615 = vmatpush.msra.mxu0 0.0
        %1616 = vmatpush.msra.mxu0 0.0
        %1617 = vmatpush.msra.mxu0 0.0
        %1618 = vmatpush.msra.mxu0 0.0
        %1619 = vmatpush.msra.mxu0 0.0
        %1620 = vmatpush.msra.mxu0 0.0
        %1621 = vmatpush.msra.mxu0 0.0
        %1622 = vmatpush.msra.mxu0 0.0
        %1623 = vmatpush.msra.mxu0 0.0
        %1624 = vmatpush.msra.mxu0 0.0
        %1625 = vmatpush.msra.mxu0 0.0
        %1626 = vmatpush.msra.mxu0 0.0
        %1627 = vmatpush.msra.mxu0 0.0
        %1628 = vmatpush.msra.mxu0 0.0
        %1629 = vmatpush.msra.mxu0 0.0
        %1630 = vmatpush.msra.mxu0 %v1610
        %1631 = vmatmul.f32.gmra.mxu0 %v1613
        %v1632 = vpop.f32.mrf.mxu0
        %v1633 = vadd.f32 %v1529, %v1632
        %1634 = vdwg.mxu0
        %1635 = vrot.lane.b32.xlu0 %v1085, 96
        %v1636 = vpop.permute.xlu0 %1635
        %v1639 = vsel %vm1116, %v1352, 0
        %1641 = vmatpush.msra.mxu0 0.0
        %1642 = vmatpush.msra.mxu0 0.0
        %1643 = vmatpush.msra.mxu0 0.0
        %1644 = vmatpush.msra.mxu0 0.0
        %1645 = vmatpush.msra.mxu0 0.0
        %1646 = vmatpush.msra.mxu0 0.0
        %1647 = vmatpush.msra.mxu0 0.0
        %1648 = vmatpush.msra.mxu0 0.0
        %1649 = vmatpush.msra.mxu0 0.0
        %1650 = vmatpush.msra.mxu0 0.0
        %1651 = vmatpush.msra.mxu0 0.0
        %1652 = vmatpush.msra.mxu0 0.0
        %1653 = vmatpush.msra.mxu0 0.0
        %1654 = vmatpush.msra.mxu0 0.0
        %1655 = vmatpush.msra.mxu0 0.0
        %1656 = vmatpush.msra.mxu0 %v1636
        %1657 = vmatmul.f32.gmra.mxu0 %v1639
        %v1658 = vpop.f32.mrf.mxu0
        %v1659 = vadd.f32 %v1555, %v1658
        %1660 = vdwg.mxu0
        %v1661 = vmul.f32 %v1581, %v1407
        %v1662 = vmul.f32 %v1607, %v1422
        %v1663 = vmul.f32 %v1633, %v1437
        %v1664 = vmul.f32 %v1659, %v1452
        %1665 = vst.msk [vmem:[#allocation4] sm:$0xff] %vm1116, %v1661
        %1666 = vst.msk [vmem:[#allocation4 + $0x8] sm:$0xff] %vm1116, %v1662
        %1667 = vst.msk [vmem:[#allocation4 + $0x10] sm:$0xff] %vm1116, %v1663
        %1668 = vst.msk [vmem:[#allocation4 + $0x18] sm:$0xff] %vm1116, %v1664
        %1669 = vrot.lane.b32.xlu0 %v1035, 120
        %v1670 = vpop.permute.xlu0 %1669
        %1671 = vrot.lane.b32.xlu0 %v1076, 120
        %v1672 = vpop.permute.xlu0 %1671
        %v1673 = vsel %vm1116, %v1670, 0
        %v1675 = vsel %vm1116, %v1672, 0
        %1677 = vmatpush.xpose.msra.mxu0 0.0
        %1678 = vmatpush.xpose.msra.mxu0 0.0
        %1679 = vmatpush.xpose.msra.mxu0 0.0
        %1680 = vmatpush.xpose.msra.mxu0 0.0
        %1681 = vmatpush.xpose.msra.mxu0 0.0
        %1682 = vmatpush.xpose.msra.mxu0 0.0
        %1683 = vmatpush.xpose.msra.mxu0 0.0
        %1684 = vmatpush.xpose.msra.mxu0 0.0
        %1685 = vmatpush.xpose.msra.mxu0 0.0
        %1686 = vmatpush.xpose.msra.mxu0 0.0
        %1687 = vmatpush.xpose.msra.mxu0 0.0
        %1688 = vmatpush.xpose.msra.mxu0 0.0
        %1689 = vmatpush.xpose.msra.mxu0 0.0
        %1690 = vmatpush.xpose.msra.mxu0 0.0
        %1691 = vmatpush.xpose.msra.mxu0 0.0
        %1692 = vmatpush.xpose.msra.mxu0 %v1675
        %1693 = vmatmul.f32.gmra.mxu0 %v1673
        %v1694 = vpop.f32.mrf.mxu0
        %v1695 = vadd.f32 0.0, %v1694
        %1696 = vdwg.mxu0
        %1697 = vrot.lane.b32.xlu0 %v1038, 120
        %v1698 = vpop.permute.xlu0 %1697
        %1699 = vrot.lane.b32.xlu0 %v1079, 120
        %v1700 = vpop.permute.xlu0 %1699
        %v1701 = vsel %vm1116, %v1698, 0
        %v1703 = vsel %vm1116, %v1700, 0
        %1705 = vmatpush.xpose.msra.mxu0 0.0
        %1706 = vmatpush.xpose.msra.mxu0 0.0
        %1707 = vmatpush.xpose.msra.mxu0 0.0
        %1708 = vmatpush.xpose.msra.mxu0 0.0
        %1709 = vmatpush.xpose.msra.mxu0 0.0
        %1710 = vmatpush.xpose.msra.mxu0 0.0
        %1711 = vmatpush.xpose.msra.mxu0 0.0
        %1712 = vmatpush.xpose.msra.mxu0 0.0
        %1713 = vmatpush.xpose.msra.mxu0 0.0
        %1714 = vmatpush.xpose.msra.mxu0 0.0
        %1715 = vmatpush.xpose.msra.mxu0 0.0
        %1716 = vmatpush.xpose.msra.mxu0 0.0
        %1717 = vmatpush.xpose.msra.mxu0 0.0
        %1718 = vmatpush.xpose.msra.mxu0 0.0
        %1719 = vmatpush.xpose.msra.mxu0 0.0
        %1720 = vmatpush.xpose.msra.mxu0 %v1703
        %1721 = vmatmul.f32.gmra.mxu0 %v1701
        %v1722 = vpop.f32.mrf.mxu0
        %v1723 = vadd.f32 0.0, %v1722
        %1724 = vdwg.mxu0
        %1725 = vrot.lane.b32.xlu0 %v1041, 120
        %v1726 = vpop.permute.xlu0 %1725
        %1727 = vrot.lane.b32.xlu0 %v1082, 120
        %v1728 = vpop.permute.xlu0 %1727
        %v1729 = vsel %vm1116, %v1726, 0
        %v1731 = vsel %vm1116, %v1728, 0
        %1733 = vmatpush.xpose.msra.mxu0 0.0
        %1734 = vmatpush.xpose.msra.mxu0 0.0
        %1735 = vmatpush.xpose.msra.mxu0 0.0
        %1736 = vmatpush.xpose.msra.mxu0 0.0
        %1737 = vmatpush.xpose.msra.mxu0 0.0
        %1738 = vmatpush.xpose.msra.mxu0 0.0
        %1739 = vmatpush.xpose.msra.mxu0 0.0
        %1740 = vmatpush.xpose.msra.mxu0 0.0
        %1741 = vmatpush.xpose.msra.mxu0 0.0
        %1742 = vmatpush.xpose.msra.mxu0 0.0
        %1743 = vmatpush.xpose.msra.mxu0 0.0
        %1744 = vmatpush.xpose.msra.mxu0 0.0
        %1745 = vmatpush.xpose.msra.mxu0 0.0
        %1746 = vmatpush.xpose.msra.mxu0 0.0
        %1747 = vmatpush.xpose.msra.mxu0 0.0
        %1748 = vmatpush.xpose.msra.mxu0 %v1731
        %1749 = vmatmul.f32.gmra.mxu0 %v1729
        %v1750 = vpop.f32.mrf.mxu0
        %v1751 = vadd.f32 0.0, %v1750
        %1752 = vdwg.mxu0
        %1753 = vrot.lane.b32.xlu0 %v1044, 120
        %v1754 = vpop.permute.xlu0 %1753
        %1755 = vrot.lane.b32.xlu0 %v1085, 120
        %v1756 = vpop.permute.xlu0 %1755
        %v1757 = vsel %vm1116, %v1754, 0
        %v1759 = vsel %vm1116, %v1756, 0
        %1761 = vmatpush.xpose.msra.mxu0 0.0
        %1762 = vmatpush.xpose.msra.mxu0 0.0
        %1763 = vmatpush.xpose.msra.mxu0 0.0
        %1764 = vmatpush.xpose.msra.mxu0 0.0
        %1765 = vmatpush.xpose.msra.mxu0 0.0
        %1766 = vmatpush.xpose.msra.mxu0 0.0
        %1767 = vmatpush.xpose.msra.mxu0 0.0
        %1768 = vmatpush.xpose.msra.mxu0 0.0
        %1769 = vmatpush.xpose.msra.mxu0 0.0
        %1770 = vmatpush.xpose.msra.mxu0 0.0
        %1771 = vmatpush.xpose.msra.mxu0 0.0
        %1772 = vmatpush.xpose.msra.mxu0 0.0
        %1773 = vmatpush.xpose.msra.mxu0 0.0
        %1774 = vmatpush.xpose.msra.mxu0 0.0
        %1775 = vmatpush.xpose.msra.mxu0 0.0
        %1776 = vmatpush.xpose.msra.mxu0 %v1759
        %1777 = vmatmul.f32.gmra.mxu0 %v1757
        %v1778 = vpop.f32.mrf.mxu0
        %v1779 = vadd.f32 0.0, %v1778
        %1780 = vdwg.mxu0
        %1781 = vrot.lane.b32.xlu0 %v1105, 120
        %v1782 = vpop.permute.xlu0 %1781
        %v1783 = vsel %vm1116, %v1782, 0
        %1785 = vmatpush.xpose.msra.mxu0 0.0
        %1786 = vmatpush.xpose.msra.mxu0 0.0
        %1787 = vmatpush.xpose.msra.mxu0 0.0
        %1788 = vmatpush.xpose.msra.mxu0 0.0
        %1789 = vmatpush.xpose.msra.mxu0 0.0
        %1790 = vmatpush.xpose.msra.mxu0 0.0
        %1791 = vmatpush.xpose.msra.mxu0 0.0
        %1792 = vmatpush.xpose.msra.mxu0 0.0
        %1793 = vmatpush.xpose.msra.mxu0 0.0
        %1794 = vmatpush.xpose.msra.mxu0 0.0
        %1795 = vmatpush.xpose.msra.mxu0 0.0
        %1796 = vmatpush.xpose.msra.mxu0 0.0
        %1797 = vmatpush.xpose.msra.mxu0 0.0
        %1798 = vmatpush.xpose.msra.mxu0 0.0
        %1799 = vmatpush.xpose.msra.mxu0 0.0
        %1800 = vmatpush.xpose.msra.mxu0 %v1783
        %1801 = vmatmul.f32.gmra.mxu0 %v1673
        %v1802 = vpop.f32.mrf.mxu0
        %v1803 = vadd.f32 0.0, %v1802
        %1804 = vdwg.mxu0
        %1805 = vrot.lane.b32.xlu0 %v1108, 120
        %v1806 = vpop.permute.xlu0 %1805
        %v1807 = vsel %vm1116, %v1806, 0
        %1809 = vmatpush.xpose.msra.mxu0 0.0
        %1810 = vmatpush.xpose.msra.mxu0 0.0
        %1811 = vmatpush.xpose.msra.mxu0 0.0
        %1812 = vmatpush.xpose.msra.mxu0 0.0
        %1813 = vmatpush.xpose.msra.mxu0 0.0
        %1814 = vmatpush.xpose.msra.mxu0 0.0
        %1815 = vmatpush.xpose.msra.mxu0 0.0
        %1816 = vmatpush.xpose.msra.mxu0 0.0
        %1817 = vmatpush.xpose.msra.mxu0 0.0
        %1818 = vmatpush.xpose.msra.mxu0 0.0
        %1819 = vmatpush.xpose.msra.mxu0 0.0
        %1820 = vmatpush.xpose.msra.mxu0 0.0
        %1821 = vmatpush.xpose.msra.mxu0 0.0
        %1822 = vmatpush.xpose.msra.mxu0 0.0
        %1823 = vmatpush.xpose.msra.mxu0 0.0
        %1824 = vmatpush.xpose.msra.mxu0 %v1807
        %1825 = vmatmul.f32.gmra.mxu0 %v1701
        %v1826 = vpop.f32.mrf.mxu0
        %v1827 = vadd.f32 0.0, %v1826
        %1828 = vdwg.mxu0
        %1829 = vrot.lane.b32.xlu0 %v1111, 120
        %v1830 = vpop.permute.xlu0 %1829
        %v1831 = vsel %vm1116, %v1830, 0
        %1833 = vmatpush.xpose.msra.mxu0 0.0
        %1834 = vmatpush.xpose.msra.mxu0 0.0
        %1835 = vmatpush.xpose.msra.mxu0 0.0
        %1836 = vmatpush.xpose.msra.mxu0 0.0
        %1837 = vmatpush.xpose.msra.mxu0 0.0
        %1838 = vmatpush.xpose.msra.mxu0 0.0
        %1839 = vmatpush.xpose.msra.mxu0 0.0
        %1840 = vmatpush.xpose.msra.mxu0 0.0
        %1841 = vmatpush.xpose.msra.mxu0 0.0
        %1842 = vmatpush.xpose.msra.mxu0 0.0
        %1843 = vmatpush.xpose.msra.mxu0 0.0
        %1844 = vmatpush.xpose.msra.mxu0 0.0
        %1845 = vmatpush.xpose.msra.mxu0 0.0
        %1846 = vmatpush.xpose.msra.mxu0 0.0
        %1847 = vmatpush.xpose.msra.mxu0 0.0
        %1848 = vmatpush.xpose.msra.mxu0 %v1831
        %1849 = vmatmul.f32.gmra.mxu0 %v1729
        %v1850 = vpop.f32.mrf.mxu0
        %v1851 = vadd.f32 0.0, %v1850
        %1852 = vdwg.mxu0
        %1853 = vrot.lane.b32.xlu0 %v1114, 120
        %v1854 = vpop.permute.xlu0 %1853
        %v1855 = vsel %vm1116, %v1854, 0
        %1857 = vmatpush.xpose.msra.mxu0 0.0
        %1858 = vmatpush.xpose.msra.mxu0 0.0
        %1859 = vmatpush.xpose.msra.mxu0 0.0
        %1860 = vmatpush.xpose.msra.mxu0 0.0
        %1861 = vmatpush.xpose.msra.mxu0 0.0
        %1862 = vmatpush.xpose.msra.mxu0 0.0
        %1863 = vmatpush.xpose.msra.mxu0 0.0
        %1864 = vmatpush.xpose.msra.mxu0 0.0
        %1865 = vmatpush.xpose.msra.mxu0 0.0
        %1866 = vmatpush.xpose.msra.mxu0 0.0
        %1867 = vmatpush.xpose.msra.mxu0 0.0
        %1868 = vmatpush.xpose.msra.mxu0 0.0
        %1869 = vmatpush.xpose.msra.mxu0 0.0
        %1870 = vmatpush.xpose.msra.mxu0 0.0
        %1871 = vmatpush.xpose.msra.mxu0 0.0
        %1872 = vmatpush.xpose.msra.mxu0 %v1855
        %1873 = vmatmul.f32.gmra.mxu0 %v1757
        %v1874 = vpop.f32.mrf.mxu0
        %v1875 = vadd.f32 0.0, %v1874
        %1876 = vdwg.mxu0
        %v1877 = vsel %vm1116, %v1695, -inf
        %1878 = vmax.xlane.f32.xlu0 %v1877
        %v1879 = vpop.xlane.xlu0 %1878
        %v1880 = vsel %vm1116, %v1723, -inf
        %1881 = vmax.xlane.f32.xlu0 %v1880
        %v1882 = vpop.xlane.xlu0 %1881
        %v1883 = vsel %vm1116, %v1751, -inf
        %1884 = vmax.xlane.f32.xlu0 %v1883
        %v1885 = vpop.xlane.xlu0 %1884
        %v1886 = vsel %vm1116, %v1779, -inf
        %1887 = vmax.xlane.f32.xlu0 %v1886
        %v1888 = vpop.xlane.xlu0 %1887
        %v1889 = vsel %vm1116, %v1803, -inf
        %1890 = vmax.xlane.f32.xlu0 %v1889
        %v1891 = vpop.xlane.xlu0 %1890
        %v1892 = vsel %vm1116, %v1827, -inf
        %1893 = vmax.xlane.f32.xlu0 %v1892
        %v1894 = vpop.xlane.xlu0 %1893
        %v1895 = vsel %vm1116, %v1851, -inf
        %1896 = vmax.xlane.f32.xlu0 %v1895
        %v1897 = vpop.xlane.xlu0 %1896
        %v1898 = vsel %vm1116, %v1875, -inf
        %1899 = vmax.xlane.f32.xlu0 %v1898
        %v1900 = vpop.xlane.xlu0 %1899
        %v1901 = vmax.f32 %v1879, %v1891
        %v1902 = vmax.f32 %v1882, %v1894
        %v1903 = vmax.f32 %v1885, %v1897
        %v1904 = vmax.f32 %v1888, %v1900
        %v1905 = vsub.f32 %v1695, %v1901
        %v1906 = vsub.f32 %v1723, %v1902
        %v1907 = vsub.f32 %v1751, %v1903
        %v1908 = vsub.f32 %v1779, %v1904
        %v1909 = vmul.f32 %v1905, 1.442695
        %v1910 = vpow.pop %v1909
        %v1911 = vmul.f32 %v1906, 1.442695
        %v1912 = vpow.pop %v1911
        %v1913 = vmul.f32 %v1907, 1.442695
        %v1914 = vpow.pop %v1913
        %v1915 = vmul.f32 %v1908, 1.442695
        %v1916 = vpow.pop %v1915
        %v1917 = vsub.f32 %v1803, %v1901
        %v1918 = vsub.f32 %v1827, %v1902
        %v1919 = vsub.f32 %v1851, %v1903
        %v1920 = vsub.f32 %v1875, %v1904
        %v1921 = vmul.f32 %v1917, 1.442695
        %v1922 = vpow.pop %v1921
        %v1923 = vmul.f32 %v1918, 1.442695
        %v1924 = vpow.pop %v1923
        %v1925 = vmul.f32 %v1919, 1.442695
        %v1926 = vpow.pop %v1925
        %v1927 = vmul.f32 %v1920, 1.442695
        %v1928 = vpow.pop %v1927
        %v1929 = vsel %vm1116, %v1910, 0.0
        %1930 = vadd.xlane.f32.xlu0 %v1929
        %v1931 = vpop.xlane.xlu0 %1930
        %v1932 = vsel %vm1116, %v1912, 0.0
        %1933 = vadd.xlane.f32.xlu0 %v1932
        %v1934 = vpop.xlane.xlu0 %1933
        %v1935 = vsel %vm1116, %v1914, 0.0
        %1936 = vadd.xlane.f32.xlu0 %v1935
        %v1937 = vpop.xlane.xlu0 %1936
        %v1938 = vsel %vm1116, %v1916, 0.0
        %1939 = vadd.xlane.f32.xlu0 %v1938
        %v1940 = vpop.xlane.xlu0 %1939
        %v1941 = vsel %vm1116, %v1922, 0.0
        %1942 = vadd.xlane.f32.xlu0 %v1941
        %v1943 = vpop.xlane.xlu0 %1942
        %v1944 = vsel %vm1116, %v1924, 0.0
        %1945 = vadd.xlane.f32.xlu0 %v1944
        %v1946 = vpop.xlane.xlu0 %1945
        %v1947 = vsel %vm1116, %v1926, 0.0
        %1948 = vadd.xlane.f32.xlu0 %v1947
        %v1949 = vpop.xlane.xlu0 %1948
        %v1950 = vsel %vm1116, %v1928, 0.0
        %1951 = vadd.xlane.f32.xlu0 %v1950
        %v1952 = vpop.xlane.xlu0 %1951
        %v1953 = vadd.f32 %v1931, %v1943
        %v1954 = vadd.f32 %v1934, %v1946
        %v1955 = vadd.f32 %v1937, %v1949
        %v1956 = vadd.f32 %v1940, %v1952
        %v1957 = vrcp.pop %v1953
        %v1958 = vmul.f32 %v1953, %v1957
        %v1959 = vsub.f32 1.0, %v1958
        %v1960 = vmul.f32 %v1957, %v1959
        %v1961 = vadd.f32 %v1957, %v1960
        %vm1962 = vweird.f32 %v1953
        %vm1963 = vweird.f32 %v1957
        %vm1964 = vmor %vm1962, %vm1963
        %v1965 = vsel %vm1964, %v1957, %v1961
        %v1966 = vand.u32 2147483647, %v1953
        %vm1967 = vcmp.eq.f32.partialorder %v1966, 8.507059e+37
        %v1968 = vand.u32 %v1953, 2147483648
        %v1969 = vor.u32 1.1754944e-38, %v1968
        %v1970 = vsel %vm1967, %v1969, %v1965
        %v1971 = vmul.f32 1.0, %v1970
        %v1972 = vrcp.pop %v1954
        %v1973 = vmul.f32 %v1954, %v1972
        %v1974 = vsub.f32 1.0, %v1973
        %v1975 = vmul.f32 %v1972, %v1974
        %v1976 = vadd.f32 %v1972, %v1975
        %vm1977 = vweird.f32 %v1954
        %vm1978 = vweird.f32 %v1972
        %vm1979 = vmor %vm1977, %vm1978
        %v1980 = vsel %vm1979, %v1972, %v1976
        %v1981 = vand.u32 2147483647, %v1954
        %vm1982 = vcmp.eq.f32.partialorder %v1981, 8.507059e+37
        %v1983 = vand.u32 %v1954, 2147483648
        %v1984 = vor.u32 1.1754944e-38, %v1983
        %v1985 = vsel %vm1982, %v1984, %v1980
        %v1986 = vmul.f32 1.0, %v1985
        %v1987 = vrcp.pop %v1955
        %v1988 = vmul.f32 %v1955, %v1987
        %v1989 = vsub.f32 1.0, %v1988
        %v1990 = vmul.f32 %v1987, %v1989
        %v1991 = vadd.f32 %v1987, %v1990
        %vm1992 = vweird.f32 %v1955
        %vm1993 = vweird.f32 %v1987
        %vm1994 = vmor %vm1992, %vm1993
        %v1995 = vsel %vm1994, %v1987, %v1991
        %v1996 = vand.u32 2147483647, %v1955
        %vm1997 = vcmp.eq.f32.partialorder %v1996, 8.507059e+37
        %v1998 = vand.u32 %v1955, 2147483648
        %v1999 = vor.u32 1.1754944e-38, %v1998
        %v2000 = vsel %vm1997, %v1999, %v1995
        %v2001 = vmul.f32 1.0, %v2000
        %v2002 = vrcp.pop %v1956
        %v2003 = vmul.f32 %v1956, %v2002
        %v2004 = vsub.f32 1.0, %v2003
        %v2005 = vmul.f32 %v2002, %v2004
        %v2006 = vadd.f32 %v2002, %v2005
        %vm2007 = vweird.f32 %v1956
        %vm2008 = vweird.f32 %v2002
        %vm2009 = vmor %vm2007, %vm2008
        %v2010 = vsel %vm2009, %v2002, %v2006
        %v2011 = vand.u32 2147483647, %v1956
        %vm2012 = vcmp.eq.f32.partialorder %v2011, 8.507059e+37
        %v2013 = vand.u32 %v1956, 2147483648
        %v2014 = vor.u32 1.1754944e-38, %v2013
        %v2015 = vsel %vm2012, %v2014, %v2010
        %v2016 = vmul.f32 1.0, %v2015
        %2017 = vrot.lane.b32.xlu0 %v1105, 88
        %v2018 = vpop.permute.xlu0 %2017
        %v2021 = vsel %vm1116, %v1922, 0
        %2023 = vmatpush.msra.mxu0 0.0
        %2024 = vmatpush.msra.mxu0 0.0
        %2025 = vmatpush.msra.mxu0 0.0
        %2026 = vmatpush.msra.mxu0 0.0
        %2027 = vmatpush.msra.mxu0 0.0
        %2028 = vmatpush.msra.mxu0 0.0
        %2029 = vmatpush.msra.mxu0 0.0
        %2030 = vmatpush.msra.mxu0 0.0
        %2031 = vmatpush.msra.mxu0 0.0
        %2032 = vmatpush.msra.mxu0 0.0
        %2033 = vmatpush.msra.mxu0 0.0
        %2034 = vmatpush.msra.mxu0 0.0
        %2035 = vmatpush.msra.mxu0 0.0
        %2036 = vmatpush.msra.mxu0 0.0
        %2037 = vmatpush.msra.mxu0 0.0
        %2038 = vmatpush.msra.mxu0 %v2018
        %2039 = vmatmul.f32.gmra.mxu0 %v2021
        %v2040 = vpop.f32.mrf.mxu0
        %v2041 = vadd.f32 0.0, %v2040
        %2042 = vdwg.mxu0
        %2043 = vrot.lane.b32.xlu0 %v1108, 88
        %v2044 = vpop.permute.xlu0 %2043
        %v2047 = vsel %vm1116, %v1924, 0
        %2049 = vmatpush.msra.mxu0 0.0
        %2050 = vmatpush.msra.mxu0 0.0
        %2051 = vmatpush.msra.mxu0 0.0
        %2052 = vmatpush.msra.mxu0 0.0
        %2053 = vmatpush.msra.mxu0 0.0
        %2054 = vmatpush.msra.mxu0 0.0
        %2055 = vmatpush.msra.mxu0 0.0
        %2056 = vmatpush.msra.mxu0 0.0
        %2057 = vmatpush.msra.mxu0 0.0
        %2058 = vmatpush.msra.mxu0 0.0
        %2059 = vmatpush.msra.mxu0 0.0
        %2060 = vmatpush.msra.mxu0 0.0
        %2061 = vmatpush.msra.mxu0 0.0
        %2062 = vmatpush.msra.mxu0 0.0
        %2063 = vmatpush.msra.mxu0 0.0
        %2064 = vmatpush.msra.mxu0 %v2044
        %2065 = vmatmul.f32.gmra.mxu0 %v2047
        %v2066 = vpop.f32.mrf.mxu0
        %v2067 = vadd.f32 0.0, %v2066
        %2068 = vdwg.mxu0
        %2069 = vrot.lane.b32.xlu0 %v1111, 88
        %v2070 = vpop.permute.xlu0 %2069
        %v2073 = vsel %vm1116, %v1926, 0
        %2075 = vmatpush.msra.mxu0 0.0
        %2076 = vmatpush.msra.mxu0 0.0
        %2077 = vmatpush.msra.mxu0 0.0
        %2078 = vmatpush.msra.mxu0 0.0
        %2079 = vmatpush.msra.mxu0 0.0
        %2080 = vmatpush.msra.mxu0 0.0
        %2081 = vmatpush.msra.mxu0 0.0
        %2082 = vmatpush.msra.mxu0 0.0
        %2083 = vmatpush.msra.mxu0 0.0
        %2084 = vmatpush.msra.mxu0 0.0
        %2085 = vmatpush.msra.mxu0 0.0
        %2086 = vmatpush.msra.mxu0 0.0
        %2087 = vmatpush.msra.mxu0 0.0
        %2088 = vmatpush.msra.mxu0 0.0
        %2089 = vmatpush.msra.mxu0 0.0
        %2090 = vmatpush.msra.mxu0 %v2070
        %2091 = vmatmul.f32.gmra.mxu0 %v2073
        %v2092 = vpop.f32.mrf.mxu0
        %v2093 = vadd.f32 0.0, %v2092
        %2094 = vdwg.mxu0
        %2095 = vrot.lane.b32.xlu0 %v1114, 88
        %v2096 = vpop.permute.xlu0 %2095
        %v2099 = vsel %vm1116, %v1928, 0
        %2101 = vmatpush.msra.mxu0 0.0
        %2102 = vmatpush.msra.mxu0 0.0
        %2103 = vmatpush.msra.mxu0 0.0
        %2104 = vmatpush.msra.mxu0 0.0
        %2105 = vmatpush.msra.mxu0 0.0
        %2106 = vmatpush.msra.mxu0 0.0
        %2107 = vmatpush.msra.mxu0 0.0
        %2108 = vmatpush.msra.mxu0 0.0
        %2109 = vmatpush.msra.mxu0 0.0
        %2110 = vmatpush.msra.mxu0 0.0
        %2111 = vmatpush.msra.mxu0 0.0
        %2112 = vmatpush.msra.mxu0 0.0
        %2113 = vmatpush.msra.mxu0 0.0
        %2114 = vmatpush.msra.mxu0 0.0
        %2115 = vmatpush.msra.mxu0 0.0
        %2116 = vmatpush.msra.mxu0 %v2096
        %2117 = vmatmul.f32.gmra.mxu0 %v2099
        %v2118 = vpop.f32.mrf.mxu0
        %v2119 = vadd.f32 0.0, %v2118
        %2120 = vdwg.mxu0
        %2121 = vrot.lane.b32.xlu0 %v1076, 88
        %v2122 = vpop.permute.xlu0 %2121
        %v2125 = vsel %vm1116, %v1910, 0
        %2127 = vmatpush.msra.mxu0 0.0
        %2128 = vmatpush.msra.mxu0 0.0
        %2129 = vmatpush.msra.mxu0 0.0
        %2130 = vmatpush.msra.mxu0 0.0
        %2131 = vmatpush.msra.mxu0 0.0
        %2132 = vmatpush.msra.mxu0 0.0
        %2133 = vmatpush.msra.mxu0 0.0
        %2134 = vmatpush.msra.mxu0 0.0
        %2135 = vmatpush.msra.mxu0 0.0
        %2136 = vmatpush.msra.mxu0 0.0
        %2137 = vmatpush.msra.mxu0 0.0
        %2138 = vmatpush.msra.mxu0 0.0
        %2139 = vmatpush.msra.mxu0 0.0
        %2140 = vmatpush.msra.mxu0 0.0
        %2141 = vmatpush.msra.mxu0 0.0
        %2142 = vmatpush.msra.mxu0 %v2122
        %2143 = vmatmul.f32.gmra.mxu0 %v2125
        %v2144 = vpop.f32.mrf.mxu0
        %v2145 = vadd.f32 %v2041, %v2144
        %2146 = vdwg.mxu0
        %2147 = vrot.lane.b32.xlu0 %v1079, 88
        %v2148 = vpop.permute.xlu0 %2147
        %v2151 = vsel %vm1116, %v1912, 0
        %2153 = vmatpush.msra.mxu0 0.0
        %2154 = vmatpush.msra.mxu0 0.0
        %2155 = vmatpush.msra.mxu0 0.0
        %2156 = vmatpush.msra.mxu0 0.0
        %2157 = vmatpush.msra.mxu0 0.0
        %2158 = vmatpush.msra.mxu0 0.0
        %2159 = vmatpush.msra.mxu0 0.0
        %2160 = vmatpush.msra.mxu0 0.0
        %2161 = vmatpush.msra.mxu0 0.0
        %2162 = vmatpush.msra.mxu0 0.0
        %2163 = vmatpush.msra.mxu0 0.0
        %2164 = vmatpush.msra.mxu0 0.0
        %2165 = vmatpush.msra.mxu0 0.0
        %2166 = vmatpush.msra.mxu0 0.0
        %2167 = vmatpush.msra.mxu0 0.0
        %2168 = vmatpush.msra.mxu0 %v2148
        %2169 = vmatmul.f32.gmra.mxu0 %v2151
        %v2170 = vpop.f32.mrf.mxu0
        %v2171 = vadd.f32 %v2067, %v2170
        %2172 = vdwg.mxu0
        %2173 = vrot.lane.b32.xlu0 %v1082, 88
        %v2174 = vpop.permute.xlu0 %2173
        %v2177 = vsel %vm1116, %v1914, 0
        %2179 = vmatpush.msra.mxu0 0.0
        %2180 = vmatpush.msra.mxu0 0.0
        %2181 = vmatpush.msra.mxu0 0.0
        %2182 = vmatpush.msra.mxu0 0.0
        %2183 = vmatpush.msra.mxu0 0.0
        %2184 = vmatpush.msra.mxu0 0.0
        %2185 = vmatpush.msra.mxu0 0.0
        %2186 = vmatpush.msra.mxu0 0.0
        %2187 = vmatpush.msra.mxu0 0.0
        %2188 = vmatpush.msra.mxu0 0.0
        %2189 = vmatpush.msra.mxu0 0.0
        %2190 = vmatpush.msra.mxu0 0.0
        %2191 = vmatpush.msra.mxu0 0.0
        %2192 = vmatpush.msra.mxu0 0.0
        %2193 = vmatpush.msra.mxu0 0.0
        %2194 = vmatpush.msra.mxu0 %v2174
        %2195 = vmatmul.f32.gmra.mxu0 %v2177
        %v2196 = vpop.f32.mrf.mxu0
        %v2197 = vadd.f32 %v2093, %v2196
        %2198 = vdwg.mxu0
        %2199 = vrot.lane.b32.xlu0 %v1085, 88
        %v2200 = vpop.permute.xlu0 %2199
        %v2203 = vsel %vm1116, %v1916, 0
        %2205 = vmatpush.msra.mxu0 0.0
        %2206 = vmatpush.msra.mxu0 0.0
        %2207 = vmatpush.msra.mxu0 0.0
        %2208 = vmatpush.msra.mxu0 0.0
        %2209 = vmatpush.msra.mxu0 0.0
        %2210 = vmatpush.msra.mxu0 0.0
        %2211 = vmatpush.msra.mxu0 0.0
        %2212 = vmatpush.msra.mxu0 0.0
        %2213 = vmatpush.msra.mxu0 0.0
        %2214 = vmatpush.msra.mxu0 0.0
        %2215 = vmatpush.msra.mxu0 0.0
        %2216 = vmatpush.msra.mxu0 0.0
        %2217 = vmatpush.msra.mxu0 0.0
        %2218 = vmatpush.msra.mxu0 0.0
        %2219 = vmatpush.msra.mxu0 0.0
        %2220 = vmatpush.msra.mxu0 %v2200
        %2221 = vmatmul.f32.gmra.mxu0 %v2203
        %v2222 = vpop.f32.mrf.mxu0
        %v2223 = vadd.f32 %v2119, %v2222
        %2224 = vdwg.mxu0
        %v2225 = vmul.f32 %v2145, %v1971
        %v2226 = vmul.f32 %v2171, %v1986
        %v2227 = vmul.f32 %v2197, %v2001
        %v2228 = vmul.f32 %v2223, %v2016
        %2233 = vrot.lane.b32.xlu0 %v2225, 8
        %v2234 = vpop.permute.xlu0 %2233
        %2235 = vrot.lane.b32.xlu0 %v2226, 8
        %v2236 = vpop.permute.xlu0 %2235
        %2237 = vrot.lane.b32.xlu0 %v2227, 8
        %v2238 = vpop.permute.xlu0 %2237
        %2239 = vrot.lane.b32.xlu0 %v2228, 8
        %v2240 = vpop.permute.xlu0 %2239
        %vm2245 = vcmask 130112
        %2246 = vst.msk [vmem:[#allocation4] sm:$0xff] %vm2245, %v2234
        %2247 = vst.msk [vmem:[#allocation4 + $0x8] sm:$0xff] %vm2245, %v2236
        %2248 = vst.msk [vmem:[#allocation4 + $0x10] sm:$0xff] %vm2245, %v2238
        %2249 = vst.msk [vmem:[#allocation4 + $0x18] sm:$0xff] %vm2245, %v2240
        %2250 = vrot.lane.b32.xlu0 %v1035, 112
        %v2251 = vpop.permute.xlu0 %2250
        %2252 = vrot.lane.b32.xlu0 %v1076, 112
        %v2253 = vpop.permute.xlu0 %2252
        %v2254 = vsel %vm1116, %v2251, 0
        %v2256 = vsel %vm1116, %v2253, 0
        %2258 = vmatpush.xpose.msra.mxu0 0.0
        %2259 = vmatpush.xpose.msra.mxu0 0.0
        %2260 = vmatpush.xpose.msra.mxu0 0.0
        %2261 = vmatpush.xpose.msra.mxu0 0.0
        %2262 = vmatpush.xpose.msra.mxu0 0.0
        %2263 = vmatpush.xpose.msra.mxu0 0.0
        %2264 = vmatpush.xpose.msra.mxu0 0.0
        %2265 = vmatpush.xpose.msra.mxu0 0.0
        %2266 = vmatpush.xpose.msra.mxu0 0.0
        %2267 = vmatpush.xpose.msra.mxu0 0.0
        %2268 = vmatpush.xpose.msra.mxu0 0.0
        %2269 = vmatpush.xpose.msra.mxu0 0.0
        %2270 = vmatpush.xpose.msra.mxu0 0.0
        %2271 = vmatpush.xpose.msra.mxu0 0.0
        %2272 = vmatpush.xpose.msra.mxu0 0.0
        %2273 = vmatpush.xpose.msra.mxu0 %v2256
        %2274 = vmatmul.f32.gmra.mxu0 %v2254
        %v2275 = vpop.f32.mrf.mxu0
        %v2276 = vadd.f32 0.0, %v2275
        %2277 = vdwg.mxu0
        %2278 = vrot.lane.b32.xlu0 %v1038, 112
        %v2279 = vpop.permute.xlu0 %2278
        %2280 = vrot.lane.b32.xlu0 %v1079, 112
        %v2281 = vpop.permute.xlu0 %2280
        %v2282 = vsel %vm1116, %v2279, 0
        %v2284 = vsel %vm1116, %v2281, 0
        %2286 = vmatpush.xpose.msra.mxu0 0.0
        %2287 = vmatpush.xpose.msra.mxu0 0.0
        %2288 = vmatpush.xpose.msra.mxu0 0.0
        %2289 = vmatpush.xpose.msra.mxu0 0.0
        %2290 = vmatpush.xpose.msra.mxu0 0.0
        %2291 = vmatpush.xpose.msra.mxu0 0.0
        %2292 = vmatpush.xpose.msra.mxu0 0.0
        %2293 = vmatpush.xpose.msra.mxu0 0.0
        %2294 = vmatpush.xpose.msra.mxu0 0.0
        %2295 = vmatpush.xpose.msra.mxu0 0.0
        %2296 = vmatpush.xpose.msra.mxu0 0.0
        %2297 = vmatpush.xpose.msra.mxu0 0.0
        %2298 = vmatpush.xpose.msra.mxu0 0.0
        %2299 = vmatpush.xpose.msra.mxu0 0.0
        %2300 = vmatpush.xpose.msra.mxu0 0.0
        %2301 = vmatpush.xpose.msra.mxu0 %v2284
        %2302 = vmatmul.f32.gmra.mxu0 %v2282
        %v2303 = vpop.f32.mrf.mxu0
        %v2304 = vadd.f32 0.0, %v2303
        %2305 = vdwg.mxu0
        %2306 = vrot.lane.b32.xlu0 %v1041, 112
        %v2307 = vpop.permute.xlu0 %2306
        %2308 = vrot.lane.b32.xlu0 %v1082, 112
        %v2309 = vpop.permute.xlu0 %2308
        %v2310 = vsel %vm1116, %v2307, 0
        %v2312 = vsel %vm1116, %v2309, 0
        %2314 = vmatpush.xpose.msra.mxu0 0.0
        %2315 = vmatpush.xpose.msra.mxu0 0.0
        %2316 = vmatpush.xpose.msra.mxu0 0.0
        %2317 = vmatpush.xpose.msra.mxu0 0.0
        %2318 = vmatpush.xpose.msra.mxu0 0.0
        %2319 = vmatpush.xpose.msra.mxu0 0.0
        %2320 = vmatpush.xpose.msra.mxu0 0.0
        %2321 = vmatpush.xpose.msra.mxu0 0.0
        %2322 = vmatpush.xpose.msra.mxu0 0.0
        %2323 = vmatpush.xpose.msra.mxu0 0.0
        %2324 = vmatpush.xpose.msra.mxu0 0.0
        %2325 = vmatpush.xpose.msra.mxu0 0.0
        %2326 = vmatpush.xpose.msra.mxu0 0.0
        %2327 = vmatpush.xpose.msra.mxu0 0.0
        %2328 = vmatpush.xpose.msra.mxu0 0.0
        %2329 = vmatpush.xpose.msra.mxu0 %v2312
        %2330 = vmatmul.f32.gmra.mxu0 %v2310
        %v2331 = vpop.f32.mrf.mxu0
        %v2332 = vadd.f32 0.0, %v2331
        %2333 = vdwg.mxu0
        %2334 = vrot.lane.b32.xlu0 %v1044, 112
        %v2335 = vpop.permute.xlu0 %2334
        %2336 = vrot.lane.b32.xlu0 %v1085, 112
        %v2337 = vpop.permute.xlu0 %2336
        %v2338 = vsel %vm1116, %v2335, 0
        %v2340 = vsel %vm1116, %v2337, 0
        %2342 = vmatpush.xpose.msra.mxu0 0.0
        %2343 = vmatpush.xpose.msra.mxu0 0.0
        %2344 = vmatpush.xpose.msra.mxu0 0.0
        %2345 = vmatpush.xpose.msra.mxu0 0.0
        %2346 = vmatpush.xpose.msra.mxu0 0.0
        %2347 = vmatpush.xpose.msra.mxu0 0.0
        %2348 = vmatpush.xpose.msra.mxu0 0.0
        %2349 = vmatpush.xpose.msra.mxu0 0.0
        %2350 = vmatpush.xpose.msra.mxu0 0.0
        %2351 = vmatpush.xpose.msra.mxu0 0.0
        %2352 = vmatpush.xpose.msra.mxu0 0.0
        %2353 = vmatpush.xpose.msra.mxu0 0.0
        %2354 = vmatpush.xpose.msra.mxu0 0.0
        %2355 = vmatpush.xpose.msra.mxu0 0.0
        %2356 = vmatpush.xpose.msra.mxu0 0.0
        %2357 = vmatpush.xpose.msra.mxu0 %v2340
        %2358 = vmatmul.f32.gmra.mxu0 %v2338
        %v2359 = vpop.f32.mrf.mxu0
        %v2360 = vadd.f32 0.0, %v2359
        %2361 = vdwg.mxu0
        %2362 = vrot.lane.b32.xlu0 %v1105, 112
        %v2363 = vpop.permute.xlu0 %2362
        %v2364 = vsel %vm1116, %v2363, 0
        %2366 = vmatpush.xpose.msra.mxu0 0.0
        %2367 = vmatpush.xpose.msra.mxu0 0.0
        %2368 = vmatpush.xpose.msra.mxu0 0.0
        %2369 = vmatpush.xpose.msra.mxu0 0.0
        %2370 = vmatpush.xpose.msra.mxu0 0.0
        %2371 = vmatpush.xpose.msra.mxu0 0.0
        %2372 = vmatpush.xpose.msra.mxu0 0.0
        %2373 = vmatpush.xpose.msra.mxu0 0.0
        %2374 = vmatpush.xpose.msra.mxu0 0.0
        %2375 = vmatpush.xpose.msra.mxu0 0.0
        %2376 = vmatpush.xpose.msra.mxu0 0.0
        %2377 = vmatpush.xpose.msra.mxu0 0.0
        %2378 = vmatpush.xpose.msra.mxu0 0.0
        %2379 = vmatpush.xpose.msra.mxu0 0.0
        %2380 = vmatpush.xpose.msra.mxu0 0.0
        %2381 = vmatpush.xpose.msra.mxu0 %v2364
        %2382 = vmatmul.f32.gmra.mxu0 %v2254
        %v2383 = vpop.f32.mrf.mxu0
        %v2384 = vadd.f32 0.0, %v2383
        %2385 = vdwg.mxu0
        %2386 = vrot.lane.b32.xlu0 %v1108, 112
        %v2387 = vpop.permute.xlu0 %2386
        %v2388 = vsel %vm1116, %v2387, 0
        %2390 = vmatpush.xpose.msra.mxu0 0.0
        %2391 = vmatpush.xpose.msra.mxu0 0.0
        %2392 = vmatpush.xpose.msra.mxu0 0.0
        %2393 = vmatpush.xpose.msra.mxu0 0.0
        %2394 = vmatpush.xpose.msra.mxu0 0.0
        %2395 = vmatpush.xpose.msra.mxu0 0.0
        %2396 = vmatpush.xpose.msra.mxu0 0.0
        %2397 = vmatpush.xpose.msra.mxu0 0.0
        %2398 = vmatpush.xpose.msra.mxu0 0.0
        %2399 = vmatpush.xpose.msra.mxu0 0.0
        %2400 = vmatpush.xpose.msra.mxu0 0.0
        %2401 = vmatpush.xpose.msra.mxu0 0.0
        %2402 = vmatpush.xpose.msra.mxu0 0.0
        %2403 = vmatpush.xpose.msra.mxu0 0.0
        %2404 = vmatpush.xpose.msra.mxu0 0.0
        %2405 = vmatpush.xpose.msra.mxu0 %v2388
        %2406 = vmatmul.f32.gmra.mxu0 %v2282
        %v2407 = vpop.f32.mrf.mxu0
        %v2408 = vadd.f32 0.0, %v2407
        %2409 = vdwg.mxu0
        %2410 = vrot.lane.b32.xlu0 %v1111, 112
        %v2411 = vpop.permute.xlu0 %2410
        %v2412 = vsel %vm1116, %v2411, 0
        %2414 = vmatpush.xpose.msra.mxu0 0.0
        %2415 = vmatpush.xpose.msra.mxu0 0.0
        %2416 = vmatpush.xpose.msra.mxu0 0.0
        %2417 = vmatpush.xpose.msra.mxu0 0.0
        %2418 = vmatpush.xpose.msra.mxu0 0.0
        %2419 = vmatpush.xpose.msra.mxu0 0.0
        %2420 = vmatpush.xpose.msra.mxu0 0.0
        %2421 = vmatpush.xpose.msra.mxu0 0.0
        %2422 = vmatpush.xpose.msra.mxu0 0.0
        %2423 = vmatpush.xpose.msra.mxu0 0.0
        %2424 = vmatpush.xpose.msra.mxu0 0.0
        %2425 = vmatpush.xpose.msra.mxu0 0.0
        %2426 = vmatpush.xpose.msra.mxu0 0.0
        %2427 = vmatpush.xpose.msra.mxu0 0.0
        %2428 = vmatpush.xpose.msra.mxu0 0.0
        %2429 = vmatpush.xpose.msra.mxu0 %v2412
        %2430 = vmatmul.f32.gmra.mxu0 %v2310
        %v2431 = vpop.f32.mrf.mxu0
        %v2432 = vadd.f32 0.0, %v2431
        %2433 = vdwg.mxu0
        %2434 = vrot.lane.b32.xlu0 %v1114, 112
        %v2435 = vpop.permute.xlu0 %2434
        %v2436 = vsel %vm1116, %v2435, 0
        %2438 = vmatpush.xpose.msra.mxu0 0.0
        %2439 = vmatpush.xpose.msra.mxu0 0.0
        %2440 = vmatpush.xpose.msra.mxu0 0.0
        %2441 = vmatpush.xpose.msra.mxu0 0.0
        %2442 = vmatpush.xpose.msra.mxu0 0.0
        %2443 = vmatpush.xpose.msra.mxu0 0.0
        %2444 = vmatpush.xpose.msra.mxu0 0.0
        %2445 = vmatpush.xpose.msra.mxu0 0.0
        %2446 = vmatpush.xpose.msra.mxu0 0.0
        %2447 = vmatpush.xpose.msra.mxu0 0.0
        %2448 = vmatpush.xpose.msra.mxu0 0.0
        %2449 = vmatpush.xpose.msra.mxu0 0.0
        %2450 = vmatpush.xpose.msra.mxu0 0.0
        %2451 = vmatpush.xpose.msra.mxu0 0.0
        %2452 = vmatpush.xpose.msra.mxu0 0.0
        %2453 = vmatpush.xpose.msra.mxu0 %v2436
        %2454 = vmatmul.f32.gmra.mxu0 %v2338
        %v2455 = vpop.f32.mrf.mxu0
        %v2456 = vadd.f32 0.0, %v2455
        %2457 = vdwg.mxu0
        %v2458 = vsel %vm1116, %v2276, -inf
        %2459 = vmax.xlane.f32.xlu0 %v2458
        %v2460 = vpop.xlane.xlu0 %2459
        %v2461 = vsel %vm1116, %v2304, -inf
        %2462 = vmax.xlane.f32.xlu0 %v2461
        %v2463 = vpop.xlane.xlu0 %2462
        %v2464 = vsel %vm1116, %v2332, -inf
        %2465 = vmax.xlane.f32.xlu0 %v2464
        %v2466 = vpop.xlane.xlu0 %2465
        %v2467 = vsel %vm1116, %v2360, -inf
        %2468 = vmax.xlane.f32.xlu0 %v2467
        %v2469 = vpop.xlane.xlu0 %2468
        %v2470 = vsel %vm1116, %v2384, -inf
        %2471 = vmax.xlane.f32.xlu0 %v2470
        %v2472 = vpop.xlane.xlu0 %2471
        %v2473 = vsel %vm1116, %v2408, -inf
        %2474 = vmax.xlane.f32.xlu0 %v2473
        %v2475 = vpop.xlane.xlu0 %2474
        %v2476 = vsel %vm1116, %v2432, -inf
        %2477 = vmax.xlane.f32.xlu0 %v2476
        %v2478 = vpop.xlane.xlu0 %2477
        %v2479 = vsel %vm1116, %v2456, -inf
        %2480 = vmax.xlane.f32.xlu0 %v2479
        %v2481 = vpop.xlane.xlu0 %2480
        %v2482 = vmax.f32 %v2460, %v2472
        %v2483 = vmax.f32 %v2463, %v2475
        %v2484 = vmax.f32 %v2466, %v2478
        %v2485 = vmax.f32 %v2469, %v2481
        %v2486 = vsub.f32 %v2276, %v2482
        %v2487 = vsub.f32 %v2304, %v2483
        %v2488 = vsub.f32 %v2332, %v2484
        %v2489 = vsub.f32 %v2360, %v2485
        %v2490 = vmul.f32 %v2486, 1.442695
        %v2491 = vpow.pop %v2490
        %v2492 = vmul.f32 %v2487, 1.442695
        %v2493 = vpow.pop %v2492
        %v2494 = vmul.f32 %v2488, 1.442695
        %v2495 = vpow.pop %v2494
        %v2496 = vmul.f32 %v2489, 1.442695
        %v2497 = vpow.pop %v2496
        %v2498 = vsub.f32 %v2384, %v2482
        %v2499 = vsub.f32 %v2408, %v2483
        %v2500 = vsub.f32 %v2432, %v2484
        %v2501 = vsub.f32 %v2456, %v2485
        %v2502 = vmul.f32 %v2498, 1.442695
        %v2503 = vpow.pop %v2502
        %v2504 = vmul.f32 %v2499, 1.442695
        %v2505 = vpow.pop %v2504
        %v2506 = vmul.f32 %v2500, 1.442695
        %v2507 = vpow.pop %v2506
        %v2508 = vmul.f32 %v2501, 1.442695
        %v2509 = vpow.pop %v2508
        %v2510 = vsel %vm1116, %v2491, 0.0
        %2511 = vadd.xlane.f32.xlu0 %v2510
        %v2512 = vpop.xlane.xlu0 %2511
        %v2513 = vsel %vm1116, %v2493, 0.0
        %2514 = vadd.xlane.f32.xlu0 %v2513
        %v2515 = vpop.xlane.xlu0 %2514
        %v2516 = vsel %vm1116, %v2495, 0.0
        %2517 = vadd.xlane.f32.xlu0 %v2516
        %v2518 = vpop.xlane.xlu0 %2517
        %v2519 = vsel %vm1116, %v2497, 0.0
        %2520 = vadd.xlane.f32.xlu0 %v2519
        %v2521 = vpop.xlane.xlu0 %2520
        %v2522 = vsel %vm1116, %v2503, 0.0
        %2523 = vadd.xlane.f32.xlu0 %v2522
        %v2524 = vpop.xlane.xlu0 %2523
        %v2525 = vsel %vm1116, %v2505, 0.0
        %2526 = vadd.xlane.f32.xlu0 %v2525
        %v2527 = vpop.xlane.xlu0 %2526
        %v2528 = vsel %vm1116, %v2507, 0.0
        %2529 = vadd.xlane.f32.xlu0 %v2528
        %v2530 = vpop.xlane.xlu0 %2529
        %v2531 = vsel %vm1116, %v2509, 0.0
        %2532 = vadd.xlane.f32.xlu0 %v2531
        %v2533 = vpop.xlane.xlu0 %2532
        %v2534 = vadd.f32 %v2512, %v2524
        %v2535 = vadd.f32 %v2515, %v2527
        %v2536 = vadd.f32 %v2518, %v2530
        %v2537 = vadd.f32 %v2521, %v2533
        %v2538 = vrcp.pop %v2534
        %v2539 = vmul.f32 %v2534, %v2538
        %v2540 = vsub.f32 1.0, %v2539
        %v2541 = vmul.f32 %v2538, %v2540
        %v2542 = vadd.f32 %v2538, %v2541
        %vm2543 = vweird.f32 %v2534
        %vm2544 = vweird.f32 %v2538
        %vm2545 = vmor %vm2543, %vm2544
        %v2546 = vsel %vm2545, %v2538, %v2542
        %v2547 = vand.u32 2147483647, %v2534
        %vm2548 = vcmp.eq.f32.partialorder %v2547, 8.507059e+37
        %v2549 = vand.u32 %v2534, 2147483648
        %v2550 = vor.u32 1.1754944e-38, %v2549
        %v2551 = vsel %vm2548, %v2550, %v2546
        %v2552 = vmul.f32 1.0, %v2551
        %v2553 = vrcp.pop %v2535
        %v2554 = vmul.f32 %v2535, %v2553
        %v2555 = vsub.f32 1.0, %v2554
        %v2556 = vmul.f32 %v2553, %v2555
        %v2557 = vadd.f32 %v2553, %v2556
        %vm2558 = vweird.f32 %v2535
        %vm2559 = vweird.f32 %v2553
        %vm2560 = vmor %vm2558, %vm2559
        %v2561 = vsel %vm2560, %v2553, %v2557
        %v2562 = vand.u32 2147483647, %v2535
        %vm2563 = vcmp.eq.f32.partialorder %v2562, 8.507059e+37
        %v2564 = vand.u32 %v2535, 2147483648
        %v2565 = vor.u32 1.1754944e-38, %v2564
        %v2566 = vsel %vm2563, %v2565, %v2561
        %v2567 = vmul.f32 1.0, %v2566
        %v2568 = vrcp.pop %v2536
        %v2569 = vmul.f32 %v2536, %v2568
        %v2570 = vsub.f32 1.0, %v2569
        %v2571 = vmul.f32 %v2568, %v2570
        %v2572 = vadd.f32 %v2568, %v2571
        %vm2573 = vweird.f32 %v2536
        %vm2574 = vweird.f32 %v2568
        %vm2575 = vmor %vm2573, %vm2574
        %v2576 = vsel %vm2575, %v2568, %v2572
        %v2577 = vand.u32 2147483647, %v2536
        %vm2578 = vcmp.eq.f32.partialorder %v2577, 8.507059e+37
        %v2579 = vand.u32 %v2536, 2147483648
        %v2580 = vor.u32 1.1754944e-38, %v2579
        %v2581 = vsel %vm2578, %v2580, %v2576
        %v2582 = vmul.f32 1.0, %v2581
        %v2583 = vrcp.pop %v2537
        %v2584 = vmul.f32 %v2537, %v2583
        %v2585 = vsub.f32 1.0, %v2584
        %v2586 = vmul.f32 %v2583, %v2585
        %v2587 = vadd.f32 %v2583, %v2586
        %vm2588 = vweird.f32 %v2537
        %vm2589 = vweird.f32 %v2583
        %vm2590 = vmor %vm2588, %vm2589
        %v2591 = vsel %vm2590, %v2583, %v2587
        %v2592 = vand.u32 2147483647, %v2537
        %vm2593 = vcmp.eq.f32.partialorder %v2592, 8.507059e+37
        %v2594 = vand.u32 %v2537, 2147483648
        %v2595 = vor.u32 1.1754944e-38, %v2594
        %v2596 = vsel %vm2593, %v2595, %v2591
        %v2597 = vmul.f32 1.0, %v2596
        %2598 = vrot.lane.b32.xlu0 %v1105, 80
        %v2599 = vpop.permute.xlu0 %2598
        %v2602 = vsel %vm1116, %v2503, 0
        %2604 = vmatpush.msra.mxu0 0.0
        %2605 = vmatpush.msra.mxu0 0.0
        %2606 = vmatpush.msra.mxu0 0.0
        %2607 = vmatpush.msra.mxu0 0.0
        %2608 = vmatpush.msra.mxu0 0.0
        %2609 = vmatpush.msra.mxu0 0.0
        %2610 = vmatpush.msra.mxu0 0.0
        %2611 = vmatpush.msra.mxu0 0.0
        %2612 = vmatpush.msra.mxu0 0.0
        %2613 = vmatpush.msra.mxu0 0.0
        %2614 = vmatpush.msra.mxu0 0.0
        %2615 = vmatpush.msra.mxu0 0.0
        %2616 = vmatpush.msra.mxu0 0.0
        %2617 = vmatpush.msra.mxu0 0.0
        %2618 = vmatpush.msra.mxu0 0.0
        %2619 = vmatpush.msra.mxu0 %v2599
        %2620 = vmatmul.f32.gmra.mxu0 %v2602
        %v2621 = vpop.f32.mrf.mxu0
        %v2622 = vadd.f32 0.0, %v2621
        %2623 = vdwg.mxu0
        %2624 = vrot.lane.b32.xlu0 %v1108, 80
        %v2625 = vpop.permute.xlu0 %2624
        %v2628 = vsel %vm1116, %v2505, 0
        %2630 = vmatpush.msra.mxu0 0.0
        %2631 = vmatpush.msra.mxu0 0.0
        %2632 = vmatpush.msra.mxu0 0.0
        %2633 = vmatpush.msra.mxu0 0.0
        %2634 = vmatpush.msra.mxu0 0.0
        %2635 = vmatpush.msra.mxu0 0.0
        %2636 = vmatpush.msra.mxu0 0.0
        %2637 = vmatpush.msra.mxu0 0.0
        %2638 = vmatpush.msra.mxu0 0.0
        %2639 = vmatpush.msra.mxu0 0.0
        %2640 = vmatpush.msra.mxu0 0.0
        %2641 = vmatpush.msra.mxu0 0.0
        %2642 = vmatpush.msra.mxu0 0.0
        %2643 = vmatpush.msra.mxu0 0.0
        %2644 = vmatpush.msra.mxu0 0.0
        %2645 = vmatpush.msra.mxu0 %v2625
        %2646 = vmatmul.f32.gmra.mxu0 %v2628
        %v2647 = vpop.f32.mrf.mxu0
        %v2648 = vadd.f32 0.0, %v2647
        %2649 = vdwg.mxu0
        %2650 = vrot.lane.b32.xlu0 %v1111, 80
        %v2651 = vpop.permute.xlu0 %2650
        %v2654 = vsel %vm1116, %v2507, 0
        %2656 = vmatpush.msra.mxu0 0.0
        %2657 = vmatpush.msra.mxu0 0.0
        %2658 = vmatpush.msra.mxu0 0.0
        %2659 = vmatpush.msra.mxu0 0.0
        %2660 = vmatpush.msra.mxu0 0.0
        %2661 = vmatpush.msra.mxu0 0.0
        %2662 = vmatpush.msra.mxu0 0.0
        %2663 = vmatpush.msra.mxu0 0.0
        %2664 = vmatpush.msra.mxu0 0.0
        %2665 = vmatpush.msra.mxu0 0.0
        %2666 = vmatpush.msra.mxu0 0.0
        %2667 = vmatpush.msra.mxu0 0.0
        %2668 = vmatpush.msra.mxu0 0.0
        %2669 = vmatpush.msra.mxu0 0.0
        %2670 = vmatpush.msra.mxu0 0.0
        %2671 = vmatpush.msra.mxu0 %v2651
        %2672 = vmatmul.f32.gmra.mxu0 %v2654
        %v2673 = vpop.f32.mrf.mxu0
        %v2674 = vadd.f32 0.0, %v2673
        %2675 = vdwg.mxu0
        %2676 = vrot.lane.b32.xlu0 %v1114, 80
        %v2677 = vpop.permute.xlu0 %2676
        %v2680 = vsel %vm1116, %v2509, 0
        %2682 = vmatpush.msra.mxu0 0.0
        %2683 = vmatpush.msra.mxu0 0.0
        %2684 = vmatpush.msra.mxu0 0.0
        %2685 = vmatpush.msra.mxu0 0.0
        %2686 = vmatpush.msra.mxu0 0.0
        %2687 = vmatpush.msra.mxu0 0.0
        %2688 = vmatpush.msra.mxu0 0.0
        %2689 = vmatpush.msra.mxu0 0.0
        %2690 = vmatpush.msra.mxu0 0.0
        %2691 = vmatpush.msra.mxu0 0.0
        %2692 = vmatpush.msra.mxu0 0.0
        %2693 = vmatpush.msra.mxu0 0.0
        %2694 = vmatpush.msra.mxu0 0.0
        %2695 = vmatpush.msra.mxu0 0.0
        %2696 = vmatpush.msra.mxu0 0.0
        %2697 = vmatpush.msra.mxu0 %v2677
        %2698 = vmatmul.f32.gmra.mxu0 %v2680
        %v2699 = vpop.f32.mrf.mxu0
        %v2700 = vadd.f32 0.0, %v2699
        %2701 = vdwg.mxu0
        %2702 = vrot.lane.b32.xlu0 %v1076, 80
        %v2703 = vpop.permute.xlu0 %2702
        %v2706 = vsel %vm1116, %v2491, 0
        %2708 = vmatpush.msra.mxu0 0.0
        %2709 = vmatpush.msra.mxu0 0.0
        %2710 = vmatpush.msra.mxu0 0.0
        %2711 = vmatpush.msra.mxu0 0.0
        %2712 = vmatpush.msra.mxu0 0.0
        %2713 = vmatpush.msra.mxu0 0.0
        %2714 = vmatpush.msra.mxu0 0.0
        %2715 = vmatpush.msra.mxu0 0.0
        %2716 = vmatpush.msra.mxu0 0.0
        %2717 = vmatpush.msra.mxu0 0.0
        %2718 = vmatpush.msra.mxu0 0.0
        %2719 = vmatpush.msra.mxu0 0.0
        %2720 = vmatpush.msra.mxu0 0.0
        %2721 = vmatpush.msra.mxu0 0.0
        %2722 = vmatpush.msra.mxu0 0.0
        %2723 = vmatpush.msra.mxu0 %v2703
        %2724 = vmatmul.f32.gmra.mxu0 %v2706
        %v2725 = vpop.f32.mrf.mxu0
        %v2726 = vadd.f32 %v2622, %v2725
        %2727 = vdwg.mxu0
        %2728 = vrot.lane.b32.xlu0 %v1079, 80
        %v2729 = vpop.permute.xlu0 %2728
        %v2732 = vsel %vm1116, %v2493, 0
        %2734 = vmatpush.msra.mxu0 0.0
        %2735 = vmatpush.msra.mxu0 0.0
        %2736 = vmatpush.msra.mxu0 0.0
        %2737 = vmatpush.msra.mxu0 0.0
        %2738 = vmatpush.msra.mxu0 0.0
        %2739 = vmatpush.msra.mxu0 0.0
        %2740 = vmatpush.msra.mxu0 0.0
        %2741 = vmatpush.msra.mxu0 0.0
        %2742 = vmatpush.msra.mxu0 0.0
        %2743 = vmatpush.msra.mxu0 0.0
        %2744 = vmatpush.msra.mxu0 0.0
        %2745 = vmatpush.msra.mxu0 0.0
        %2746 = vmatpush.msra.mxu0 0.0
        %2747 = vmatpush.msra.mxu0 0.0
        %2748 = vmatpush.msra.mxu0 0.0
        %2749 = vmatpush.msra.mxu0 %v2729
        %2750 = vmatmul.f32.gmra.mxu0 %v2732
        %v2751 = vpop.f32.mrf.mxu0
        %v2752 = vadd.f32 %v2648, %v2751
        %2753 = vdwg.mxu0
        %2754 = vrot.lane.b32.xlu0 %v1082, 80
        %v2755 = vpop.permute.xlu0 %2754
        %v2758 = vsel %vm1116, %v2495, 0
        %2760 = vmatpush.msra.mxu0 0.0
        %2761 = vmatpush.msra.mxu0 0.0
        %2762 = vmatpush.msra.mxu0 0.0
        %2763 = vmatpush.msra.mxu0 0.0
        %2764 = vmatpush.msra.mxu0 0.0
        %2765 = vmatpush.msra.mxu0 0.0
        %2766 = vmatpush.msra.mxu0 0.0
        %2767 = vmatpush.msra.mxu0 0.0
        %2768 = vmatpush.msra.mxu0 0.0
        %2769 = vmatpush.msra.mxu0 0.0
        %2770 = vmatpush.msra.mxu0 0.0
        %2771 = vmatpush.msra.mxu0 0.0
        %2772 = vmatpush.msra.mxu0 0.0
        %2773 = vmatpush.msra.mxu0 0.0
        %2774 = vmatpush.msra.mxu0 0.0
        %2775 = vmatpush.msra.mxu0 %v2755
        %2776 = vmatmul.f32.gmra.mxu0 %v2758
        %v2777 = vpop.f32.mrf.mxu0
        %v2778 = vadd.f32 %v2674, %v2777
        %2779 = vdwg.mxu0
        %2780 = vrot.lane.b32.xlu0 %v1085, 80
        %v2781 = vpop.permute.xlu0 %2780
        %v2784 = vsel %vm1116, %v2497, 0
        %2786 = vmatpush.msra.mxu0 0.0
        %2787 = vmatpush.msra.mxu0 0.0
        %2788 = vmatpush.msra.mxu0 0.0
        %2789 = vmatpush.msra.mxu0 0.0
        %2790 = vmatpush.msra.mxu0 0.0
        %2791 = vmatpush.msra.mxu0 0.0
        %2792 = vmatpush.msra.mxu0 0.0
        %2793 = vmatpush.msra.mxu0 0.0
        %2794 = vmatpush.msra.mxu0 0.0
        %2795 = vmatpush.msra.mxu0 0.0
        %2796 = vmatpush.msra.mxu0 0.0
        %2797 = vmatpush.msra.mxu0 0.0
        %2798 = vmatpush.msra.mxu0 0.0
        %2799 = vmatpush.msra.mxu0 0.0
        %2800 = vmatpush.msra.mxu0 0.0
        %2801 = vmatpush.msra.mxu0 %v2781
        %2802 = vmatmul.f32.gmra.mxu0 %v2784
        %v2803 = vpop.f32.mrf.mxu0
        %v2804 = vadd.f32 %v2700, %v2803
        %2805 = vdwg.mxu0
        %v2806 = vmul.f32 %v2726, %v2552
        %v2807 = vmul.f32 %v2752, %v2567
        %v2808 = vmul.f32 %v2778, %v2582
        %v2809 = vmul.f32 %v2804, %v2597
        %2814 = vrot.lane.b32.xlu0 %v2806, 16
        %v2815 = vpop.permute.xlu0 %2814
        %2816 = vrot.lane.b32.xlu0 %v2807, 16
        %v2817 = vpop.permute.xlu0 %2816
        %2818 = vrot.lane.b32.xlu0 %v2808, 16
        %v2819 = vpop.permute.xlu0 %2818
        %2820 = vrot.lane.b32.xlu0 %v2809, 16
        %v2821 = vpop.permute.xlu0 %2820
        %vm2826 = vcmask 195712
        %2827 = vst.msk [vmem:[#allocation4] sm:$0xff] %vm2826, %v2815
        %2828 = vst.msk [vmem:[#allocation4 + $0x8] sm:$0xff] %vm2826, %v2817
        %2829 = vst.msk [vmem:[#allocation4 + $0x10] sm:$0xff] %vm2826, %v2819
        %2830 = vst.msk [vmem:[#allocation4 + $0x18] sm:$0xff] %vm2826, %v2821
        %2831 = vrot.lane.b32.xlu0 %v1035, 104
        %v2832 = vpop.permute.xlu0 %2831
        %2833 = vrot.lane.b32.xlu0 %v1076, 104
        %v2834 = vpop.permute.xlu0 %2833
        %v2835 = vsel %vm1116, %v2832, 0
        %v2837 = vsel %vm1116, %v2834, 0
        %2839 = vmatpush.xpose.msra.mxu0 0.0
        %2840 = vmatpush.xpose.msra.mxu0 0.0
        %2841 = vmatpush.xpose.msra.mxu0 0.0
        %2842 = vmatpush.xpose.msra.mxu0 0.0
        %2843 = vmatpush.xpose.msra.mxu0 0.0
        %2844 = vmatpush.xpose.msra.mxu0 0.0
        %2845 = vmatpush.xpose.msra.mxu0 0.0
        %2846 = vmatpush.xpose.msra.mxu0 0.0
        %2847 = vmatpush.xpose.msra.mxu0 0.0
        %2848 = vmatpush.xpose.msra.mxu0 0.0
        %2849 = vmatpush.xpose.msra.mxu0 0.0
        %2850 = vmatpush.xpose.msra.mxu0 0.0
        %2851 = vmatpush.xpose.msra.mxu0 0.0
        %2852 = vmatpush.xpose.msra.mxu0 0.0
        %2853 = vmatpush.xpose.msra.mxu0 0.0
        %2854 = vmatpush.xpose.msra.mxu0 %v2837
        %2855 = vmatmul.f32.gmra.mxu0 %v2835
        %v2856 = vpop.f32.mrf.mxu0
        %v2857 = vadd.f32 0.0, %v2856
        %2858 = vdwg.mxu0
        %2859 = vrot.lane.b32.xlu0 %v1038, 104
        %v2860 = vpop.permute.xlu0 %2859
        %2861 = vrot.lane.b32.xlu0 %v1079, 104
        %v2862 = vpop.permute.xlu0 %2861
        %v2863 = vsel %vm1116, %v2860, 0
        %v2865 = vsel %vm1116, %v2862, 0
        %2867 = vmatpush.xpose.msra.mxu0 0.0
        %2868 = vmatpush.xpose.msra.mxu0 0.0
        %2869 = vmatpush.xpose.msra.mxu0 0.0
        %2870 = vmatpush.xpose.msra.mxu0 0.0
        %2871 = vmatpush.xpose.msra.mxu0 0.0
        %2872 = vmatpush.xpose.msra.mxu0 0.0
        %2873 = vmatpush.xpose.msra.mxu0 0.0
        %2874 = vmatpush.xpose.msra.mxu0 0.0
        %2875 = vmatpush.xpose.msra.mxu0 0.0
        %2876 = vmatpush.xpose.msra.mxu0 0.0
        %2877 = vmatpush.xpose.msra.mxu0 0.0
        %2878 = vmatpush.xpose.msra.mxu0 0.0
        %2879 = vmatpush.xpose.msra.mxu0 0.0
        %2880 = vmatpush.xpose.msra.mxu0 0.0
        %2881 = vmatpush.xpose.msra.mxu0 0.0
        %2882 = vmatpush.xpose.msra.mxu0 %v2865
        %2883 = vmatmul.f32.gmra.mxu0 %v2863
        %v2884 = vpop.f32.mrf.mxu0
        %v2885 = vadd.f32 0.0, %v2884
        %2886 = vdwg.mxu0
        %2887 = vrot.lane.b32.xlu0 %v1041, 104
        %v2888 = vpop.permute.xlu0 %2887
        %2889 = vrot.lane.b32.xlu0 %v1082, 104
        %v2890 = vpop.permute.xlu0 %2889
        %v2891 = vsel %vm1116, %v2888, 0
        %v2893 = vsel %vm1116, %v2890, 0
        %2895 = vmatpush.xpose.msra.mxu0 0.0
        %2896 = vmatpush.xpose.msra.mxu0 0.0
        %2897 = vmatpush.xpose.msra.mxu0 0.0
        %2898 = vmatpush.xpose.msra.mxu0 0.0
        %2899 = vmatpush.xpose.msra.mxu0 0.0
        %2900 = vmatpush.xpose.msra.mxu0 0.0
        %2901 = vmatpush.xpose.msra.mxu0 0.0
        %2902 = vmatpush.xpose.msra.mxu0 0.0
        %2903 = vmatpush.xpose.msra.mxu0 0.0
        %2904 = vmatpush.xpose.msra.mxu0 0.0
        %2905 = vmatpush.xpose.msra.mxu0 0.0
        %2906 = vmatpush.xpose.msra.mxu0 0.0
        %2907 = vmatpush.xpose.msra.mxu0 0.0
        %2908 = vmatpush.xpose.msra.mxu0 0.0
        %2909 = vmatpush.xpose.msra.mxu0 0.0
        %2910 = vmatpush.xpose.msra.mxu0 %v2893
        %2911 = vmatmul.f32.gmra.mxu0 %v2891
        %v2912 = vpop.f32.mrf.mxu0
        %v2913 = vadd.f32 0.0, %v2912
        %2914 = vdwg.mxu0
        %2915 = vrot.lane.b32.xlu0 %v1044, 104
        %v2916 = vpop.permute.xlu0 %2915
        %2917 = vrot.lane.b32.xlu0 %v1085, 104
        %v2918 = vpop.permute.xlu0 %2917
        %v2919 = vsel %vm1116, %v2916, 0
        %v2921 = vsel %vm1116, %v2918, 0
        %2923 = vmatpush.xpose.msra.mxu0 0.0
        %2924 = vmatpush.xpose.msra.mxu0 0.0
        %2925 = vmatpush.xpose.msra.mxu0 0.0
        %2926 = vmatpush.xpose.msra.mxu0 0.0
        %2927 = vmatpush.xpose.msra.mxu0 0.0
        %2928 = vmatpush.xpose.msra.mxu0 0.0
        %2929 = vmatpush.xpose.msra.mxu0 0.0
        %2930 = vmatpush.xpose.msra.mxu0 0.0
        %2931 = vmatpush.xpose.msra.mxu0 0.0
        %2932 = vmatpush.xpose.msra.mxu0 0.0
        %2933 = vmatpush.xpose.msra.mxu0 0.0
        %2934 = vmatpush.xpose.msra.mxu0 0.0
        %2935 = vmatpush.xpose.msra.mxu0 0.0
        %2936 = vmatpush.xpose.msra.mxu0 0.0
        %2937 = vmatpush.xpose.msra.mxu0 0.0
        %2938 = vmatpush.xpose.msra.mxu0 %v2921
        %2939 = vmatmul.f32.gmra.mxu0 %v2919
        %v2940 = vpop.f32.mrf.mxu0
        %v2941 = vadd.f32 0.0, %v2940
        %2942 = vdwg.mxu0
        %2943 = vrot.lane.b32.xlu0 %v1105, 104
        %v2944 = vpop.permute.xlu0 %2943
        %v2945 = vsel %vm1116, %v2944, 0
        %2947 = vmatpush.xpose.msra.mxu0 0.0
        %2948 = vmatpush.xpose.msra.mxu0 0.0
        %2949 = vmatpush.xpose.msra.mxu0 0.0
        %2950 = vmatpush.xpose.msra.mxu0 0.0
        %2951 = vmatpush.xpose.msra.mxu0 0.0
        %2952 = vmatpush.xpose.msra.mxu0 0.0
        %2953 = vmatpush.xpose.msra.mxu0 0.0
        %2954 = vmatpush.xpose.msra.mxu0 0.0
        %2955 = vmatpush.xpose.msra.mxu0 0.0
        %2956 = vmatpush.xpose.msra.mxu0 0.0
        %2957 = vmatpush.xpose.msra.mxu0 0.0
        %2958 = vmatpush.xpose.msra.mxu0 0.0
        %2959 = vmatpush.xpose.msra.mxu0 0.0
        %2960 = vmatpush.xpose.msra.mxu0 0.0
        %2961 = vmatpush.xpose.msra.mxu0 0.0
        %2962 = vmatpush.xpose.msra.mxu0 %v2945
        %2963 = vmatmul.f32.gmra.mxu0 %v2835
        %v2964 = vpop.f32.mrf.mxu0
        %v2965 = vadd.f32 0.0, %v2964
        %2966 = vdwg.mxu0
        %2967 = vrot.lane.b32.xlu0 %v1108, 104
        %v2968 = vpop.permute.xlu0 %2967
        %v2969 = vsel %vm1116, %v2968, 0
        %2971 = vmatpush.xpose.msra.mxu0 0.0
        %2972 = vmatpush.xpose.msra.mxu0 0.0
        %2973 = vmatpush.xpose.msra.mxu0 0.0
        %2974 = vmatpush.xpose.msra.mxu0 0.0
        %2975 = vmatpush.xpose.msra.mxu0 0.0
        %2976 = vmatpush.xpose.msra.mxu0 0.0
        %2977 = vmatpush.xpose.msra.mxu0 0.0
        %2978 = vmatpush.xpose.msra.mxu0 0.0
        %2979 = vmatpush.xpose.msra.mxu0 0.0
        %2980 = vmatpush.xpose.msra.mxu0 0.0
        %2981 = vmatpush.xpose.msra.mxu0 0.0
        %2982 = vmatpush.xpose.msra.mxu0 0.0
        %2983 = vmatpush.xpose.msra.mxu0 0.0
        %2984 = vmatpush.xpose.msra.mxu0 0.0
        %2985 = vmatpush.xpose.msra.mxu0 0.0
        %2986 = vmatpush.xpose.msra.mxu0 %v2969
        %2987 = vmatmul.f32.gmra.mxu0 %v2863
        %v2988 = vpop.f32.mrf.mxu0
        %v2989 = vadd.f32 0.0, %v2988
        %2990 = vdwg.mxu0
        %2991 = vrot.lane.b32.xlu0 %v1111, 104
        %v2992 = vpop.permute.xlu0 %2991
        %v2993 = vsel %vm1116, %v2992, 0
        %2995 = vmatpush.xpose.msra.mxu0 0.0
        %2996 = vmatpush.xpose.msra.mxu0 0.0
        %2997 = vmatpush.xpose.msra.mxu0 0.0
        %2998 = vmatpush.xpose.msra.mxu0 0.0
        %2999 = vmatpush.xpose.msra.mxu0 0.0
        %3000 = vmatpush.xpose.msra.mxu0 0.0
        %3001 = vmatpush.xpose.msra.mxu0 0.0
        %3002 = vmatpush.xpose.msra.mxu0 0.0
        %3003 = vmatpush.xpose.msra.mxu0 0.0
        %3004 = vmatpush.xpose.msra.mxu0 0.0
        %3005 = vmatpush.xpose.msra.mxu0 0.0
        %3006 = vmatpush.xpose.msra.mxu0 0.0
        %3007 = vmatpush.xpose.msra.mxu0 0.0
        %3008 = vmatpush.xpose.msra.mxu0 0.0
        %3009 = vmatpush.xpose.msra.mxu0 0.0
        %3010 = vmatpush.xpose.msra.mxu0 %v2993
        %3011 = vmatmul.f32.gmra.mxu0 %v2891
        %v3012 = vpop.f32.mrf.mxu0
        %v3013 = vadd.f32 0.0, %v3012
        %3014 = vdwg.mxu0
        %3015 = vrot.lane.b32.xlu0 %v1114, 104
        %v3016 = vpop.permute.xlu0 %3015
        %v3017 = vsel %vm1116, %v3016, 0
        %3019 = vmatpush.xpose.msra.mxu0 0.0
        %3020 = vmatpush.xpose.msra.mxu0 0.0
        %3021 = vmatpush.xpose.msra.mxu0 0.0
        %3022 = vmatpush.xpose.msra.mxu0 0.0
        %3023 = vmatpush.xpose.msra.mxu0 0.0
        %3024 = vmatpush.xpose.msra.mxu0 0.0
        %3025 = vmatpush.xpose.msra.mxu0 0.0
        %3026 = vmatpush.xpose.msra.mxu0 0.0
        %3027 = vmatpush.xpose.msra.mxu0 0.0
        %3028 = vmatpush.xpose.msra.mxu0 0.0
        %3029 = vmatpush.xpose.msra.mxu0 0.0
        %3030 = vmatpush.xpose.msra.mxu0 0.0
        %3031 = vmatpush.xpose.msra.mxu0 0.0
        %3032 = vmatpush.xpose.msra.mxu0 0.0
        %3033 = vmatpush.xpose.msra.mxu0 0.0
        %3034 = vmatpush.xpose.msra.mxu0 %v3017
        %3035 = vmatmul.f32.gmra.mxu0 %v2919
        %v3036 = vpop.f32.mrf.mxu0
        %v3037 = vadd.f32 0.0, %v3036
        %3038 = vdwg.mxu0
        %v3039 = vsel %vm1116, %v2857, -inf
        %3040 = vmax.xlane.f32.xlu0 %v3039
        %v3041 = vpop.xlane.xlu0 %3040
        %v3042 = vsel %vm1116, %v2885, -inf
        %3043 = vmax.xlane.f32.xlu0 %v3042
        %v3044 = vpop.xlane.xlu0 %3043
        %v3045 = vsel %vm1116, %v2913, -inf
        %3046 = vmax.xlane.f32.xlu0 %v3045
        %v3047 = vpop.xlane.xlu0 %3046
        %v3048 = vsel %vm1116, %v2941, -inf
        %3049 = vmax.xlane.f32.xlu0 %v3048
        %v3050 = vpop.xlane.xlu0 %3049
        %v3051 = vsel %vm1116, %v2965, -inf
        %3052 = vmax.xlane.f32.xlu0 %v3051
        %v3053 = vpop.xlane.xlu0 %3052
        %v3054 = vsel %vm1116, %v2989, -inf
        %3055 = vmax.xlane.f32.xlu0 %v3054
        %v3056 = vpop.xlane.xlu0 %3055
        %v3057 = vsel %vm1116, %v3013, -inf
        %3058 = vmax.xlane.f32.xlu0 %v3057
        %v3059 = vpop.xlane.xlu0 %3058
        %v3060 = vsel %vm1116, %v3037, -inf
        %3061 = vmax.xlane.f32.xlu0 %v3060
        %v3062 = vpop.xlane.xlu0 %3061
        %v3063 = vmax.f32 %v3041, %v3053
        %v3064 = vmax.f32 %v3044, %v3056
        %v3065 = vmax.f32 %v3047, %v3059
        %v3066 = vmax.f32 %v3050, %v3062
        %v3067 = vsub.f32 %v2857, %v3063
        %v3068 = vsub.f32 %v2885, %v3064
        %v3069 = vsub.f32 %v2913, %v3065
        %v3070 = vsub.f32 %v2941, %v3066
        %v3071 = vmul.f32 %v3067, 1.442695
        %v3072 = vpow.pop %v3071
        %v3073 = vmul.f32 %v3068, 1.442695
        %v3074 = vpow.pop %v3073
        %v3075 = vmul.f32 %v3069, 1.442695
        %v3076 = vpow.pop %v3075
        %v3077 = vmul.f32 %v3070, 1.442695
        %v3078 = vpow.pop %v3077
        %v3079 = vsub.f32 %v2965, %v3063
        %v3080 = vsub.f32 %v2989, %v3064
        %v3081 = vsub.f32 %v3013, %v3065
        %v3082 = vsub.f32 %v3037, %v3066
        %v3083 = vmul.f32 %v3079, 1.442695
        %v3084 = vpow.pop %v3083
        %v3085 = vmul.f32 %v3080, 1.442695
        %v3086 = vpow.pop %v3085
        %v3087 = vmul.f32 %v3081, 1.442695
        %v3088 = vpow.pop %v3087
        %v3089 = vmul.f32 %v3082, 1.442695
        %v3090 = vpow.pop %v3089
        %v3091 = vsel %vm1116, %v3072, 0.0
        %3092 = vadd.xlane.f32.xlu0 %v3091
        %v3093 = vpop.xlane.xlu0 %3092
        %v3094 = vsel %vm1116, %v3074, 0.0
        %3095 = vadd.xlane.f32.xlu0 %v3094
        %v3096 = vpop.xlane.xlu0 %3095
        %v3097 = vsel %vm1116, %v3076, 0.0
        %3098 = vadd.xlane.f32.xlu0 %v3097
        %v3099 = vpop.xlane.xlu0 %3098
        %v3100 = vsel %vm1116, %v3078, 0.0
        %3101 = vadd.xlane.f32.xlu0 %v3100
        %v3102 = vpop.xlane.xlu0 %3101
        %v3103 = vsel %vm1116, %v3084, 0.0
        %3104 = vadd.xlane.f32.xlu0 %v3103
        %v3105 = vpop.xlane.xlu0 %3104
        %v3106 = vsel %vm1116, %v3086, 0.0
        %3107 = vadd.xlane.f32.xlu0 %v3106
        %v3108 = vpop.xlane.xlu0 %3107
        %v3109 = vsel %vm1116, %v3088, 0.0
        %3110 = vadd.xlane.f32.xlu0 %v3109
        %v3111 = vpop.xlane.xlu0 %3110
        %v3112 = vsel %vm1116, %v3090, 0.0
        %3113 = vadd.xlane.f32.xlu0 %v3112
        %v3114 = vpop.xlane.xlu0 %3113
        %v3115 = vadd.f32 %v3093, %v3105
        %v3116 = vadd.f32 %v3096, %v3108
        %v3117 = vadd.f32 %v3099, %v3111
        %v3118 = vadd.f32 %v3102, %v3114
        %v3119 = vrcp.pop %v3115
        %v3120 = vmul.f32 %v3115, %v3119
        %v3121 = vsub.f32 1.0, %v3120
        %v3122 = vmul.f32 %v3119, %v3121
        %v3123 = vadd.f32 %v3119, %v3122
        %vm3124 = vweird.f32 %v3115
        %vm3125 = vweird.f32 %v3119
        %vm3126 = vmor %vm3124, %vm3125
        %v3127 = vsel %vm3126, %v3119, %v3123
        %v3128 = vand.u32 2147483647, %v3115
        %vm3129 = vcmp.eq.f32.partialorder %v3128, 8.507059e+37
        %v3130 = vand.u32 %v3115, 2147483648
        %v3131 = vor.u32 1.1754944e-38, %v3130
        %v3132 = vsel %vm3129, %v3131, %v3127
        %v3133 = vmul.f32 1.0, %v3132
        %v3134 = vrcp.pop %v3116
        %v3135 = vmul.f32 %v3116, %v3134
        %v3136 = vsub.f32 1.0, %v3135
        %v3137 = vmul.f32 %v3134, %v3136
        %v3138 = vadd.f32 %v3134, %v3137
        %vm3139 = vweird.f32 %v3116
        %vm3140 = vweird.f32 %v3134
        %vm3141 = vmor %vm3139, %vm3140
        %v3142 = vsel %vm3141, %v3134, %v3138
        %v3143 = vand.u32 2147483647, %v3116
        %vm3144 = vcmp.eq.f32.partialorder %v3143, 8.507059e+37
        %v3145 = vand.u32 %v3116, 2147483648
        %v3146 = vor.u32 1.1754944e-38, %v3145
        %v3147 = vsel %vm3144, %v3146, %v3142
        %v3148 = vmul.f32 1.0, %v3147
        %v3149 = vrcp.pop %v3117
        %v3150 = vmul.f32 %v3117, %v3149
        %v3151 = vsub.f32 1.0, %v3150
        %v3152 = vmul.f32 %v3149, %v3151
        %v3153 = vadd.f32 %v3149, %v3152
        %vm3154 = vweird.f32 %v3117
        %vm3155 = vweird.f32 %v3149
        %vm3156 = vmor %vm3154, %vm3155
        %v3157 = vsel %vm3156, %v3149, %v3153
        %v3158 = vand.u32 2147483647, %v3117
        %vm3159 = vcmp.eq.f32.partialorder %v3158, 8.507059e+37
        %v3160 = vand.u32 %v3117, 2147483648
        %v3161 = vor.u32 1.1754944e-38, %v3160
        %v3162 = vsel %vm3159, %v3161, %v3157
        %v3163 = vmul.f32 1.0, %v3162
        %v3164 = vrcp.pop %v3118
        %v3165 = vmul.f32 %v3118, %v3164
        %v3166 = vsub.f32 1.0, %v3165
        %v3167 = vmul.f32 %v3164, %v3166
        %v3168 = vadd.f32 %v3164, %v3167
        %vm3169 = vweird.f32 %v3118
        %vm3170 = vweird.f32 %v3164
        %vm3171 = vmor %vm3169, %vm3170
        %v3172 = vsel %vm3171, %v3164, %v3168
        %v3173 = vand.u32 2147483647, %v3118
        %vm3174 = vcmp.eq.f32.partialorder %v3173, 8.507059e+37
        %v3175 = vand.u32 %v3118, 2147483648
        %v3176 = vor.u32 1.1754944e-38, %v3175
        %v3177 = vsel %vm3174, %v3176, %v3172
        %v3178 = vmul.f32 1.0, %v3177
        %3179 = vrot.lane.b32.xlu0 %v1105, 72
        %v3180 = vpop.permute.xlu0 %3179
        %v3183 = vsel %vm1116, %v3084, 0
        %3185 = vmatpush.msra.mxu0 0.0
        %3186 = vmatpush.msra.mxu0 0.0
        %3187 = vmatpush.msra.mxu0 0.0
        %3188 = vmatpush.msra.mxu0 0.0
        %3189 = vmatpush.msra.mxu0 0.0
        %3190 = vmatpush.msra.mxu0 0.0
        %3191 = vmatpush.msra.mxu0 0.0
        %3192 = vmatpush.msra.mxu0 0.0
        %3193 = vmatpush.msra.mxu0 0.0
        %3194 = vmatpush.msra.mxu0 0.0
        %3195 = vmatpush.msra.mxu0 0.0
        %3196 = vmatpush.msra.mxu0 0.0
        %3197 = vmatpush.msra.mxu0 0.0
        %3198 = vmatpush.msra.mxu0 0.0
        %3199 = vmatpush.msra.mxu0 0.0
        %3200 = vmatpush.msra.mxu0 %v3180
        %3201 = vmatmul.f32.gmra.mxu0 %v3183
        %v3202 = vpop.f32.mrf.mxu0
        %v3203 = vadd.f32 0.0, %v3202
        %3204 = vdwg.mxu0
        %3205 = vrot.lane.b32.xlu0 %v1108, 72
        %v3206 = vpop.permute.xlu0 %3205
        %v3209 = vsel %vm1116, %v3086, 0
        %3211 = vmatpush.msra.mxu0 0.0
        %3212 = vmatpush.msra.mxu0 0.0
        %3213 = vmatpush.msra.mxu0 0.0
        %3214 = vmatpush.msra.mxu0 0.0
        %3215 = vmatpush.msra.mxu0 0.0
        %3216 = vmatpush.msra.mxu0 0.0
        %3217 = vmatpush.msra.mxu0 0.0
        %3218 = vmatpush.msra.mxu0 0.0
        %3219 = vmatpush.msra.mxu0 0.0
        %3220 = vmatpush.msra.mxu0 0.0
        %3221 = vmatpush.msra.mxu0 0.0
        %3222 = vmatpush.msra.mxu0 0.0
        %3223 = vmatpush.msra.mxu0 0.0
        %3224 = vmatpush.msra.mxu0 0.0
        %3225 = vmatpush.msra.mxu0 0.0
        %3226 = vmatpush.msra.mxu0 %v3206
        %3227 = vmatmul.f32.gmra.mxu0 %v3209
        %v3228 = vpop.f32.mrf.mxu0
        %v3229 = vadd.f32 0.0, %v3228
        %3230 = vdwg.mxu0
        %3231 = vrot.lane.b32.xlu0 %v1111, 72
        %v3232 = vpop.permute.xlu0 %3231
        %v3235 = vsel %vm1116, %v3088, 0
        %3237 = vmatpush.msra.mxu0 0.0
        %3238 = vmatpush.msra.mxu0 0.0
        %3239 = vmatpush.msra.mxu0 0.0
        %3240 = vmatpush.msra.mxu0 0.0
        %3241 = vmatpush.msra.mxu0 0.0
        %3242 = vmatpush.msra.mxu0 0.0
        %3243 = vmatpush.msra.mxu0 0.0
        %3244 = vmatpush.msra.mxu0 0.0
        %3245 = vmatpush.msra.mxu0 0.0
        %3246 = vmatpush.msra.mxu0 0.0
        %3247 = vmatpush.msra.mxu0 0.0
        %3248 = vmatpush.msra.mxu0 0.0
        %3249 = vmatpush.msra.mxu0 0.0
        %3250 = vmatpush.msra.mxu0 0.0
        %3251 = vmatpush.msra.mxu0 0.0
        %3252 = vmatpush.msra.mxu0 %v3232
        %3253 = vmatmul.f32.gmra.mxu0 %v3235
        %v3254 = vpop.f32.mrf.mxu0
        %v3255 = vadd.f32 0.0, %v3254
        %3256 = vdwg.mxu0
        %3257 = vrot.lane.b32.xlu0 %v1114, 72
        %v3258 = vpop.permute.xlu0 %3257
        %v3261 = vsel %vm1116, %v3090, 0
        %3263 = vmatpush.msra.mxu0 0.0
        %3264 = vmatpush.msra.mxu0 0.0
        %3265 = vmatpush.msra.mxu0 0.0
        %3266 = vmatpush.msra.mxu0 0.0
        %3267 = vmatpush.msra.mxu0 0.0
        %3268 = vmatpush.msra.mxu0 0.0
        %3269 = vmatpush.msra.mxu0 0.0
        %3270 = vmatpush.msra.mxu0 0.0
        %3271 = vmatpush.msra.mxu0 0.0
        %3272 = vmatpush.msra.mxu0 0.0
        %3273 = vmatpush.msra.mxu0 0.0
        %3274 = vmatpush.msra.mxu0 0.0
        %3275 = vmatpush.msra.mxu0 0.0
        %3276 = vmatpush.msra.mxu0 0.0
        %3277 = vmatpush.msra.mxu0 0.0
        %3278 = vmatpush.msra.mxu0 %v3258
        %3279 = vmatmul.f32.gmra.mxu0 %v3261
        %v3280 = vpop.f32.mrf.mxu0
        %v3281 = vadd.f32 0.0, %v3280
        %3282 = vdwg.mxu0
        %3283 = vrot.lane.b32.xlu0 %v1076, 72
        %v3284 = vpop.permute.xlu0 %3283
        %v3287 = vsel %vm1116, %v3072, 0
        %3289 = vmatpush.msra.mxu0 0.0
        %3290 = vmatpush.msra.mxu0 0.0
        %3291 = vmatpush.msra.mxu0 0.0
        %3292 = vmatpush.msra.mxu0 0.0
        %3293 = vmatpush.msra.mxu0 0.0
        %3294 = vmatpush.msra.mxu0 0.0
        %3295 = vmatpush.msra.mxu0 0.0
        %3296 = vmatpush.msra.mxu0 0.0
        %3297 = vmatpush.msra.mxu0 0.0
        %3298 = vmatpush.msra.mxu0 0.0
        %3299 = vmatpush.msra.mxu0 0.0
        %3300 = vmatpush.msra.mxu0 0.0
        %3301 = vmatpush.msra.mxu0 0.0
        %3302 = vmatpush.msra.mxu0 0.0
        %3303 = vmatpush.msra.mxu0 0.0
        %3304 = vmatpush.msra.mxu0 %v3284
        %3305 = vmatmul.f32.gmra.mxu0 %v3287
        %v3306 = vpop.f32.mrf.mxu0
        %v3307 = vadd.f32 %v3203, %v3306
        %3308 = vdwg.mxu0
        %3309 = vrot.lane.b32.xlu0 %v1079, 72
        %v3310 = vpop.permute.xlu0 %3309
        %v3313 = vsel %vm1116, %v3074, 0
        %3315 = vmatpush.msra.mxu0 0.0
        %3316 = vmatpush.msra.mxu0 0.0
        %3317 = vmatpush.msra.mxu0 0.0
        %3318 = vmatpush.msra.mxu0 0.0
        %3319 = vmatpush.msra.mxu0 0.0
        %3320 = vmatpush.msra.mxu0 0.0
        %3321 = vmatpush.msra.mxu0 0.0
        %3322 = vmatpush.msra.mxu0 0.0
        %3323 = vmatpush.msra.mxu0 0.0
        %3324 = vmatpush.msra.mxu0 0.0
        %3325 = vmatpush.msra.mxu0 0.0
        %3326 = vmatpush.msra.mxu0 0.0
        %3327 = vmatpush.msra.mxu0 0.0
        %3328 = vmatpush.msra.mxu0 0.0
        %3329 = vmatpush.msra.mxu0 0.0
        %3330 = vmatpush.msra.mxu0 %v3310
        %3331 = vmatmul.f32.gmra.mxu0 %v3313
        %v3332 = vpop.f32.mrf.mxu0
        %v3333 = vadd.f32 %v3229, %v3332
        %3334 = vdwg.mxu0
        %3335 = vrot.lane.b32.xlu0 %v1082, 72
        %v3336 = vpop.permute.xlu0 %3335
        %v3339 = vsel %vm1116, %v3076, 0
        %3341 = vmatpush.msra.mxu0 0.0
        %3342 = vmatpush.msra.mxu0 0.0
        %3343 = vmatpush.msra.mxu0 0.0
        %3344 = vmatpush.msra.mxu0 0.0
        %3345 = vmatpush.msra.mxu0 0.0
        %3346 = vmatpush.msra.mxu0 0.0
        %3347 = vmatpush.msra.mxu0 0.0
        %3348 = vmatpush.msra.mxu0 0.0
        %3349 = vmatpush.msra.mxu0 0.0
        %3350 = vmatpush.msra.mxu0 0.0
        %3351 = vmatpush.msra.mxu0 0.0
        %3352 = vmatpush.msra.mxu0 0.0
        %3353 = vmatpush.msra.mxu0 0.0
        %3354 = vmatpush.msra.mxu0 0.0
        %3355 = vmatpush.msra.mxu0 0.0
        %3356 = vmatpush.msra.mxu0 %v3336
        %3357 = vmatmul.f32.gmra.mxu0 %v3339
        %v3358 = vpop.f32.mrf.mxu0
        %v3359 = vadd.f32 %v3255, %v3358
        %3360 = vdwg.mxu0
        %3361 = vrot.lane.b32.xlu0 %v1085, 72
        %v3362 = vpop.permute.xlu0 %3361
        %v3365 = vsel %vm1116, %v3078, 0
        %3367 = vmatpush.msra.mxu0 0.0
        %3368 = vmatpush.msra.mxu0 0.0
        %3369 = vmatpush.msra.mxu0 0.0
        %3370 = vmatpush.msra.mxu0 0.0
        %3371 = vmatpush.msra.mxu0 0.0
        %3372 = vmatpush.msra.mxu0 0.0
        %3373 = vmatpush.msra.mxu0 0.0
        %3374 = vmatpush.msra.mxu0 0.0
        %3375 = vmatpush.msra.mxu0 0.0
        %3376 = vmatpush.msra.mxu0 0.0
        %3377 = vmatpush.msra.mxu0 0.0
        %3378 = vmatpush.msra.mxu0 0.0
        %3379 = vmatpush.msra.mxu0 0.0
        %3380 = vmatpush.msra.mxu0 0.0
        %3381 = vmatpush.msra.mxu0 0.0
        %3382 = vmatpush.msra.mxu0 %v3362
        %3383 = vmatmul.f32.gmra.mxu0 %v3365
        %v3384 = vpop.f32.mrf.mxu0
        %v3385 = vadd.f32 %v3281, %v3384
        %3386 = vdwg.mxu0
        %v3387 = vmul.f32 %v3307, %v3133
        %v3388 = vmul.f32 %v3333, %v3148
        %v3389 = vmul.f32 %v3359, %v3163
        %v3390 = vmul.f32 %v3385, %v3178
        %3395 = vrot.lane.b32.xlu0 %v3387, 24
        %v3396 = vpop.permute.xlu0 %3395
        %3397 = vrot.lane.b32.xlu0 %v3388, 24
        %v3398 = vpop.permute.xlu0 %3397
        %3399 = vrot.lane.b32.xlu0 %v3389, 24
        %v3400 = vpop.permute.xlu0 %3399
        %3401 = vrot.lane.b32.xlu0 %v3390, 24
        %v3402 = vpop.permute.xlu0 %3401
        %vm3407 = vcmask 261312
        %3408 = vst.msk [vmem:[#allocation4] sm:$0xff] %vm3407, %v3396
        %3409 = vst.msk [vmem:[#allocation4 + $0x8] sm:$0xff] %vm3407, %v3398
        %3410 = vst.msk [vmem:[#allocation4 + $0x10] sm:$0xff] %vm3407, %v3400
        %3411 = vst.msk [vmem:[#allocation4 + $0x18] sm:$0xff] %vm3407, %v3402
        %v3412 = vld [vmem:[#allocation4] sm:$0xff]
        %v3413 = vld [vmem:[#allocation4 + $0x8] sm:$0xff]
        %v3414 = vld [vmem:[#allocation4 + $0x10] sm:$0xff]
        %v3415 = vld [vmem:[#allocation4 + $0x18] sm:$0xff]
        %v3417 = vsel %vm779, %v3412, 0
        %v3420 = vsel %vm779, %v3413, 0
        %v3423 = vsel %vm779, %v3414, 0
        %v3426 = vsel %vm779, %v3415, 0
        %3428 = vmatpush.msra.mxu0 0.0
        %3429 = vmatpush.msra.mxu0 0.0
        %3430 = vmatpush.msra.mxu0 0.0
        %3431 = vmatpush.msra.mxu0 0.0
        %3432 = vmatpush.msra.mxu0 0.0
        %3433 = vmatpush.msra.mxu0 0.0
        %3434 = vmatpush.msra.mxu0 0.0
        %3435 = vmatpush.msra.mxu0 0.0
        %3436 = vmatpush.msra.mxu0 0.0
        %3437 = vmatpush.msra.mxu0 0.0
        %3438 = vmatpush.msra.mxu0 0.0
        %3439 = vmatpush.msra.mxu0 0.0
        %3440 = vmatpush.msra.mxu0 %v1004
        %3441 = vmatpush.msra.mxu0 %v1003
        %3442 = vmatpush.msra.mxu0 %v1002
        %3443 = vmatpush.msra.mxu0 %v1001
        %3444 = vmatmul.f32.gmra.mxu0 %v3417
        %v3445 = vpop.f32.mrf.mxu0
        %v3446 = vadd.f32 %v769, %v3445
        %3447 = vmatmul.f32.gmra.mxu0 %v3420
        %v3448 = vpop.f32.mrf.mxu0
        %v3449 = vadd.f32 %v770, %v3448
        %3450 = vmatmul.f32.gmra.mxu0 %v3423
        %v3451 = vpop.f32.mrf.mxu0
        %v3452 = vadd.f32 %v771, %v3451
        %3453 = vmatmul.f32.gmra.mxu0 %v3426
        %v3454 = vpop.f32.mrf.mxu0
        %v3455 = vadd.f32 %v772, %v3454
        %3456 = vdwg.mxu0
        %v3457 = vld [vmem:[%s716] sm:$0x1]
        %v3458 = vld [vmem:[%s719] sm:$0x1]
        %v3459 = vsel %vm779, %v3446, 0.0
        %3460 = vadd.xlane.f32.xlu0 %v3459
        %v3461 = vpop.xlane.xlu0 %3460
        %v3462 = vsel %vm779, %v3449, 0.0
        %3463 = vadd.xlane.f32.xlu0 %v3462
        %v3464 = vpop.xlane.xlu0 %3463
        %v3465 = vsel %vm779, %v3452, 0.0
        %3466 = vadd.xlane.f32.xlu0 %v3465
        %v3467 = vpop.xlane.xlu0 %3466
        %v3468 = vsel %vm779, %v3455, 0.0
        %3469 = vadd.xlane.f32.xlu0 %v3468
        %v3470 = vpop.xlane.xlu0 %3469
        %v3471 = vmul.f32 %v3461, %v798
        %v3472 = vmul.f32 %v3464, %v798
        %v3473 = vmul.f32 %v3467, %v798
        %v3474 = vmul.f32 %v3470, %v798
        %v3475 = vsub.f32 %v3446, %v3471
        %v3476 = vsub.f32 %v3449, %v3472
        %v3477 = vsub.f32 %v3452, %v3473
        %v3478 = vsub.f32 %v3455, %v3474
        %v3479 = vmul.f32 %v3475, %v3475
        %v3480 = vmul.f32 %v3476, %v3476
        %v3481 = vmul.f32 %v3477, %v3477
        %v3482 = vmul.f32 %v3478, %v3478
        %v3483 = vsel %vm779, %v3479, 0.0
        %3484 = vadd.xlane.f32.xlu0 %v3483
        %v3485 = vpop.xlane.xlu0 %3484
        %v3486 = vsel %vm779, %v3480, 0.0
        %3487 = vadd.xlane.f32.xlu0 %v3486
        %v3488 = vpop.xlane.xlu0 %3487
        %v3489 = vsel %vm779, %v3481, 0.0
        %3490 = vadd.xlane.f32.xlu0 %v3489
        %v3491 = vpop.xlane.xlu0 %3490
        %v3492 = vsel %vm779, %v3482, 0.0
        %3493 = vadd.xlane.f32.xlu0 %v3492
        %v3494 = vpop.xlane.xlu0 %3493
        %v3495 = vmul.f32 %v3485, %v798
        %v3496 = vmul.f32 %v3488, %v798
        %v3497 = vmul.f32 %v3491, %v798
        %v3498 = vmul.f32 %v3494, %v798
        %v3499 = vadd.f32 %v3495, 1e-05
        %v3500 = vadd.f32 %v3496, 1e-05
        %v3501 = vadd.f32 %v3497, 1e-05
        %v3502 = vadd.f32 %v3498, 1e-05
        %v3503 = vrsqrt.pop %v3499
        %v3504 = vmul.f32 %v3503, %v3499
        %v3505 = vmul.f32 %v3504, %v3503
        %v3506 = vmul.f32 0.5, %v3505
        %v3507 = vsub.f32 1.5, %v3506
        %v3508 = vmul.f32 %v3503, %v3507
        %vm3509 = vweird.f32 %v3499
        %vm3510 = vweird.f32 %v3503
        %vm3511 = vmor %vm3509, %vm3510
        %v3512 = vsel %vm3511, %v3503, %v3508
        %v3513 = vrsqrt.pop %v3500
        %v3514 = vmul.f32 %v3513, %v3500
        %v3515 = vmul.f32 %v3514, %v3513
        %v3516 = vmul.f32 0.5, %v3515
        %v3517 = vsub.f32 1.5, %v3516
        %v3518 = vmul.f32 %v3513, %v3517
        %vm3519 = vweird.f32 %v3500
        %vm3520 = vweird.f32 %v3513
        %vm3521 = vmor %vm3519, %vm3520
        %v3522 = vsel %vm3521, %v3513, %v3518
        %v3523 = vrsqrt.pop %v3501
        %v3524 = vmul.f32 %v3523, %v3501
        %v3525 = vmul.f32 %v3524, %v3523
        %v3526 = vmul.f32 0.5, %v3525
        %v3527 = vsub.f32 1.5, %v3526
        %v3528 = vmul.f32 %v3523, %v3527
        %vm3529 = vweird.f32 %v3501
        %vm3530 = vweird.f32 %v3523
        %vm3531 = vmor %vm3529, %vm3530
        %v3532 = vsel %vm3531, %v3523, %v3528
        %v3533 = vrsqrt.pop %v3502
        %v3534 = vmul.f32 %v3533, %v3502
        %v3535 = vmul.f32 %v3534, %v3533
        %v3536 = vmul.f32 0.5, %v3535
        %v3537 = vsub.f32 1.5, %v3536
        %v3538 = vmul.f32 %v3533, %v3537
        %vm3539 = vweird.f32 %v3502
        %vm3540 = vweird.f32 %v3533
        %vm3541 = vmor %vm3539, %vm3540
        %v3542 = vsel %vm3541, %v3533, %v3538
        %v3543 = vmul.f32 %v3475, %v3512
        %v3544 = vmul.f32 %v3476, %v3522
        %v3545 = vmul.f32 %v3477, %v3532
        %v3546 = vmul.f32 %v3478, %v3542
        %v3548 = vperm.slane %v3457, 0
        %v3550 = vmul.f32 %v3543, %v3548
        %v3551 = vmul.f32 %v3544, %v3548
        %v3552 = vmul.f32 %v3545, %v3548
        %v3553 = vmul.f32 %v3546, %v3548
        %v3555 = vperm.slane %v3458, 0
        %v3557 = vadd.f32 %v3550, %v3555
        %v3558 = vadd.f32 %v3551, %v3555
        %v3559 = vadd.f32 %v3552, %v3555
        %v3560 = vadd.f32 %v3553, %v3555
        %v3561 = vld [vmem:[%s724] sm:$0xff]
        %v3562 = vld [vmem:[%s724 + $0x8] sm:$0xff]
        %v3563 = vld [vmem:[%s724 + $0x10] sm:$0xff]
        %v3564 = vld [vmem:[%s724 + $0x18] sm:$0xff]
        %v3566 = vsel %vm779, %v3557, 0
        %v3569 = vsel %vm779, %v3558, 0
        %v3572 = vsel %vm779, %v3559, 0
        %v3575 = vsel %vm779, %v3560, 0
        %3577 = vmatpush.msra.mxu0 0.0
        %3578 = vmatpush.msra.mxu0 0.0
        %3579 = vmatpush.msra.mxu0 0.0
        %3580 = vmatpush.msra.mxu0 0.0
        %3581 = vmatpush.msra.mxu0 0.0
        %3582 = vmatpush.msra.mxu0 0.0
        %3583 = vmatpush.msra.mxu0 0.0
        %3584 = vmatpush.msra.mxu0 0.0
        %3585 = vmatpush.msra.mxu0 0.0
        %3586 = vmatpush.msra.mxu0 0.0
        %3587 = vmatpush.msra.mxu0 0.0
        %3588 = vmatpush.msra.mxu0 0.0
        %3589 = vmatpush.msra.mxu0 %v3564
        %3590 = vmatpush.msra.mxu0 %v3563
        %3591 = vmatpush.msra.mxu0 %v3562
        %3592 = vmatpush.msra.mxu0 %v3561
        %3593 = vmatmul.f32.gmra.mxu0 %v3566
        %v3594 = vpop.f32.mrf.mxu0
        %v3595 = vadd.f32 0.0, %v3594
        %3596 = vmatmul.f32.gmra.mxu0 %v3569
        %v3597 = vpop.f32.mrf.mxu0
        %v3598 = vadd.f32 0.0, %v3597
        %3599 = vmatmul.f32.gmra.mxu0 %v3572
        %v3600 = vpop.f32.mrf.mxu0
        %v3601 = vadd.f32 0.0, %v3600
        %3602 = vmatmul.f32.gmra.mxu0 %v3575
        %v3603 = vpop.f32.mrf.mxu0
        %v3604 = vadd.f32 0.0, %v3603
        %3605 = vdwg.mxu0
        %v3606 = vmul.f32 %v3595, 0.5
        %v3607 = vmul.f32 %v3598, 0.5
        %v3608 = vmul.f32 %v3601, 0.5
        %v3609 = vmul.f32 %v3604, 0.5
        %v3610 = vmul.f32 %v3595, 0.70710677
        %v3611 = vmul.f32 %v3598, 0.70710677
        %v3612 = vmul.f32 %v3601, 0.70710677
        %v3613 = vmul.f32 %v3604, 0.70710677
        %vm3614 = vcmp.ge.f32.partialorder %v3610, 0.0
        %vm3615 = vcmp.ge.f32.partialorder %v3611, 0.0
        %vm3616 = vcmp.ge.f32.partialorder %v3612, 0.0
        %vm3617 = vcmp.ge.f32.partialorder %v3613, 0.0
        %v3618 = vsel %vm3614, 1.0, -1.0
        %v3619 = vsel %vm3615, 1.0, -1.0
        %v3620 = vsel %vm3616, 1.0, -1.0
        %v3621 = vsel %vm3617, 1.0, -1.0
        %v3622 = vand.u32 2147483647, %v3610
        %v3623 = vand.u32 2147483647, %v3611
        %v3624 = vand.u32 2147483647, %v3612
        %v3625 = vand.u32 2147483647, %v3613
        %v3626 = vmul.f32 %v3622, 0.3275911
        %v3627 = vmul.f32 %v3623, 0.3275911
        %v3628 = vmul.f32 %v3624, 0.3275911
        %v3629 = vmul.f32 %v3625, 0.3275911
        %v3630 = vadd.f32 %v3626, 1.0
        %v3631 = vadd.f32 %v3627, 1.0
        %v3632 = vadd.f32 %v3628, 1.0
        %v3633 = vadd.f32 %v3629, 1.0
        %v3634 = vrcp.pop %v3630
        %v3635 = vmul.f32 %v3630, %v3634
        %v3636 = vsub.f32 1.0, %v3635
        %v3637 = vmul.f32 %v3634, %v3636
        %v3638 = vadd.f32 %v3634, %v3637
        %vm3639 = vweird.f32 %v3630
        %vm3640 = vweird.f32 %v3634
        %vm3641 = vmor %vm3639, %vm3640
        %v3642 = vsel %vm3641, %v3634, %v3638
        %v3643 = vand.u32 2147483647, %v3630
        %vm3644 = vcmp.eq.f32.partialorder %v3643, 8.507059e+37
        %v3645 = vand.u32 %v3630, 2147483648
        %v3646 = vor.u32 1.1754944e-38, %v3645
        %v3647 = vsel %vm3644, %v3646, %v3642
        %v3648 = vmul.f32 1.0, %v3647
        %v3649 = vrcp.pop %v3631
        %v3650 = vmul.f32 %v3631, %v3649
        %v3651 = vsub.f32 1.0, %v3650
        %v3652 = vmul.f32 %v3649, %v3651
        %v3653 = vadd.f32 %v3649, %v3652
        %vm3654 = vweird.f32 %v3631
        %vm3655 = vweird.f32 %v3649
        %vm3656 = vmor %vm3654, %vm3655
        %v3657 = vsel %vm3656, %v3649, %v3653
        %v3658 = vand.u32 2147483647, %v3631
        %vm3659 = vcmp.eq.f32.partialorder %v3658, 8.507059e+37
        %v3660 = vand.u32 %v3631, 2147483648
        %v3661 = vor.u32 1.1754944e-38, %v3660
        %v3662 = vsel %vm3659, %v3661, %v3657
        %v3663 = vmul.f32 1.0, %v3662
        %v3664 = vrcp.pop %v3632
        %v3665 = vmul.f32 %v3632, %v3664
        %v3666 = vsub.f32 1.0, %v3665
        %v3667 = vmul.f32 %v3664, %v3666
        %v3668 = vadd.f32 %v3664, %v3667
        %vm3669 = vweird.f32 %v3632
        %vm3670 = vweird.f32 %v3664
        %vm3671 = vmor %vm3669, %vm3670
        %v3672 = vsel %vm3671, %v3664, %v3668
        %v3673 = vand.u32 2147483647, %v3632
        %vm3674 = vcmp.eq.f32.partialorder %v3673, 8.507059e+37
        %v3675 = vand.u32 %v3632, 2147483648
        %v3676 = vor.u32 1.1754944e-38, %v3675
        %v3677 = vsel %vm3674, %v3676, %v3672
        %v3678 = vmul.f32 1.0, %v3677
        %v3679 = vrcp.pop %v3633
        %v3680 = vmul.f32 %v3633, %v3679
        %v3681 = vsub.f32 1.0, %v3680
        %v3682 = vmul.f32 %v3679, %v3681
        %v3683 = vadd.f32 %v3679, %v3682
        %vm3684 = vweird.f32 %v3633
        %vm3685 = vweird.f32 %v3679
        %vm3686 = vmor %vm3684, %vm3685
        %v3687 = vsel %vm3686, %v3679, %v3683
        %v3688 = vand.u32 2147483647, %v3633
        %vm3689 = vcmp.eq.f32.partialorder %v3688, 8.507059e+37
        %v3690 = vand.u32 %v3633, 2147483648
        %v3691 = vor.u32 1.1754944e-38, %v3690
        %v3692 = vsel %vm3689, %v3691, %v3687
        %v3693 = vmul.f32 1.0, %v3692
        %v3694 = vmul.f32 %v3648, 1.0614054
        %v3695 = vmul.f32 %v3663, 1.0614054
        %v3696 = vmul.f32 %v3678, 1.0614054
        %v3697 = vmul.f32 %v3693, 1.0614054
        %v3698 = vadd.f32 %v3694, -1.4531521
        %v3699 = vadd.f32 %v3695, -1.4531521
        %v3700 = vadd.f32 %v3696, -1.4531521
        %v3701 = vadd.f32 %v3697, -1.4531521
        %v3702 = vmul.f32 %v3698, %v3648
        %v3703 = vmul.f32 %v3699, %v3663
        %v3704 = vmul.f32 %v3700, %v3678
        %v3705 = vmul.f32 %v3701, %v3693
        %v3706 = vadd.f32 %v3702, 1.4214138
        %v3707 = vadd.f32 %v3703, 1.4214138
        %v3708 = vadd.f32 %v3704, 1.4214138
        %v3709 = vadd.f32 %v3705, 1.4214138
        %v3710 = vmul.f32 %v3706, %v3648
        %v3711 = vmul.f32 %v3707, %v3663
        %v3712 = vmul.f32 %v3708, %v3678
        %v3713 = vmul.f32 %v3709, %v3693
        %v3714 = vadd.f32 %v3710, -0.28449672
        %v3715 = vadd.f32 %v3711, -0.28449672
        %v3716 = vadd.f32 %v3712, -0.28449672
        %v3717 = vadd.f32 %v3713, -0.28449672
        %v3718 = vmul.f32 %v3714, %v3648
        %v3719 = vmul.f32 %v3715, %v3663
        %v3720 = vmul.f32 %v3716, %v3678
        %v3721 = vmul.f32 %v3717, %v3693
        %v3722 = vadd.f32 %v3718, 0.2548296
        %v3723 = vadd.f32 %v3719, 0.2548296
        %v3724 = vadd.f32 %v3720, 0.2548296
        %v3725 = vadd.f32 %v3721, 0.2548296
        %v3726 = vmul.f32 %v3722, %v3648
        %v3727 = vmul.f32 %v3723, %v3663
        %v3728 = vmul.f32 %v3724, %v3678
        %v3729 = vmul.f32 %v3725, %v3693
        %v3730 = vsub.f32 0.0, %v3622
        %v3731 = vsub.f32 0.0, %v3623
        %v3732 = vsub.f32 0.0, %v3624
        %v3733 = vsub.f32 0.0, %v3625
        %v3734 = vmul.f32 %v3730, %v3622
        %v3735 = vmul.f32 %v3731, %v3623
        %v3736 = vmul.f32 %v3732, %v3624
        %v3737 = vmul.f32 %v3733, %v3625
        %v3738 = vmul.f32 %v3734, 1.442695
        %v3739 = vpow.pop %v3738
        %v3740 = vmul.f32 %v3735, 1.442695
        %v3741 = vpow.pop %v3740
        %v3742 = vmul.f32 %v3736, 1.442695
        %v3743 = vpow.pop %v3742
        %v3744 = vmul.f32 %v3737, 1.442695
        %v3745 = vpow.pop %v3744
        %v3746 = vmul.f32 %v3726, %v3739
        %v3747 = vmul.f32 %v3727, %v3741
        %v3748 = vmul.f32 %v3728, %v3743
        %v3749 = vmul.f32 %v3729, %v3745
        %v3750 = vsub.f32 1.0, %v3746
        %v3751 = vsub.f32 1.0, %v3747
        %v3752 = vsub.f32 1.0, %v3748
        %v3753 = vsub.f32 1.0, %v3749
        %v3754 = vmul.f32 %v3618, %v3750
        %v3755 = vmul.f32 %v3619, %v3751
        %v3756 = vmul.f32 %v3620, %v3752
        %v3757 = vmul.f32 %v3621, %v3753
        %v3758 = vadd.f32 %v3754, 1.0
        %v3759 = vadd.f32 %v3755, 1.0
        %v3760 = vadd.f32 %v3756, 1.0
        %v3761 = vadd.f32 %v3757, 1.0
        %v3762 = vmul.f32 %v3606, %v3758
        %v3763 = vmul.f32 %v3607, %v3759
        %v3764 = vmul.f32 %v3608, %v3760
        %v3765 = vmul.f32 %v3609, %v3761
        %v3766 = vld [vmem:[%s729] sm:$0xff]
        %v3767 = vld [vmem:[%s729 + $0x8] sm:$0xff]
        %v3768 = vld [vmem:[%s729 + $0x10] sm:$0xff]
        %v3769 = vld [vmem:[%s729 + $0x18] sm:$0xff]
        %v3770 = vld [vmem:[%s729 + $0x20] sm:$0xff]
        %v3771 = vld [vmem:[%s729 + $0x28] sm:$0xff]
        %v3772 = vld [vmem:[%s729 + $0x30] sm:$0xff]
        %v3773 = vld [vmem:[%s729 + $0x38] sm:$0xff]
        %v3774 = vld [vmem:[%s729 + $0x40] sm:$0xff]
        %v3775 = vld [vmem:[%s729 + $0x48] sm:$0xff]
        %v3776 = vld [vmem:[%s729 + $0x50] sm:$0xff]
        %v3777 = vld [vmem:[%s729 + $0x58] sm:$0xff]
        %v3778 = vld [vmem:[%s729 + $0x60] sm:$0xff]
        %v3779 = vld [vmem:[%s729 + $0x68] sm:$0xff]
        %v3780 = vld [vmem:[%s729 + $0x70] sm:$0xff]
        %v3781 = vld [vmem:[%s729 + $0x78] sm:$0xff]
        %3782 = vmatpush.msra.mxu0 %v3781
        %3783 = vmatpush.msra.mxu0 %v3780
        %3784 = vmatpush.msra.mxu0 %v3779
        %3785 = vmatpush.msra.mxu0 %v3778
        %3786 = vmatpush.msra.mxu0 %v3777
        %3787 = vmatpush.msra.mxu0 %v3776
        %3788 = vmatpush.msra.mxu0 %v3775
        %3789 = vmatpush.msra.mxu0 %v3774
        %3790 = vmatpush.msra.mxu0 %v3773
        %3791 = vmatpush.msra.mxu0 %v3772
        %3792 = vmatpush.msra.mxu0 %v3771
        %3793 = vmatpush.msra.mxu0 %v3770
        %3794 = vmatpush.msra.mxu0 %v3769
        %3795 = vmatpush.msra.mxu0 %v3768
        %3796 = vmatpush.msra.mxu0 %v3767
        %3797 = vmatpush.msra.mxu0 %v3766
        %3798 = vmatmul.f32.gmra.mxu0 %v3762
        %v3799 = vpop.f32.mrf.mxu0
        %v3800 = vadd.f32 %v3446, %v3799
        %3801 = vmatmul.f32.gmra.mxu0 %v3763
        %v3802 = vpop.f32.mrf.mxu0
        %v3803 = vadd.f32 %v3449, %v3802
        %3804 = vmatmul.f32.gmra.mxu0 %v3764
        %v3805 = vpop.f32.mrf.mxu0
        %v3806 = vadd.f32 %v3452, %v3805
        %3807 = vmatmul.f32.gmra.mxu0 %v3765
        %v3808 = vpop.f32.mrf.mxu0
        %v3809 = vadd.f32 %v3455, %v3808
        %3810 = vdwg.mxu0
        %3811 = vst.msk [vmem:[#allocation2] sm:$0xff] %vm779, %v3800
        %3812 = vst.msk [vmem:[#allocation2 + $0x8] sm:$0xff] %vm779, %v3803
        %3813 = vst.msk [vmem:[#allocation2 + $0x10] sm:$0xff] %vm779, %v3806
        %3814 = vst.msk [vmem:[#allocation2 + $0x18] sm:$0xff] %vm779, %v3809
        %p3815 = scmp.eq.s32.totalorder %s33, 1
        // Predicated region
        $region89: #{perceiver_resampler.1} parent=83 // pred_check
          %p3816 = pneg %p3815
        $region90: #{perceiver_resampler.1} parent=83 // pred_check_branch
          %3818 = sbr.rel (%p3816) target = $region92
        $region91: #{perceiver_resampler.1} parent=83 // pred_region
          %v3819 = vld [vmem:[%s14] sm:$0x1]
          %v3820 = vld [vmem:[%s15] sm:$0x1]
          %v3821 = vsel %vm779, %v3800, 0.0
          %3822 = vadd.xlane.f32.xlu0 %v3821
          %v3823 = vpop.xlane.xlu0 %3822
          %v3824 = vsel %vm779, %v3803, 0.0
          %3825 = vadd.xlane.f32.xlu0 %v3824
          %v3826 = vpop.xlane.xlu0 %3825
          %v3827 = vsel %vm779, %v3806, 0.0
          %3828 = vadd.xlane.f32.xlu0 %v3827
          %v3829 = vpop.xlane.xlu0 %3828
          %v3830 = vsel %vm779, %v3809, 0.0
          %3831 = vadd.xlane.f32.xlu0 %v3830
          %v3832 = vpop.xlane.xlu0 %3831
          %v3833 = vmul.f32 %v3823, %v798
          %v3834 = vmul.f32 %v3826, %v798
          %v3835 = vmul.f32 %v3829, %v798
          %v3836 = vmul.f32 %v3832, %v798
          %v3837 = vsub.f32 %v3800, %v3833
          %v3838 = vsub.f32 %v3803, %v3834
          %v3839 = vsub.f32 %v3806, %v3835
          %v3840 = vsub.f32 %v3809, %v3836
          %v3841 = vmul.f32 %v3837, %v3837
          %v3842 = vmul.f32 %v3838, %v3838
          %v3843 = vmul.f32 %v3839, %v3839
          %v3844 = vmul.f32 %v3840, %v3840
          %v3845 = vsel %vm779, %v3841, 0.0
          %3846 = vadd.xlane.f32.xlu0 %v3845
          %v3847 = vpop.xlane.xlu0 %3846
          %v3848 = vsel %vm779, %v3842, 0.0
          %3849 = vadd.xlane.f32.xlu0 %v3848
          %v3850 = vpop.xlane.xlu0 %3849
          %v3851 = vsel %vm779, %v3843, 0.0
          %3852 = vadd.xlane.f32.xlu0 %v3851
          %v3853 = vpop.xlane.xlu0 %3852
          %v3854 = vsel %vm779, %v3844, 0.0
          %3855 = vadd.xlane.f32.xlu0 %v3854
          %v3856 = vpop.xlane.xlu0 %3855
          %v3857 = vmul.f32 %v3847, %v798
          %v3858 = vmul.f32 %v3850, %v798
          %v3859 = vmul.f32 %v3853, %v798
          %v3860 = vmul.f32 %v3856, %v798
          %v3861 = vadd.f32 %v3857, 1e-05
          %v3862 = vadd.f32 %v3858, 1e-05
          %v3863 = vadd.f32 %v3859, 1e-05
          %v3864 = vadd.f32 %v3860, 1e-05
          %v3865 = vrsqrt.pop %v3861
          %v3866 = vmul.f32 %v3865, %v3861
          %v3867 = vmul.f32 %v3866, %v3865
          %v3868 = vmul.f32 0.5, %v3867
          %v3869 = vsub.f32 1.5, %v3868
          %v3870 = vmul.f32 %v3865, %v3869
          %vm3871 = vweird.f32 %v3861
          %vm3872 = vweird.f32 %v3865
          %vm3873 = vmor %vm3871, %vm3872
          %v3874 = vsel %vm3873, %v3865, %v3870
          %v3875 = vrsqrt.pop %v3862
          %v3876 = vmul.f32 %v3875, %v3862
          %v3877 = vmul.f32 %v3876, %v3875
          %v3878 = vmul.f32 0.5, %v3877
          %v3879 = vsub.f32 1.5, %v3878
          %v3880 = vmul.f32 %v3875, %v3879
          %vm3881 = vweird.f32 %v3862
          %vm3882 = vweird.f32 %v3875
          %vm3883 = vmor %vm3881, %vm3882
          %v3884 = vsel %vm3883, %v3875, %v3880
          %v3885 = vrsqrt.pop %v3863
          %v3886 = vmul.f32 %v3885, %v3863
          %v3887 = vmul.f32 %v3886, %v3885
          %v3888 = vmul.f32 0.5, %v3887
          %v3889 = vsub.f32 1.5, %v3888
          %v3890 = vmul.f32 %v3885, %v3889
          %vm3891 = vweird.f32 %v3863
          %vm3892 = vweird.f32 %v3885
          %vm3893 = vmor %vm3891, %vm3892
          %v3894 = vsel %vm3893, %v3885, %v3890
          %v3895 = vrsqrt.pop %v3864
          %v3896 = vmul.f32 %v3895, %v3864
          %v3897 = vmul.f32 %v3896, %v3895
          %v3898 = vmul.f32 0.5, %v3897
          %v3899 = vsub.f32 1.5, %v3898
          %v3900 = vmul.f32 %v3895, %v3899
          %vm3901 = vweird.f32 %v3864
          %vm3902 = vweird.f32 %v3895
          %vm3903 = vmor %vm3901, %vm3902
          %v3904 = vsel %vm3903, %v3895, %v3900
          %v3905 = vmul.f32 %v3837, %v3874
          %v3906 = vmul.f32 %v3838, %v3884
          %v3907 = vmul.f32 %v3839, %v3894
          %v3908 = vmul.f32 %v3840, %v3904
          %v3910 = vperm.slane %v3819, 0
          %v3912 = vmul.f32 %v3905, %v3910
          %v3913 = vmul.f32 %v3906, %v3910
          %v3914 = vmul.f32 %v3907, %v3910
          %v3915 = vmul.f32 %v3908, %v3910
          %v3917 = vperm.slane %v3820, 0
          %v3919 = vadd.f32 %v3912, %v3917
          %v3920 = vadd.f32 %v3913, %v3917
          %v3921 = vadd.f32 %v3914, %v3917
          %v3922 = vadd.f32 %v3915, %v3917
          %3923 = vst.msk [vmem:[#allocation5] sm:$0xff] %vm779, %v3919
          %3924 = vst.msk [vmem:[#allocation5 + $0x8] sm:$0xff] %vm779, %v3920
          %3925 = vst.msk [vmem:[#allocation5 + $0x10] sm:$0xff] %vm779, %v3921
          %3926 = vst.msk [vmem:[#allocation5 + $0x18] sm:$0xff] %vm779, %v3922
        $region92: #{perceiver_resampler.1} parent=83 // pred_fallthru
          _
        // Predicated region
        $region93: #{perceiver_resampler.1} parent=83 // pred_check
          %p3927 = pneg %p459
        $region94: #{perceiver_resampler.1} parent=83 // pred_check_branch
          %3929 = sbr.rel (%p3927) target = $region96
        $region95: #{perceiver_resampler.1} parent=83 // pred_region
          %s3930 = smul.u32 4, %s32
          %3932 = vsyncadd [#allocation6], 0
          %s3933 = smul.addr %s3930, 8
          %s3934 = scalar_lea.hbm %s16, %s3933
          %s3935 = sshll.u32 [#allocation5], 4
          %s3936 = int_to_ptr.vmem [resolvable:$true] %s3935
          %s3937 = sshll.u32 %s3934, 4
          %s3938 = int_to_ptr.hbm [resolvable:$true] %s3937
          %3943 = dma.vmem_to_hbm [thread:$0]  %s3936, 512, %s3938, [#allocation6], 128, 128, 8
        $region96: #{perceiver_resampler.1} parent=83 // pred_fallthru
          _
        // Predicated region
        $region97: #{perceiver_resampler.1} parent=83 // pred_check
          %p3944 = pneg %p459
        $region98: #{perceiver_resampler.1} parent=83 // pred_check_branch
          %3946 = sbr.rel (%p3944) target = $region100
        $region99: #{perceiver_resampler.1} parent=83 // pred_region
          %3948 = dma.done [#allocation6], 512
        $region100: #{perceiver_resampler.1} parent=83 // pred_fallthru
          _
      $region84: #{perceiver_resampler.1} parent=5 // pred_fallthru
        _
      %p3949 = scmp.le.s32.totalorder 2, %s23
      // Predicated region
      $region101: #{perceiver_resampler.1} parent=5 // pred_check
        %p3950 = pneg %p3949
      $region102: #{perceiver_resampler.1} parent=5 // pred_check_branch
        %3952 = sbr.rel (%p3950) target = $region104
      $region103: #{perceiver_resampler.1} parent=5 // pred_region
        %s3953 = ssub.s32 %s23, 2
      $region104: #{perceiver_resampler.1} parent=5 // pred_fallthru
        _
    $region6: #{perceiver_resampler.1} parent=1 // loop_footer
      %s27 = sadd.s32 1, %s23
    $region7: #{perceiver_resampler.1} parent=1 // loop_footer_branch
      %22 = sbr.rel target = $region3
    $region8: #{perceiver_resampler.1} parent=1 // loop_exit
      _
    %3954 = vsyncpa [#allocation6], 1
    %s3955 = scalar_lea.sflag [#allocation6], 1
    %3956 = vsyncpa %s3955, 1

</llo_original>
